<compile_context>
chip_gen: v5e
topology: v5e:2x2
jax: 0.10.0
libtpu: 0.0.40
codegen_flags: <defaults>
</compile_context>

<pallas_src>
import functools
import math

import jax
import jax.numpy as jnp
from jax import lax
from jax.experimental import pallas as pl
from jax.experimental.pallas import tpu as pltpu


# ---------------------------------------------------------------------------
# Fused Pallas kernel: both memory-attend branches from one X tile.
#   att_b = L1norm( hard_shrink_relu( softmax( X @ W_b^T ) ) )
#   y_b   = att_b @ W_b                      for b in {full, sem}
# Row-tiled over N*H*W; the reduction dim K of each branch lives fully inside
# the tile. Attention matrices are intermediates only (never written to HBM).
# ---------------------------------------------------------------------------
def fused_mem_attend_kernel(x_ref, w_full_ref, w_sem_ref, y_full_ref, y_sem_ref,
                            *, shrink_thres):
    x16 = x_ref[...]                                        # (tile_r, Cp) bf16

    def attend(w_f32, y_ref):
        w16 = w_f32.astype(jnp.bfloat16)                    # (K, Cp)
        # att_weight = F.linear(X, W): contract on the shared C axis directly
        # (no w.T materialization / XLU transpose).
        a = lax.dot_general(
            x16, w16,
            dimension_numbers=(((1,), (1,)), ((), ())),
            preferred_element_type=jnp.float32)             # (tile_r, K) f32

        # softmax over the memory dim
        a = a - jnp.max(a, axis=-1, keepdims=True)
        e = jnp.exp(a)
        a = e * pl.reciprocal(jnp.sum(e, axis=-1, keepdims=True), approx=True)

        if shrink_thres > 0:
            lam = jnp.float32(shrink_thres)
            # hard_shrink_relu: relu(a - lam) * a / (|a - lam| + 1e-12)
            a = (jnp.maximum(a - lam, 0.0) * a
                 * pl.reciprocal(jnp.abs(a - lam) + 1e-12, approx=True))
            # F.normalize(p=1, dim=1): a / max(sum|a|, 1e-12)
            l1 = jnp.sum(jnp.abs(a), axis=-1, keepdims=True)
            a = a * pl.reciprocal(jnp.maximum(l1, 1e-12), approx=True)

        # output = F.linear(att, W^T) = att @ W
        y = jnp.dot(a.astype(jnp.bfloat16), w16,
                    preferred_element_type=jnp.float32)     # (tile_r, Cp)
        y_ref[...] = y.astype(y_ref.dtype)

    attend(w_full_ref[...], y_full_ref)
    attend(w_sem_ref[...], y_sem_ref)


def fused_mem_attend(x_rows, w_full, w_sem, shrink_thres, *, tile_r=512):
    """x_rows: (R, C) f32 rows; w_full: (Kf, C); w_sem: (Ks, C).

    Returns (y_full (R, C) f32, y_sem (R, C) f32)."""
    R, C = x_rows.shape
    Kf = w_full.shape[0]
    Ks = w_sem.shape[0]

    # Lane-dense feature dim (last dim -> multiple of 128 lanes).
    Cp = ((C + 127) // 128) * 128
    # Rows padded up to a multiple of tile_r (tail rows computed, then sliced).
    Rp = pl.cdiv(R, tile_r) * tile_r

    xp = jnp.zeros((Rp, Cp), jnp.bfloat16).at[:R, :C].set(
        x_rows.astype(jnp.bfloat16))
    wf = jnp.zeros((Kf, Cp), jnp.float32).at[:, :C].set(w_full)
    ws = jnp.zeros((Ks, Cp), jnp.float32).at[:, :C].set(w_sem)

    kernel = functools.partial(fused_mem_attend_kernel,
                               shrink_thres=float(shrink_thres))
    y_full, y_sem = pl.pallas_call(
        kernel,
        out_shape=(
            jax.ShapeDtypeStruct((Rp, Cp), jnp.float32),
            jax.ShapeDtypeStruct((Rp, Cp), jnp.float32),
        ),
        grid_spec=pltpu.PrefetchScalarGridSpec(
            num_scalar_prefetch=0,
            grid=(Rp // tile_r,),
            in_specs=[
                pl.BlockSpec((tile_r, Cp), lambda i: (i, 0)),   # X tile (bf16)
                pl.BlockSpec((Kf, Cp), lambda i: (0, 0)),       # full memory
                pl.BlockSpec((Ks, Cp), lambda i: (0, 0)),       # semantic memory
            ],
            out_specs=[
                pl.BlockSpec((tile_r, Cp), lambda i: (i, 0)),
                pl.BlockSpec((tile_r, Cp), lambda i: (i, 0)),
            ],
        ),
        compiler_params=pltpu.CompilerParams(
            dimension_semantics=("parallel",)),
    )(xp, wf, ws)
    return y_full[:R, :C], y_sem[:R, :C]


# ---------------------------------------------------------------------------
# Parameter setup + reweight layers (tiny 1x1 Conv1d applied to the memory
# parameters themselves -> plain JAX glue; matrices are only (M, C) sized).
# ---------------------------------------------------------------------------
def init_params(key, ptt_num, num_cls, part_num, fea_dim):
    mem_dim = ptt_num * num_cls * part_num
    k0, k1, k2, k3, k4 = jax.random.split(key, 5)
    stdv = 1.0 / math.sqrt(fea_dim)
    weight = jax.random.uniform(k0, (mem_dim, fea_dim), jnp.float32, -stdv, stdv)
    # Conv1d(part_num, part_num, 1) and Conv1d(ptt_num, ptt_num, 1) params
    bp1 = 1.0 / math.sqrt(part_num)
    w_part = jax.random.uniform(k1, (part_num, part_num), jnp.float32, -bp1, bp1)
    b_part = jax.random.uniform(k2, (part_num,), jnp.float32, -bp1, bp1)
    bp2 = 1.0 / math.sqrt(ptt_num)
    w_ins = jax.random.uniform(k3, (ptt_num, ptt_num), jnp.float32, -bp2, bp2)
    b_ins = jax.random.uniform(k4, (ptt_num,), jnp.float32, -bp2, bp2)
    return dict(weight=weight, w_part=w_part, b_part=b_part,
                w_ins=w_ins, b_ins=b_ins)


def derive_memories(params, ptt_num, num_cls, part_num, fea_dim):
    """Replicates the reweight_part / reweight_ins parameter preprocessing."""
    weight = params["weight"]                              # (M, C)
    G = num_cls * ptt_num
    # weight.view(G, fea_dim, -1).permute(0, 2, 1)  (raw row-major reinterpret)
    rw = weight.reshape(G, fea_dim, part_num)
    rw = jnp.transpose(rw, (0, 2, 1))                      # (G, part_num, fea_dim)
    conv = (jnp.einsum('oi,gid->god', params["w_part"], rw)
            + params["b_part"][None, :, None])
    rw = jax.nn.sigmoid(conv) * rw                         # (G, part_num, fea_dim)
    rw = jnp.transpose(rw, (0, 2, 1))                      # (G, fea_dim, part_num)
    part_ins_att = jnp.mean(rw, axis=-1)                   # (G, fea_dim)

    ri = part_ins_att.reshape(num_cls, ptt_num, fea_dim)
    conv2 = (jnp.einsum('oi,cid->cod', params["w_ins"], ri)
             + params["b_ins"][None, :, None])
    ri = jax.nn.sigmoid(conv2) * ri                        # (num_cls, ptt_num, fea_dim)
    ri = jnp.transpose(ri, (0, 2, 1))                      # (num_cls, fea_dim, ptt_num)
    sem_att = jnp.mean(ri, axis=-1)                        # (num_cls, fea_dim)
    return part_ins_att, sem_att


def mem_module_forward(params, x_nchw, *, ptt_num, num_cls, part_num, fea_dim,
                       shrink_thres=0.0025, tile_r=512):
    N, C, H, W = x_nchw.shape
    assert C == fea_dim
    # NCHW -> NHWC -> (N*H*W, C)   (glue, matches permute(0,2,3,1).view(-1, C))
    x = jnp.transpose(x_nchw, (0, 2, 3, 1)).reshape(-1, C)

    part_ins_att, sem_att = derive_memories(
        params, ptt_num, num_cls, part_num, fea_dim)
    del part_ins_att  # only needed as an intermediate to derive sem_att
    # TODO(synk): the reference also attends against part_ins_att
    # (ins_att_weight / local output_part), but MemModule never returns that
    # result; it is skipped here to avoid dead compute + HBM traffic.

    # Fused kernel: both returned branches from one pass over X.
    #   y_part = attend(X, weight)   -> returned as 'output_part'
    #   y_sem  = attend(X, sem_att)  -> returned as 'output'
    y_part, y_sem = fused_mem_attend(
        x, params["weight"], sem_att, shrink_thres, tile_r=tile_r)

    # output_sem -> (N, H, W, C) -> NCHW
    y = y_sem.reshape(N, H, W, C).transpose(0, 3, 1, 2)
    return y, sem_att, y_part


if __name__ == "__main__":
    ptt_num, num_cls, part_num, fea_dim = 2, 4, 2, 32
    N, H, W = 2, 16, 16

    key = jax.random.PRNGKey(0)
    kp, kx = jax.random.split(key)
    params = init_params(kp, ptt_num, num_cls, part_num, fea_dim)
    x = jax.random.normal(kx, (N, fea_dim, H, W), jnp.float32)

    y, sem_attn, y_part = mem_module_forward(
        params, x, ptt_num=ptt_num, num_cls=num_cls, part_num=part_num,
        fea_dim=fea_dim, shrink_thres=0.0025)
    jax.block_until_ready((y, sem_attn, y_part))

    assert y.shape == (N, fea_dim, H, W)
    assert sem_attn.shape == (num_cls, fea_dim)
    assert y_part.shape == (N * H * W, fea_dim)
    assert bool(jnp.all(jnp.isfinite(y)))
    assert bool(jnp.all(jnp.isfinite(y_part)))
    print("KERNEL_OK")
</pallas_src>

<mosaic_0001>
module attributes {stable_mosaic.version = 11 : i64} {
  func.func @fused_mem_attend_kernel(%arg0: i32, %arg1: memref<512x128xbf16, #tpu.memory_space<vmem>>, %arg2: memref<16x128xf32, #tpu.memory_space<vmem>>, %arg3: memref<4x128xf32, #tpu.memory_space<vmem>>, %arg4: memref<512x128xf32, #tpu.memory_space<vmem>>, %arg5: memref<512x128xf32, #tpu.memory_space<vmem>>) attributes {dimension_semantics = [#tpu.dimension_semantics<parallel>], iteration_bounds = array<i64: 1>, scalar_prefetch = 0 : i64, scratch_operands = 0 : i64, tpu.core_type = #tpu.core_type<tc>, window_params = [{transform_indices = @transform_0, window_bounds = array<i64: 512, 128>}, {pipeline_mode = #tpu.pipeline_mode<synchronous>, transform_indices = @transform_1, window_bounds = array<i64: 16, 128>}, {pipeline_mode = #tpu.pipeline_mode<synchronous>, transform_indices = @transform_2, window_bounds = array<i64: 4, 128>}, {transform_indices = @transform_3, window_bounds = array<i64: 512, 128>}, {transform_indices = @transform_4, window_bounds = array<i64: 512, 128>}]} {
    %c0 = arith.constant 0 : index
    %c0_0 = arith.constant 0 : index
    %0 = vector.load %arg1[%c0, %c0_0] : memref<512x128xbf16, #tpu.memory_space<vmem>>, vector<512x128xbf16>
    %c0_1 = arith.constant 0 : index
    %c0_2 = arith.constant 0 : index
    %1 = vector.load %arg2[%c0_1, %c0_2] : memref<16x128xf32, #tpu.memory_space<vmem>>, vector<16x128xf32>
    %2 = arith.truncf %1 : vector<16x128xf32> to vector<16x128xbf16>
    %cst = arith.constant dense<0.000000e+00> : vector<512x16xf32>
    %3 = tpu.matmul %0, %2, %cst {dimension_numbers = #tpu.dot_dimension_numbers<[1], [1], [0], [0], [0, 0, 1, 0], [], []>} : vector<512x128xbf16>, vector<16x128xbf16>, vector<512x16xf32> -> vector<512x16xf32>
    %cst_3 = arith.constant dense<0xFF800000> : vector<512xf32>
    %4 = vector.multi_reduction <maximumf>, %3, %cst_3 [1] : vector<512x16xf32> to vector<512xf32>
    %5 = vector.shape_cast %4 : vector<512xf32> to vector<512x1xf32>
    %6 = vector.broadcast %5 : vector<512x1xf32> to vector<512x16xf32>
    %7 = arith.subf %3, %6 : vector<512x16xf32>
    %8 = math.exp %7 : vector<512x16xf32>
    %cst_4 = arith.constant dense<0.000000e+00> : vector<512xf32>
    %9 = vector.multi_reduction <add>, %8, %cst_4 [1] : vector<512x16xf32> to vector<512xf32>
    %10 = vector.shape_cast %9 : vector<512xf32> to vector<512x1xf32>
    %11 = tpu.reciprocal %10 {approx = true} : vector<512x1xf32> -> vector<512x1xf32>
    %12 = vector.broadcast %11 : vector<512x1xf32> to vector<512x16xf32>
    %13 = arith.mulf %8, %12 : vector<512x16xf32>
    %cst_5 = arith.constant 2.500000e-03 : f32
    %14 = vector.broadcast %cst_5 : f32 to vector<512x16xf32>
    %15 = arith.subf %13, %14 : vector<512x16xf32>
    %cst_6 = arith.constant 0.000000e+00 : f32
    %16 = vector.broadcast %cst_6 : f32 to vector<512x16xf32>
    %17 = arith.maximumf %15, %16 : vector<512x16xf32>
    %18 = arith.mulf %17, %13 : vector<512x16xf32>
    %cst_7 = arith.constant 2.500000e-03 : f32
    %19 = vector.broadcast %cst_7 : f32 to vector<512x16xf32>
    %20 = arith.subf %13, %19 : vector<512x16xf32>
    %21 = math.absf %20 : vector<512x16xf32>
    %cst_8 = arith.constant 9.99999996E-13 : f32
    %22 = vector.broadcast %cst_8 : f32 to vector<512x16xf32>
    %23 = arith.addf %21, %22 : vector<512x16xf32>
    %24 = tpu.reciprocal %23 {approx = true} : vector<512x16xf32> -> vector<512x16xf32>
    %25 = arith.mulf %18, %24 : vector<512x16xf32>
    %26 = math.absf %25 : vector<512x16xf32>
    %cst_9 = arith.constant dense<0.000000e+00> : vector<512xf32>
    %27 = vector.multi_reduction <add>, %26, %cst_9 [1] : vector<512x16xf32> to vector<512xf32>
    %28 = vector.shape_cast %27 : vector<512xf32> to vector<512x1xf32>
    %cst_10 = arith.constant 9.99999996E-13 : f32
    %29 = vector.broadcast %cst_10 : f32 to vector<512x1xf32>
    %30 = arith.maximumf %28, %29 : vector<512x1xf32>
    %31 = tpu.reciprocal %30 {approx = true} : vector<512x1xf32> -> vector<512x1xf32>
    %32 = vector.broadcast %31 : vector<512x1xf32> to vector<512x16xf32>
    %33 = arith.mulf %25, %32 : vector<512x16xf32>
    %34 = arith.truncf %33 : vector<512x16xf32> to vector<512x16xbf16>
    %cst_11 = arith.constant dense<0.000000e+00> : vector<512x128xf32>
    %35 = tpu.matmul %34, %2, %cst_11 {dimension_numbers = #tpu.dot_dimension_numbers<[1], [0], [0], [1], [0, 0, 1, 1], [], []>} : vector<512x16xbf16>, vector<16x128xbf16>, vector<512x128xf32> -> vector<512x128xf32>
    %c0_12 = arith.constant 0 : index
    %c0_13 = arith.constant 0 : index
    %36 = vector.load %arg4[%c0_12, %c0_13] : memref<512x128xf32, #tpu.memory_space<vmem>>, vector<512x128xf32>
    tpu.vector_store %arg4[%c0_12, %c0_13], %35 {strides = array<i32>} : memref<512x128xf32, #tpu.memory_space<vmem>>, vector<512x128xf32>,
    %c0_14 = arith.constant 0 : index
    %c0_15 = arith.constant 0 : index
    %37 = vector.load %arg3[%c0_14, %c0_15] : memref<4x128xf32, #tpu.memory_space<vmem>>, vector<4x128xf32>
    %38 = arith.truncf %37 : vector<4x128xf32> to vector<4x128xbf16>
    %cst_16 = arith.constant dense<0.000000e+00> : vector<512x4xf32>
    %39 = tpu.matmul %0, %38, %cst_16 {dimension_numbers = #tpu.dot_dimension_numbers<[1], [1], [0], [0], [0, 0, 1, 0], [], []>} : vector<512x128xbf16>, vector<4x128xbf16>, vector<512x4xf32> -> vector<512x4xf32>
    %cst_17 = arith.constant dense<0xFF800000> : vector<512xf32>
    %40 = vector.multi_reduction <maximumf>, %39, %cst_17 [1] : vector<512x4xf32> to vector<512xf32>
    %41 = vector.shape_cast %40 : vector<512xf32> to vector<512x1xf32>
    %42 = vector.broadcast %41 : vector<512x1xf32> to vector<512x4xf32>
    %43 = arith.subf %39, %42 : vector<512x4xf32>
    %44 = math.exp %43 : vector<512x4xf32>
    %cst_18 = arith.constant dense<0.000000e+00> : vector<512xf32>
    %45 = vector.multi_reduction <add>, %44, %cst_18 [1] : vector<512x4xf32> to vector<512xf32>
    %46 = vector.shape_cast %45 : vector<512xf32> to vector<512x1xf32>
    %47 = tpu.reciprocal %46 {approx = true} : vector<512x1xf32> -> vector<512x1xf32>
    %48 = vector.broadcast %47 : vector<512x1xf32> to vector<512x4xf32>
    %49 = arith.mulf %44, %48 : vector<512x4xf32>
    %cst_19 = arith.constant 2.500000e-03 : f32
    %50 = vector.broadcast %cst_19 : f32 to vector<512x4xf32>
    %51 = arith.subf %49, %50 : vector<512x4xf32>
    %cst_20 = arith.constant 0.000000e+00 : f32
    %52 = vector.broadcast %cst_20 : f32 to vector<512x4xf32>
    %53 = arith.maximumf %51, %52 : vector<512x4xf32>
    %54 = arith.mulf %53, %49 : vector<512x4xf32>
    %cst_21 = arith.constant 2.500000e-03 : f32
    %55 = vector.broadcast %cst_21 : f32 to vector<512x4xf32>
    %56 = arith.subf %49, %55 : vector<512x4xf32>
    %57 = math.absf %56 : vector<512x4xf32>
    %cst_22 = arith.constant 9.99999996E-13 : f32
    %58 = vector.broadcast %cst_22 : f32 to vector<512x4xf32>
    %59 = arith.addf %57, %58 : vector<512x4xf32>
    %60 = tpu.reciprocal %59 {approx = true} : vector<512x4xf32> -> vector<512x4xf32>
    %61 = arith.mulf %54, %60 : vector<512x4xf32>
    %62 = math.absf %61 : vector<512x4xf32>
    %cst_23 = arith.constant dense<0.000000e+00> : vector<512xf32>
    %63 = vector.multi_reduction <add>, %62, %cst_23 [1] : vector<512x4xf32> to vector<512xf32>
    %64 = vector.shape_cast %63 : vector<512xf32> to vector<512x1xf32>
    %cst_24 = arith.constant 9.99999996E-13 : f32
    %65 = vector.broadcast %cst_24 : f32 to vector<512x1xf32>
    %66 = arith.maximumf %64, %65 : vector<512x1xf32>
    %67 = tpu.reciprocal %66 {approx = true} : vector<512x1xf32> -> vector<512x1xf32>
    %68 = vector.broadcast %67 : vector<512x1xf32> to vector<512x4xf32>
    %69 = arith.mulf %61, %68 : vector<512x4xf32>
    %70 = arith.truncf %69 : vector<512x4xf32> to vector<512x4xbf16>
    %cst_25 = arith.constant dense<0.000000e+00> : vector<512x128xf32>
    %71 = tpu.matmul %70, %38, %cst_25 {dimension_numbers = #tpu.dot_dimension_numbers<[1], [0], [0], [1], [0, 0, 1, 1], [], []>} : vector<512x4xbf16>, vector<4x128xbf16>, vector<512x128xf32> -> vector<512x128xf32>
    %c0_26 = arith.constant 0 : index
    %c0_27 = arith.constant 0 : index
    %72 = vector.load %arg5[%c0_26, %c0_27] : memref<512x128xf32, #tpu.memory_space<vmem>>, vector<512x128xf32>
    tpu.vector_store %arg5[%c0_26, %c0_27], %71 {strides = array<i32>} : memref<512x128xf32, #tpu.memory_space<vmem>>, vector<512x128xf32>,
    return
  }
  func.func @transform_0(%arg0: i32) -> (i32, i32) {
    %c0_i32 = arith.constant 0 : i32
    %c0_i32_0 = arith.constant 0 : i32
    return %arg0, %c0_i32 : i32, i32
  }
  func.func @transform_1(%arg0: i32) -> (i32, i32) {
    %c0_i32 = arith.constant 0 : i32
    %c0_i32_0 = arith.constant 0 : i32
    %c0_i32_1 = arith.constant 0 : i32
    return %c0_i32, %c0_i32_0 : i32, i32
  }
  func.func @transform_2(%arg0: i32) -> (i32, i32) {
    %c0_i32 = arith.constant 0 : i32
    %c0_i32_0 = arith.constant 0 : i32
    %c0_i32_1 = arith.constant 0 : i32
    return %c0_i32, %c0_i32_0 : i32, i32
  }
  func.func @transform_3(%arg0: i32) -> (i32, i32) {
    %c0_i32 = arith.constant 0 : i32
    %c0_i32_0 = arith.constant 0 : i32
    return %arg0, %c0_i32 : i32, i32
  }
  func.func @transform_4(%arg0: i32) -> (i32, i32) {
    %c0_i32 = arith.constant 0 : i32
    %c0_i32_0 = arith.constant 0 : i32
    return %arg0, %c0_i32 : i32, i32
  }
}

</mosaic_0001>

<llo_original>
// kernel: tpu_custom_call.1
$region0: #{tpu_custom_call.1}
  #allocation0 [shape = 'u32[]', space=smem, size = 0x4, offset = 0x4, fixed_abs, tag = 'smem constant byte address 0x4 - core index']
  #allocation1 [shape = 'u32[72,128]{1,0:T(1,128)}', space=vmem, size = 0x9000, scoped, tag = 'internal scratch']
  %s0 = inlined_call_operand.hbm [shape: bf16[512,128], index: 0, kind: input, shape index: {}]
  %s1 = inlined_call_operand.hbm [shape: f32[16,128], index: 1, kind: input, shape index: {}]
  %s2 = inlined_call_operand.hbm [shape: f32[4,128], index: 2, kind: input, shape index: {}]
  %s3 = inlined_call_operand.hbm [shape: f32[512,128], index: 3, kind: output, shape index: {0}]
  %s4 = inlined_call_operand.hbm [shape: f32[512,128], index: 4, kind: output, shape index: {1}]
  %5 = xla_tuple %s3, %s4
  %s6 = sld [smem:[#allocation0]]
  $region42: #{tpu_custom_call.1} parent=0
    _
  %s8 = ssub.s32 1, %s6
  %s9 = scalar_select 0, %s8, %s6
  $region1: #{tpu_custom_call.1} parent=0
    #allocation2 [shape = 'u8[131072]{0}', space=vmem, size = 0x20000, scoped, tag = 'input window, operand 0, single buffered']
    #allocation3 [shape = 's32[1]{0}', space=sflag, size = 0x4, scoped, tag = 'scoped memory for tpu_custom_call.1']
    #allocation4 [shape = 's32[1]{0}', space=sflag, size = 0x4, scoped, tag = 'scoped memory for tpu_custom_call.1']
    #allocation5 [shape = 'u8[8192]{0}', space=vmem, size = 0x2000, scoped, tag = 'input window, operand 1, single buffered']
    #allocation6 [shape = 's32[1]{0}', space=sflag, size = 0x4, scoped, tag = 'scoped memory for tpu_custom_call.1']
    #allocation7 [shape = 'u8[2048]{0}', space=vmem, size = 0x800, scoped, tag = 'input window, operand 2, single buffered']
    #allocation8 [shape = 'u8[262144]{0}', space=vmem, size = 0x40000, scoped, tag = 'output window, operand 0, single buffered']
    #allocation9 [shape = 'u8[262144]{0}', space=vmem, size = 0x40000, scoped, tag = 'output window, operand 1, single buffered']
    #allocation10 [shape = 's32[1]{0}', space=sflag, size = 0x4, scoped, tag = 'scoped memory for tpu_custom_call.1']
    %10 = vsyncpa [#allocation3], 0
    %11 = vsyncpa [#allocation6], 0
    %12 = vsyncpa [#allocation4], 0
    %13 = vsyncpa [#allocation10], 0
    // Predicated region
    $region2: #{tpu_custom_call.1} parent=1 // pred_check
      _
    $region3: #{tpu_custom_call.1} parent=1 // pred_check_branch
      %15 = sbr.rel (0) target = $region5
    $region4: #{tpu_custom_call.1} parent=1 // pred_region
      %17 = vsyncadd [#allocation3], 0
      %s18 = sshll.u32 %s0, 4
      %s19 = int_to_ptr.hbm [resolvable:$true] %s18
      %s20 = sshll.u32 [#allocation2], 4
      %s21 = int_to_ptr.vmem [resolvable:$true] %s20
      %26 = dma.hbm_to_vmem [thread:$0]  %s19, 4096, %s21, [#allocation3], 64, 64, 4
    $region5: #{tpu_custom_call.1} parent=1 // pred_fallthru
      _
    // Predicated region
    $region6: #{tpu_custom_call.1} parent=1 // pred_check
      _
    $region7: #{tpu_custom_call.1} parent=1 // pred_check_branch
      %28 = sbr.rel (0) target = $region9
    $region8: #{tpu_custom_call.1} parent=1 // pred_region
      %30 = vsyncadd [#allocation6], 0
      %s31 = sshll.u32 %s1, 4
      %s32 = int_to_ptr.hbm [resolvable:$true] %s31
      %s33 = sshll.u32 [#allocation5], 4
      %s34 = int_to_ptr.vmem [resolvable:$true] %s33
      %39 = dma.hbm_to_vmem [thread:$0]  %s32, 256, %s34, [#allocation6], 128, 128, 8
    $region9: #{tpu_custom_call.1} parent=1 // pred_fallthru
      _
    // Predicated region
    $region10: #{tpu_custom_call.1} parent=1 // pred_check
      _
    $region11: #{tpu_custom_call.1} parent=1 // pred_check_branch
      %41 = sbr.rel (0) target = $region13
    $region12: #{tpu_custom_call.1} parent=1 // pred_region
      %43 = vsyncadd [#allocation6], 0
      %s45 = sshll.u32 %s2, 4
      %s46 = int_to_ptr.hbm [resolvable:$true] %s45
      %s47 = sshll.u32 [#allocation7], 4
      %s48 = int_to_ptr.vmem [resolvable:$true] %s47
      %50 = dma.hbm_to_vmem [thread:$0]  %s46, 64, %s48, [#allocation6]
    $region13: #{tpu_custom_call.1} parent=1 // pred_fallthru
      _
    // Predicated region
    $region14: #{tpu_custom_call.1} parent=1 // pred_check
      _
    $region15: #{tpu_custom_call.1} parent=1 // pred_check_branch
      %52 = sbr.rel (0) target = $region17
    $region16: #{tpu_custom_call.1} parent=1 // pred_region
      %54 = dma.done [#allocation3], 4096
    $region17: #{tpu_custom_call.1} parent=1 // pred_fallthru
      _
    // Predicated region
    $region18: #{tpu_custom_call.1} parent=1 // pred_check
      _
    $region19: #{tpu_custom_call.1} parent=1 // pred_check_branch
      %56 = sbr.rel (0) target = $region21
    $region20: #{tpu_custom_call.1} parent=1 // pred_region
      %58 = dma.done [#allocation6], 256
    $region21: #{tpu_custom_call.1} parent=1 // pred_fallthru
      _
    // Predicated region
    $region22: #{tpu_custom_call.1} parent=1 // pred_check
      _
    $region23: #{tpu_custom_call.1} parent=1 // pred_check_branch
      %60 = sbr.rel (0) target = $region25
    $region24: #{tpu_custom_call.1} parent=1 // pred_region
      %62 = dma.done [#allocation6], 64
    $region25: #{tpu_custom_call.1} parent=1 // pred_fallthru
      _
    %v64 = vld [vmem:[#allocation2] sm:$0xf]
    %v65 = vld [vmem:[#allocation2 + $0x4] sm:$0xf]
    %v66 = vld [vmem:[#allocation2 + $0x8] sm:$0xf]
    %v67 = vld [vmem:[#allocation2 + $0xc] sm:$0xf]
    %v68 = vld [vmem:[#allocation2 + $0x10] sm:$0xf]
    %v69 = vld [vmem:[#allocation2 + $0x14] sm:$0xf]
    %v70 = vld [vmem:[#allocation2 + $0x18] sm:$0xf]
    %v71 = vld [vmem:[#allocation2 + $0x1c] sm:$0xf]
    %v72 = vld [vmem:[#allocation2 + $0x20] sm:$0xf]
    %v73 = vld [vmem:[#allocation2 + $0x24] sm:$0xf]
    %v74 = vld [vmem:[#allocation2 + $0x28] sm:$0xf]
    %v75 = vld [vmem:[#allocation2 + $0x2c] sm:$0xf]
    %v76 = vld [vmem:[#allocation2 + $0x30] sm:$0xf]
    %v77 = vld [vmem:[#allocation2 + $0x34] sm:$0xf]
    %v78 = vld [vmem:[#allocation2 + $0x38] sm:$0xf]
    %v79 = vld [vmem:[#allocation2 + $0x3c] sm:$0xf]
    %v80 = vld [vmem:[#allocation2 + $0x40] sm:$0xf]
    %v81 = vld [vmem:[#allocation2 + $0x44] sm:$0xf]
    %v82 = vld [vmem:[#allocation2 + $0x48] sm:$0xf]
    %v83 = vld [vmem:[#allocation2 + $0x4c] sm:$0xf]
    %v84 = vld [vmem:[#allocation2 + $0x50] sm:$0xf]
    %v85 = vld [vmem:[#allocation2 + $0x54] sm:$0xf]
    %v86 = vld [vmem:[#allocation2 + $0x58] sm:$0xf]
    %v87 = vld [vmem:[#allocation2 + $0x5c] sm:$0xf]
    %v88 = vld [vmem:[#allocation2 + $0x60] sm:$0xf]
    %v89 = vld [vmem:[#allocation2 + $0x64] sm:$0xf]
    %v90 = vld [vmem:[#allocation2 + $0x68] sm:$0xf]
    %v91 = vld [vmem:[#allocation2 + $0x6c] sm:$0xf]
    %v92 = vld [vmem:[#allocation2 + $0x70] sm:$0xf]
    %v93 = vld [vmem:[#allocation2 + $0x74] sm:$0xf]
    %v94 = vld [vmem:[#allocation2 + $0x78] sm:$0xf]
    %v95 = vld [vmem:[#allocation2 + $0x7c] sm:$0xf]
    %v96 = vld [vmem:[#allocation2 + $0x80] sm:$0xf]
    %v97 = vld [vmem:[#allocation2 + $0x84] sm:$0xf]
    %v98 = vld [vmem:[#allocation2 + $0x88] sm:$0xf]
    %v99 = vld [vmem:[#allocation2 + $0x8c] sm:$0xf]
    %v100 = vld [vmem:[#allocation2 + $0x90] sm:$0xf]
    %v101 = vld [vmem:[#allocation2 + $0x94] sm:$0xf]
    %v102 = vld [vmem:[#allocation2 + $0x98] sm:$0xf]
    %v103 = vld [vmem:[#allocation2 + $0x9c] sm:$0xf]
    %v104 = vld [vmem:[#allocation2 + $0xa0] sm:$0xf]
    %v105 = vld [vmem:[#allocation2 + $0xa4] sm:$0xf]
    %v106 = vld [vmem:[#allocation2 + $0xa8] sm:$0xf]
    %v107 = vld [vmem:[#allocation2 + $0xac] sm:$0xf]
    %v108 = vld [vmem:[#allocation2 + $0xb0] sm:$0xf]
    %v109 = vld [vmem:[#allocation2 + $0xb4] sm:$0xf]
    %v110 = vld [vmem:[#allocation2 + $0xb8] sm:$0xf]
    %v111 = vld [vmem:[#allocation2 + $0xbc] sm:$0xf]
    %v112 = vld [vmem:[#allocation2 + $0xc0] sm:$0xf]
    %v113 = vld [vmem:[#allocation2 + $0xc4] sm:$0xf]
    %v114 = vld [vmem:[#allocation2 + $0xc8] sm:$0xf]
    %v115 = vld [vmem:[#allocation2 + $0xcc] sm:$0xf]
    %v116 = vld [vmem:[#allocation2 + $0xd0] sm:$0xf]
    %v117 = vld [vmem:[#allocation2 + $0xd4] sm:$0xf]
    %v118 = vld [vmem:[#allocation2 + $0xd8] sm:$0xf]
    %v119 = vld [vmem:[#allocation2 + $0xdc] sm:$0xf]
    %v120 = vld [vmem:[#allocation2 + $0xe0] sm:$0xf]
    %v121 = vld [vmem:[#allocation2 + $0xe4] sm:$0xf]
    %v122 = vld [vmem:[#allocation2 + $0xe8] sm:$0xf]
    %v123 = vld [vmem:[#allocation2 + $0xec] sm:$0xf]
    %v124 = vld [vmem:[#allocation2 + $0xf0] sm:$0xf]
    %v125 = vld [vmem:[#allocation2 + $0xf4] sm:$0xf]
    %v126 = vld [vmem:[#allocation2 + $0xf8] sm:$0xf]
    %v127 = vld [vmem:[#allocation2 + $0xfc] sm:$0xf]
    %v128 = vld [vmem:[#allocation5] sm:$0xff]
    %v129 = vld [vmem:[#allocation5 + $0x8] sm:$0xff]
    %v130 = vpack.c.bf16 %v129, %v128
    %v195 = vunpack.c.l.b16 %v64
    %v196 = vunpack.c.l.b16 %v65
    %v197 = vunpack.c.l.b16 %v66
    %v198 = vunpack.c.l.b16 %v67
    %v199 = vunpack.c.l.b16 %v68
    %v200 = vunpack.c.l.b16 %v69
    %v201 = vunpack.c.l.b16 %v70
    %v202 = vunpack.c.l.b16 %v71
    %v203 = vunpack.c.l.b16 %v72
    %v204 = vunpack.c.l.b16 %v73
    %v205 = vunpack.c.l.b16 %v74
    %v206 = vunpack.c.l.b16 %v75
    %v207 = vunpack.c.l.b16 %v76
    %v208 = vunpack.c.l.b16 %v77
    %v209 = vunpack.c.l.b16 %v78
    %v210 = vunpack.c.l.b16 %v79
    %v211 = vunpack.c.l.b16 %v80
    %v212 = vunpack.c.l.b16 %v81
    %v213 = vunpack.c.l.b16 %v82
    %v214 = vunpack.c.l.b16 %v83
    %v215 = vunpack.c.l.b16 %v84
    %v216 = vunpack.c.l.b16 %v85
    %v217 = vunpack.c.l.b16 %v86
    %v218 = vunpack.c.l.b16 %v87
    %v219 = vunpack.c.l.b16 %v88
    %v220 = vunpack.c.l.b16 %v89
    %v221 = vunpack.c.l.b16 %v90
    %v222 = vunpack.c.l.b16 %v91
    %v223 = vunpack.c.l.b16 %v92
    %v224 = vunpack.c.l.b16 %v93
    %v225 = vunpack.c.l.b16 %v94
    %v226 = vunpack.c.l.b16 %v95
    %v227 = vunpack.c.l.b16 %v96
    %v228 = vunpack.c.l.b16 %v97
    %v229 = vunpack.c.l.b16 %v98
    %v230 = vunpack.c.l.b16 %v99
    %v231 = vunpack.c.l.b16 %v100
    %v232 = vunpack.c.l.b16 %v101
    %v233 = vunpack.c.l.b16 %v102
    %v234 = vunpack.c.l.b16 %v103
    %v235 = vunpack.c.l.b16 %v104
    %v236 = vunpack.c.l.b16 %v105
    %v237 = vunpack.c.l.b16 %v106
    %v238 = vunpack.c.l.b16 %v107
    %v239 = vunpack.c.l.b16 %v108
    %v240 = vunpack.c.l.b16 %v109
    %v241 = vunpack.c.l.b16 %v110
    %v242 = vunpack.c.l.b16 %v111
    %v243 = vunpack.c.l.b16 %v112
    %v244 = vunpack.c.l.b16 %v113
    %v245 = vunpack.c.l.b16 %v114
    %v246 = vunpack.c.l.b16 %v115
    %v247 = vunpack.c.l.b16 %v116
    %v248 = vunpack.c.l.b16 %v117
    %v249 = vunpack.c.l.b16 %v118
    %v250 = vunpack.c.l.b16 %v119
    %v251 = vunpack.c.l.b16 %v120
    %v252 = vunpack.c.l.b16 %v121
    %v253 = vunpack.c.l.b16 %v122
    %v254 = vunpack.c.l.b16 %v123
    %v255 = vunpack.c.l.b16 %v124
    %v256 = vunpack.c.l.b16 %v125
    %v257 = vunpack.c.l.b16 %v126
    %v258 = vunpack.c.l.b16 %v127
    %v259 = vpack.c.b16 %v196, %v195
    %v260 = vpack.c.b16 %v198, %v197
    %v261 = vpack.c.b16 %v200, %v199
    %v262 = vpack.c.b16 %v202, %v201
    %v263 = vpack.c.b16 %v204, %v203
    %v264 = vpack.c.b16 %v206, %v205
    %v265 = vpack.c.b16 %v208, %v207
    %v266 = vpack.c.b16 %v210, %v209
    %v267 = vpack.c.b16 %v212, %v211
    %v268 = vpack.c.b16 %v214, %v213
    %v269 = vpack.c.b16 %v216, %v215
    %v270 = vpack.c.b16 %v218, %v217
    %v271 = vpack.c.b16 %v220, %v219
    %v272 = vpack.c.b16 %v222, %v221
    %v273 = vpack.c.b16 %v224, %v223
    %v274 = vpack.c.b16 %v226, %v225
    %v275 = vpack.c.b16 %v228, %v227
    %v276 = vpack.c.b16 %v230, %v229
    %v277 = vpack.c.b16 %v232, %v231
    %v278 = vpack.c.b16 %v234, %v233
    %v279 = vpack.c.b16 %v236, %v235
    %v280 = vpack.c.b16 %v238, %v237
    %v281 = vpack.c.b16 %v240, %v239
    %v282 = vpack.c.b16 %v242, %v241
    %v283 = vpack.c.b16 %v244, %v243
    %v284 = vpack.c.b16 %v246, %v245
    %v285 = vpack.c.b16 %v248, %v247
    %v286 = vpack.c.b16 %v250, %v249
    %v287 = vpack.c.b16 %v252, %v251
    %v288 = vpack.c.b16 %v254, %v253
    %v289 = vpack.c.b16 %v256, %v255
    %v290 = vpack.c.b16 %v258, %v257
    %323 = vmatpush.bf16.xpose.msra.mxu0 0
    %324 = vmatpush.bf16.xpose.msra.mxu0 0
    %325 = vmatpush.bf16.xpose.msra.mxu0 0
    %326 = vmatpush.bf16.xpose.msra.mxu0 0
    %327 = vmatpush.bf16.xpose.msra.mxu0 0
    %328 = vmatpush.bf16.xpose.msra.mxu0 0
    %329 = vmatpush.bf16.xpose.msra.mxu0 0
    %330 = vmatpush.bf16.xpose.msra.mxu0 %v130
    %331 = vmatmul.bf16.gmra.mxu0 %v259
    %v332 = vpop.f32.mrf.mxu0
    %v333 = vadd.f32 0.0, %v332
    %v334 = vpop.f32.mrf.mxu0
    %v335 = vadd.f32 0.0, %v334
    %336 = vmatmul.bf16.gmra.mxu0 %v260
    %v337 = vpop.f32.mrf.mxu0
    %v338 = vadd.f32 0.0, %v337
    %v339 = vpop.f32.mrf.mxu0
    %v340 = vadd.f32 0.0, %v339
    %341 = vmatmul.bf16.gmra.mxu0 %v261
    %v342 = vpop.f32.mrf.mxu0
    %v343 = vadd.f32 0.0, %v342
    %v344 = vpop.f32.mrf.mxu0
    %v345 = vadd.f32 0.0, %v344
    %346 = vmatmul.bf16.gmra.mxu0 %v262
    %v347 = vpop.f32.mrf.mxu0
    %v348 = vadd.f32 0.0, %v347
    %v349 = vpop.f32.mrf.mxu0
    %v350 = vadd.f32 0.0, %v349
    %351 = vmatmul.bf16.gmra.mxu0 %v263
    %v352 = vpop.f32.mrf.mxu0
    %v353 = vadd.f32 0.0, %v352
    %v354 = vpop.f32.mrf.mxu0
    %v355 = vadd.f32 0.0, %v354
    %356 = vmatmul.bf16.gmra.mxu0 %v264
    %v357 = vpop.f32.mrf.mxu0
    %v358 = vadd.f32 0.0, %v357
    %v359 = vpop.f32.mrf.mxu0
    %v360 = vadd.f32 0.0, %v359
    %361 = vmatmul.bf16.gmra.mxu0 %v265
    %v362 = vpop.f32.mrf.mxu0
    %v363 = vadd.f32 0.0, %v362
    %v364 = vpop.f32.mrf.mxu0
    %v365 = vadd.f32 0.0, %v364
    %366 = vmatmul.bf16.gmra.mxu0 %v266
    %v367 = vpop.f32.mrf.mxu0
    %v368 = vadd.f32 0.0, %v367
    %v369 = vpop.f32.mrf.mxu0
    %v370 = vadd.f32 0.0, %v369
    %371 = vmatmul.bf16.gmra.mxu0 %v267
    %v372 = vpop.f32.mrf.mxu0
    %v373 = vadd.f32 0.0, %v372
    %v374 = vpop.f32.mrf.mxu0
    %v375 = vadd.f32 0.0, %v374
    %376 = vmatmul.bf16.gmra.mxu0 %v268
    %v377 = vpop.f32.mrf.mxu0
    %v378 = vadd.f32 0.0, %v377
    %v379 = vpop.f32.mrf.mxu0
    %v380 = vadd.f32 0.0, %v379
    %381 = vmatmul.bf16.gmra.mxu0 %v269
    %v382 = vpop.f32.mrf.mxu0
    %v383 = vadd.f32 0.0, %v382
    %v384 = vpop.f32.mrf.mxu0
    %v385 = vadd.f32 0.0, %v384
    %386 = vmatmul.bf16.gmra.mxu0 %v270
    %v387 = vpop.f32.mrf.mxu0
    %v388 = vadd.f32 0.0, %v387
    %v389 = vpop.f32.mrf.mxu0
    %v390 = vadd.f32 0.0, %v389
    %391 = vmatmul.bf16.gmra.mxu0 %v271
    %v392 = vpop.f32.mrf.mxu0
    %v393 = vadd.f32 0.0, %v392
    %v394 = vpop.f32.mrf.mxu0
    %v395 = vadd.f32 0.0, %v394
    %396 = vmatmul.bf16.gmra.mxu0 %v272
    %v397 = vpop.f32.mrf.mxu0
    %v398 = vadd.f32 0.0, %v397
    %v399 = vpop.f32.mrf.mxu0
    %v400 = vadd.f32 0.0, %v399
    %401 = vmatmul.bf16.gmra.mxu0 %v273
    %v402 = vpop.f32.mrf.mxu0
    %v403 = vadd.f32 0.0, %v402
    %v404 = vpop.f32.mrf.mxu0
    %v405 = vadd.f32 0.0, %v404
    %406 = vmatmul.bf16.gmra.mxu0 %v274
    %v407 = vpop.f32.mrf.mxu0
    %v408 = vadd.f32 0.0, %v407
    %v409 = vpop.f32.mrf.mxu0
    %v410 = vadd.f32 0.0, %v409
    %411 = vmatmul.bf16.gmra.mxu0 %v275
    %v412 = vpop.f32.mrf.mxu0
    %v413 = vadd.f32 0.0, %v412
    %v414 = vpop.f32.mrf.mxu0
    %v415 = vadd.f32 0.0, %v414
    %416 = vmatmul.bf16.gmra.mxu0 %v276
    %v417 = vpop.f32.mrf.mxu0
    %v418 = vadd.f32 0.0, %v417
    %v419 = vpop.f32.mrf.mxu0
    %v420 = vadd.f32 0.0, %v419
    %421 = vmatmul.bf16.gmra.mxu0 %v277
    %v422 = vpop.f32.mrf.mxu0
    %v423 = vadd.f32 0.0, %v422
    %v424 = vpop.f32.mrf.mxu0
    %v425 = vadd.f32 0.0, %v424
    %426 = vmatmul.bf16.gmra.mxu0 %v278
    %v427 = vpop.f32.mrf.mxu0
    %v428 = vadd.f32 0.0, %v427
    %v429 = vpop.f32.mrf.mxu0
    %v430 = vadd.f32 0.0, %v429
    %431 = vmatmul.bf16.gmra.mxu0 %v279
    %v432 = vpop.f32.mrf.mxu0
    %v433 = vadd.f32 0.0, %v432
    %v434 = vpop.f32.mrf.mxu0
    %v435 = vadd.f32 0.0, %v434
    %436 = vmatmul.bf16.gmra.mxu0 %v280
    %v437 = vpop.f32.mrf.mxu0
    %v438 = vadd.f32 0.0, %v437
    %v439 = vpop.f32.mrf.mxu0
    %v440 = vadd.f32 0.0, %v439
    %441 = vmatmul.bf16.gmra.mxu0 %v281
    %v442 = vpop.f32.mrf.mxu0
    %v443 = vadd.f32 0.0, %v442
    %v444 = vpop.f32.mrf.mxu0
    %v445 = vadd.f32 0.0, %v444
    %446 = vmatmul.bf16.gmra.mxu0 %v282
    %v447 = vpop.f32.mrf.mxu0
    %v448 = vadd.f32 0.0, %v447
    %v449 = vpop.f32.mrf.mxu0
    %v450 = vadd.f32 0.0, %v449
    %451 = vmatmul.bf16.gmra.mxu0 %v283
    %v452 = vpop.f32.mrf.mxu0
    %v453 = vadd.f32 0.0, %v452
    %v454 = vpop.f32.mrf.mxu0
    %v455 = vadd.f32 0.0, %v454
    %456 = vmatmul.bf16.gmra.mxu0 %v284
    %v457 = vpop.f32.mrf.mxu0
    %v458 = vadd.f32 0.0, %v457
    %v459 = vpop.f32.mrf.mxu0
    %v460 = vadd.f32 0.0, %v459
    %461 = vmatmul.bf16.gmra.mxu0 %v285
    %v462 = vpop.f32.mrf.mxu0
    %v463 = vadd.f32 0.0, %v462
    %v464 = vpop.f32.mrf.mxu0
    %v465 = vadd.f32 0.0, %v464
    %466 = vmatmul.bf16.gmra.mxu0 %v286
    %v467 = vpop.f32.mrf.mxu0
    %v468 = vadd.f32 0.0, %v467
    %v469 = vpop.f32.mrf.mxu0
    %v470 = vadd.f32 0.0, %v469
    %471 = vmatmul.bf16.gmra.mxu0 %v287
    %v472 = vpop.f32.mrf.mxu0
    %v473 = vadd.f32 0.0, %v472
    %v474 = vpop.f32.mrf.mxu0
    %v475 = vadd.f32 0.0, %v474
    %476 = vmatmul.bf16.gmra.mxu0 %v288
    %v477 = vpop.f32.mrf.mxu0
    %v478 = vadd.f32 0.0, %v477
    %v479 = vpop.f32.mrf.mxu0
    %v480 = vadd.f32 0.0, %v479
    %481 = vmatmul.bf16.gmra.mxu0 %v289
    %v482 = vpop.f32.mrf.mxu0
    %v483 = vadd.f32 0.0, %v482
    %v484 = vpop.f32.mrf.mxu0
    %v485 = vadd.f32 0.0, %v484
    %486 = vmatmul.bf16.gmra.mxu0 %v290
    %v487 = vpop.f32.mrf.mxu0
    %v488 = vadd.f32 0.0, %v487
    %v489 = vpop.f32.mrf.mxu0
    %v490 = vadd.f32 0.0, %v489
    %491 = vdwg.mxu0
    %vm492 = vcmask 130048
    %v493 = vsel %vm492, %v333, -inf
    %494 = vmax.xlane.f32.xlu0 %v493
    %v495 = vpop.xlane.xlu0 %494
    %v496 = vsel %vm492, %v335, -inf
    %497 = vmax.xlane.f32.xlu0 %v496
    %v498 = vpop.xlane.xlu0 %497
    %v499 = vsel %vm492, %v338, -inf
    %500 = vmax.xlane.f32.xlu0 %v499
    %v501 = vpop.xlane.xlu0 %500
    %v502 = vsel %vm492, %v340, -inf
    %503 = vmax.xlane.f32.xlu0 %v502
    %v504 = vpop.xlane.xlu0 %503
    %v505 = vsel %vm492, %v343, -inf
    %506 = vmax.xlane.f32.xlu0 %v505
    %v507 = vpop.xlane.xlu0 %506
    %v508 = vsel %vm492, %v345, -inf
    %509 = vmax.xlane.f32.xlu0 %v508
    %v510 = vpop.xlane.xlu0 %509
    %v511 = vsel %vm492, %v348, -inf
    %512 = vmax.xlane.f32.xlu0 %v511
    %v513 = vpop.xlane.xlu0 %512
    %v514 = vsel %vm492, %v350, -inf
    %515 = vmax.xlane.f32.xlu0 %v514
    %v516 = vpop.xlane.xlu0 %515
    %v517 = vsel %vm492, %v353, -inf
    %518 = vmax.xlane.f32.xlu0 %v517
    %v519 = vpop.xlane.xlu0 %518
    %v520 = vsel %vm492, %v355, -inf
    %521 = vmax.xlane.f32.xlu0 %v520
    %v522 = vpop.xlane.xlu0 %521
    %v523 = vsel %vm492, %v358, -inf
    %524 = vmax.xlane.f32.xlu0 %v523
    %v525 = vpop.xlane.xlu0 %524
    %v526 = vsel %vm492, %v360, -inf
    %527 = vmax.xlane.f32.xlu0 %v526
    %v528 = vpop.xlane.xlu0 %527
    %v529 = vsel %vm492, %v363, -inf
    %530 = vmax.xlane.f32.xlu0 %v529
    %v531 = vpop.xlane.xlu0 %530
    %v532 = vsel %vm492, %v365, -inf
    %533 = vmax.xlane.f32.xlu0 %v532
    %v534 = vpop.xlane.xlu0 %533
    %v535 = vsel %vm492, %v368, -inf
    %536 = vmax.xlane.f32.xlu0 %v535
    %v537 = vpop.xlane.xlu0 %536
    %v538 = vsel %vm492, %v370, -inf
    %539 = vmax.xlane.f32.xlu0 %v538
    %v540 = vpop.xlane.xlu0 %539
    %v541 = vsel %vm492, %v373, -inf
    %542 = vmax.xlane.f32.xlu0 %v541
    %v543 = vpop.xlane.xlu0 %542
    %v544 = vsel %vm492, %v375, -inf
    %545 = vmax.xlane.f32.xlu0 %v544
    %v546 = vpop.xlane.xlu0 %545
    %v547 = vsel %vm492, %v378, -inf
    %548 = vmax.xlane.f32.xlu0 %v547
    %v549 = vpop.xlane.xlu0 %548
    %v550 = vsel %vm492, %v380, -inf
    %551 = vmax.xlane.f32.xlu0 %v550
    %v552 = vpop.xlane.xlu0 %551
    %v553 = vsel %vm492, %v383, -inf
    %554 = vmax.xlane.f32.xlu0 %v553
    %v555 = vpop.xlane.xlu0 %554
    %v556 = vsel %vm492, %v385, -inf
    %557 = vmax.xlane.f32.xlu0 %v556
    %v558 = vpop.xlane.xlu0 %557
    %v559 = vsel %vm492, %v388, -inf
    %560 = vmax.xlane.f32.xlu0 %v559
    %v561 = vpop.xlane.xlu0 %560
    %v562 = vsel %vm492, %v390, -inf
    %563 = vmax.xlane.f32.xlu0 %v562
    %v564 = vpop.xlane.xlu0 %563
    %v565 = vsel %vm492, %v393, -inf
    %566 = vmax.xlane.f32.xlu0 %v565
    %v567 = vpop.xlane.xlu0 %566
    %v568 = vsel %vm492, %v395, -inf
    %569 = vmax.xlane.f32.xlu0 %v568
    %v570 = vpop.xlane.xlu0 %569
    %v571 = vsel %vm492, %v398, -inf
    %572 = vmax.xlane.f32.xlu0 %v571
    %v573 = vpop.xlane.xlu0 %572
    %v574 = vsel %vm492, %v400, -inf
    %575 = vmax.xlane.f32.xlu0 %v574
    %v576 = vpop.xlane.xlu0 %575
    %v577 = vsel %vm492, %v403, -inf
    %578 = vmax.xlane.f32.xlu0 %v577
    %v579 = vpop.xlane.xlu0 %578
    %v580 = vsel %vm492, %v405, -inf
    %581 = vmax.xlane.f32.xlu0 %v580
    %v582 = vpop.xlane.xlu0 %581
    %v583 = vsel %vm492, %v408, -inf
    %584 = vmax.xlane.f32.xlu0 %v583
    %v585 = vpop.xlane.xlu0 %584
    %v586 = vsel %vm492, %v410, -inf
    %587 = vmax.xlane.f32.xlu0 %v586
    %v588 = vpop.xlane.xlu0 %587
    %v589 = vsel %vm492, %v413, -inf
    %590 = vmax.xlane.f32.xlu0 %v589
    %v591 = vpop.xlane.xlu0 %590
    %v592 = vsel %vm492, %v415, -inf
    %593 = vmax.xlane.f32.xlu0 %v592
    %v594 = vpop.xlane.xlu0 %593
    %v595 = vsel %vm492, %v418, -inf
    %596 = vmax.xlane.f32.xlu0 %v595
    %v597 = vpop.xlane.xlu0 %596
    %v598 = vsel %vm492, %v420, -inf
    %599 = vmax.xlane.f32.xlu0 %v598
    %v600 = vpop.xlane.xlu0 %599
    %v601 = vsel %vm492, %v423, -inf
    %602 = vmax.xlane.f32.xlu0 %v601
    %v603 = vpop.xlane.xlu0 %602
    %v604 = vsel %vm492, %v425, -inf
    %605 = vmax.xlane.f32.xlu0 %v604
    %v606 = vpop.xlane.xlu0 %605
    %v607 = vsel %vm492, %v428, -inf
    %608 = vmax.xlane.f32.xlu0 %v607
    %v609 = vpop.xlane.xlu0 %608
    %v610 = vsel %vm492, %v430, -inf
    %611 = vmax.xlane.f32.xlu0 %v610
    %v612 = vpop.xlane.xlu0 %611
    %v613 = vsel %vm492, %v433, -inf
    %614 = vmax.xlane.f32.xlu0 %v613
    %v615 = vpop.xlane.xlu0 %614
    %v616 = vsel %vm492, %v435, -inf
    %617 = vmax.xlane.f32.xlu0 %v616
    %v618 = vpop.xlane.xlu0 %617
    %v619 = vsel %vm492, %v438, -inf
    %620 = vmax.xlane.f32.xlu0 %v619
    %v621 = vpop.xlane.xlu0 %620
    %v622 = vsel %vm492, %v440, -inf
    %623 = vmax.xlane.f32.xlu0 %v622
    %v624 = vpop.xlane.xlu0 %623
    %v625 = vsel %vm492, %v443, -inf
    %626 = vmax.xlane.f32.xlu0 %v625
    %v627 = vpop.xlane.xlu0 %626
    %v628 = vsel %vm492, %v445, -inf
    %629 = vmax.xlane.f32.xlu0 %v628
    %v630 = vpop.xlane.xlu0 %629
    %v631 = vsel %vm492, %v448, -inf
    %632 = vmax.xlane.f32.xlu0 %v631
    %v633 = vpop.xlane.xlu0 %632
    %v634 = vsel %vm492, %v450, -inf
    %635 = vmax.xlane.f32.xlu0 %v634
    %v636 = vpop.xlane.xlu0 %635
    %v637 = vsel %vm492, %v453, -inf
    %638 = vmax.xlane.f32.xlu0 %v637
    %v639 = vpop.xlane.xlu0 %638
    %v640 = vsel %vm492, %v455, -inf
    %641 = vmax.xlane.f32.xlu0 %v640
    %v642 = vpop.xlane.xlu0 %641
    %v643 = vsel %vm492, %v458, -inf
    %644 = vmax.xlane.f32.xlu0 %v643
    %v645 = vpop.xlane.xlu0 %644
    %v646 = vsel %vm492, %v460, -inf
    %647 = vmax.xlane.f32.xlu0 %v646
    %v648 = vpop.xlane.xlu0 %647
    %v649 = vsel %vm492, %v463, -inf
    %650 = vmax.xlane.f32.xlu0 %v649
    %v651 = vpop.xlane.xlu0 %650
    %v652 = vsel %vm492, %v465, -inf
    %653 = vmax.xlane.f32.xlu0 %v652
    %v654 = vpop.xlane.xlu0 %653
    %v655 = vsel %vm492, %v468, -inf
    %656 = vmax.xlane.f32.xlu0 %v655
    %v657 = vpop.xlane.xlu0 %656
    %v658 = vsel %vm492, %v470, -inf
    %659 = vmax.xlane.f32.xlu0 %v658
    %v660 = vpop.xlane.xlu0 %659
    %v661 = vsel %vm492, %v473, -inf
    %662 = vmax.xlane.f32.xlu0 %v661
    %v663 = vpop.xlane.xlu0 %662
    %v664 = vsel %vm492, %v475, -inf
    %665 = vmax.xlane.f32.xlu0 %v664
    %v666 = vpop.xlane.xlu0 %665
    %v667 = vsel %vm492, %v478, -inf
    %668 = vmax.xlane.f32.xlu0 %v667
    %v669 = vpop.xlane.xlu0 %668
    %v670 = vsel %vm492, %v480, -inf
    %671 = vmax.xlane.f32.xlu0 %v670
    %v672 = vpop.xlane.xlu0 %671
    %v673 = vsel %vm492, %v483, -inf
    %674 = vmax.xlane.f32.xlu0 %v673
    %v675 = vpop.xlane.xlu0 %674
    %v676 = vsel %vm492, %v485, -inf
    %677 = vmax.xlane.f32.xlu0 %v676
    %v678 = vpop.xlane.xlu0 %677
    %v679 = vsel %vm492, %v488, -inf
    %680 = vmax.xlane.f32.xlu0 %v679
    %v681 = vpop.xlane.xlu0 %680
    %v682 = vsel %vm492, %v490, -inf
    %683 = vmax.xlane.f32.xlu0 %v682
    %v684 = vpop.xlane.xlu0 %683
    %v685 = vsub.f32 %v333, %v495
    %v686 = vsub.f32 %v335, %v498
    %v687 = vsub.f32 %v338, %v501
    %v688 = vsub.f32 %v340, %v504
    %v689 = vsub.f32 %v343, %v507
    %v690 = vsub.f32 %v345, %v510
    %v691 = vsub.f32 %v348, %v513
    %v692 = vsub.f32 %v350, %v516
    %v693 = vsub.f32 %v353, %v519
    %v694 = vsub.f32 %v355, %v522
    %v695 = vsub.f32 %v358, %v525
    %v696 = vsub.f32 %v360, %v528
    %v697 = vsub.f32 %v363, %v531
    %v698 = vsub.f32 %v365, %v534
    %v699 = vsub.f32 %v368, %v537
    %v700 = vsub.f32 %v370, %v540
    %v701 = vsub.f32 %v373, %v543
    %v702 = vsub.f32 %v375, %v546
    %v703 = vsub.f32 %v378, %v549
    %v704 = vsub.f32 %v380, %v552
    %v705 = vsub.f32 %v383, %v555
    %v706 = vsub.f32 %v385, %v558
    %v707 = vsub.f32 %v388, %v561
    %v708 = vsub.f32 %v390, %v564
    %v709 = vsub.f32 %v393, %v567
    %v710 = vsub.f32 %v395, %v570
    %v711 = vsub.f32 %v398, %v573
    %v712 = vsub.f32 %v400, %v576
    %v713 = vsub.f32 %v403, %v579
    %v714 = vsub.f32 %v405, %v582
    %v715 = vsub.f32 %v408, %v585
    %v716 = vsub.f32 %v410, %v588
    %v717 = vsub.f32 %v413, %v591
    %v718 = vsub.f32 %v415, %v594
    %v719 = vsub.f32 %v418, %v597
    %v720 = vsub.f32 %v420, %v600
    %v721 = vsub.f32 %v423, %v603
    %v722 = vsub.f32 %v425, %v606
    %v723 = vsub.f32 %v428, %v609
    %v724 = vsub.f32 %v430, %v612
    %v725 = vsub.f32 %v433, %v615
    %v726 = vsub.f32 %v435, %v618
    %v727 = vsub.f32 %v438, %v621
    %v728 = vsub.f32 %v440, %v624
    %v729 = vsub.f32 %v443, %v627
    %v730 = vsub.f32 %v445, %v630
    %v731 = vsub.f32 %v448, %v633
    %v732 = vsub.f32 %v450, %v636
    %v733 = vsub.f32 %v453, %v639
    %v734 = vsub.f32 %v455, %v642
    %v735 = vsub.f32 %v458, %v645
    %v736 = vsub.f32 %v460, %v648
    %v737 = vsub.f32 %v463, %v651
    %v738 = vsub.f32 %v465, %v654
    %v739 = vsub.f32 %v468, %v657
    %v740 = vsub.f32 %v470, %v660
    %v741 = vsub.f32 %v473, %v663
    %v742 = vsub.f32 %v475, %v666
    %v743 = vsub.f32 %v478, %v669
    %v744 = vsub.f32 %v480, %v672
    %v745 = vsub.f32 %v483, %v675
    %v746 = vsub.f32 %v485, %v678
    %v747 = vsub.f32 %v488, %v681
    %v748 = vsub.f32 %v490, %v684
    %v749 = vmul.f32 %v685, 1.442695
    %v750 = vpow.pop %v749
    %v751 = vmul.f32 %v686, 1.442695
    %v752 = vpow.pop %v751
    %v753 = vmul.f32 %v687, 1.442695
    %v754 = vpow.pop %v753
    %v755 = vmul.f32 %v688, 1.442695
    %v756 = vpow.pop %v755
    %v757 = vmul.f32 %v689, 1.442695
    %v758 = vpow.pop %v757
    %v759 = vmul.f32 %v690, 1.442695
    %v760 = vpow.pop %v759
    %v761 = vmul.f32 %v691, 1.442695
    %v762 = vpow.pop %v761
    %v763 = vmul.f32 %v692, 1.442695
    %v764 = vpow.pop %v763
    %v765 = vmul.f32 %v693, 1.442695
    %v766 = vpow.pop %v765
    %v767 = vmul.f32 %v694, 1.442695
    %v768 = vpow.pop %v767
    %v769 = vmul.f32 %v695, 1.442695
    %v770 = vpow.pop %v769
    %v771 = vmul.f32 %v696, 1.442695
    %v772 = vpow.pop %v771
    %v773 = vmul.f32 %v697, 1.442695
    %v774 = vpow.pop %v773
    %v775 = vmul.f32 %v698, 1.442695
    %v776 = vpow.pop %v775
    %v777 = vmul.f32 %v699, 1.442695
    %v778 = vpow.pop %v777
    %v779 = vmul.f32 %v700, 1.442695
    %v780 = vpow.pop %v779
    %v781 = vmul.f32 %v701, 1.442695
    %v782 = vpow.pop %v781
    %v783 = vmul.f32 %v702, 1.442695
    %v784 = vpow.pop %v783
    %v785 = vmul.f32 %v703, 1.442695
    %v786 = vpow.pop %v785
    %v787 = vmul.f32 %v704, 1.442695
    %v788 = vpow.pop %v787
    %v789 = vmul.f32 %v705, 1.442695
    %v790 = vpow.pop %v789
    %v791 = vmul.f32 %v706, 1.442695
    %v792 = vpow.pop %v791
    %v793 = vmul.f32 %v707, 1.442695
    %v794 = vpow.pop %v793
    %v795 = vmul.f32 %v708, 1.442695
    %v796 = vpow.pop %v795
    %v797 = vmul.f32 %v709, 1.442695
    %v798 = vpow.pop %v797
    %v799 = vmul.f32 %v710, 1.442695
    %v800 = vpow.pop %v799
    %v801 = vmul.f32 %v711, 1.442695
    %v802 = vpow.pop %v801
    %v803 = vmul.f32 %v712, 1.442695
    %v804 = vpow.pop %v803
    %v805 = vmul.f32 %v713, 1.442695
    %v806 = vpow.pop %v805
    %v807 = vmul.f32 %v714, 1.442695
    %v808 = vpow.pop %v807
    %v809 = vmul.f32 %v715, 1.442695
    %v810 = vpow.pop %v809
    %v811 = vmul.f32 %v716, 1.442695
    %v812 = vpow.pop %v811
    %v813 = vmul.f32 %v717, 1.442695
    %v814 = vpow.pop %v813
    %v815 = vmul.f32 %v718, 1.442695
    %v816 = vpow.pop %v815
    %v817 = vmul.f32 %v719, 1.442695
    %v818 = vpow.pop %v817
    %v819 = vmul.f32 %v720, 1.442695
    %v820 = vpow.pop %v819
    %v821 = vmul.f32 %v721, 1.442695
    %v822 = vpow.pop %v821
    %v823 = vmul.f32 %v722, 1.442695
    %v824 = vpow.pop %v823
    %v825 = vmul.f32 %v723, 1.442695
    %v826 = vpow.pop %v825
    %v827 = vmul.f32 %v724, 1.442695
    %v828 = vpow.pop %v827
    %v829 = vmul.f32 %v725, 1.442695
    %v830 = vpow.pop %v829
    %v831 = vmul.f32 %v726, 1.442695
    %v832 = vpow.pop %v831
    %v833 = vmul.f32 %v727, 1.442695
    %v834 = vpow.pop %v833
    %v835 = vmul.f32 %v728, 1.442695
    %v836 = vpow.pop %v835
    %v837 = vmul.f32 %v729, 1.442695
    %v838 = vpow.pop %v837
    %v839 = vmul.f32 %v730, 1.442695
    %v840 = vpow.pop %v839
    %v841 = vmul.f32 %v731, 1.442695
    %v842 = vpow.pop %v841
    %v843 = vmul.f32 %v732, 1.442695
    %v844 = vpow.pop %v843
    %v845 = vmul.f32 %v733, 1.442695
    %v846 = vpow.pop %v845
    %v847 = vmul.f32 %v734, 1.442695
    %v848 = vpow.pop %v847
    %v849 = vmul.f32 %v735, 1.442695
    %v850 = vpow.pop %v849
    %v851 = vmul.f32 %v736, 1.442695
    %v852 = vpow.pop %v851
    %v853 = vmul.f32 %v737, 1.442695
    %v854 = vpow.pop %v853
    %v855 = vmul.f32 %v738, 1.442695
    %v856 = vpow.pop %v855
    %v857 = vmul.f32 %v739, 1.442695
    %v858 = vpow.pop %v857
    %v859 = vmul.f32 %v740, 1.442695
    %v860 = vpow.pop %v859
    %v861 = vmul.f32 %v741, 1.442695
    %v862 = vpow.pop %v861
    %v863 = vmul.f32 %v742, 1.442695
    %v864 = vpow.pop %v863
    %v865 = vmul.f32 %v743, 1.442695
    %v866 = vpow.pop %v865
    %v867 = vmul.f32 %v744, 1.442695
    %v868 = vpow.pop %v867
    %v869 = vmul.f32 %v745, 1.442695
    %v870 = vpow.pop %v869
    %v871 = vmul.f32 %v746, 1.442695
    %v872 = vpow.pop %v871
    %v873 = vmul.f32 %v747, 1.442695
    %v874 = vpow.pop %v873
    %v875 = vmul.f32 %v748, 1.442695
    %v876 = vpow.pop %v875
    %v877 = vsel %vm492, %v750, 0.0
    %878 = vadd.xlane.f32.xlu0 %v877
    %v879 = vpop.xlane.xlu0 %878
    %v880 = vsel %vm492, %v752, 0.0
    %881 = vadd.xlane.f32.xlu0 %v880
    %v882 = vpop.xlane.xlu0 %881
    %v883 = vsel %vm492, %v754, 0.0
    %884 = vadd.xlane.f32.xlu0 %v883
    %v885 = vpop.xlane.xlu0 %884
    %v886 = vsel %vm492, %v756, 0.0
    %887 = vadd.xlane.f32.xlu0 %v886
    %v888 = vpop.xlane.xlu0 %887
    %v889 = vsel %vm492, %v758, 0.0
    %890 = vadd.xlane.f32.xlu0 %v889
    %v891 = vpop.xlane.xlu0 %890
    %v892 = vsel %vm492, %v760, 0.0
    %893 = vadd.xlane.f32.xlu0 %v892
    %v894 = vpop.xlane.xlu0 %893
    %v895 = vsel %vm492, %v762, 0.0
    %896 = vadd.xlane.f32.xlu0 %v895
    %v897 = vpop.xlane.xlu0 %896
    %v898 = vsel %vm492, %v764, 0.0
    %899 = vadd.xlane.f32.xlu0 %v898
    %v900 = vpop.xlane.xlu0 %899
    %v901 = vsel %vm492, %v766, 0.0
    %902 = vadd.xlane.f32.xlu0 %v901
    %v903 = vpop.xlane.xlu0 %902
    %v904 = vsel %vm492, %v768, 0.0
    %905 = vadd.xlane.f32.xlu0 %v904
    %v906 = vpop.xlane.xlu0 %905
    %v907 = vsel %vm492, %v770, 0.0
    %908 = vadd.xlane.f32.xlu0 %v907
    %v909 = vpop.xlane.xlu0 %908
    %v910 = vsel %vm492, %v772, 0.0
    %911 = vadd.xlane.f32.xlu0 %v910
    %v912 = vpop.xlane.xlu0 %911
    %v913 = vsel %vm492, %v774, 0.0
    %914 = vadd.xlane.f32.xlu0 %v913
    %v915 = vpop.xlane.xlu0 %914
    %v916 = vsel %vm492, %v776, 0.0
    %917 = vadd.xlane.f32.xlu0 %v916
    %v918 = vpop.xlane.xlu0 %917
    %v919 = vsel %vm492, %v778, 0.0
    %920 = vadd.xlane.f32.xlu0 %v919
    %v921 = vpop.xlane.xlu0 %920
    %v922 = vsel %vm492, %v780, 0.0
    %923 = vadd.xlane.f32.xlu0 %v922
    %v924 = vpop.xlane.xlu0 %923
    %v925 = vsel %vm492, %v782, 0.0
    %926 = vadd.xlane.f32.xlu0 %v925
    %v927 = vpop.xlane.xlu0 %926
    %v928 = vsel %vm492, %v784, 0.0
    %929 = vadd.xlane.f32.xlu0 %v928
    %v930 = vpop.xlane.xlu0 %929
    %v931 = vsel %vm492, %v786, 0.0
    %932 = vadd.xlane.f32.xlu0 %v931
    %v933 = vpop.xlane.xlu0 %932
    %v934 = vsel %vm492, %v788, 0.0
    %935 = vadd.xlane.f32.xlu0 %v934
    %v936 = vpop.xlane.xlu0 %935
    %v937 = vsel %vm492, %v790, 0.0
    %938 = vadd.xlane.f32.xlu0 %v937
    %v939 = vpop.xlane.xlu0 %938
    %v940 = vsel %vm492, %v792, 0.0
    %941 = vadd.xlane.f32.xlu0 %v940
    %v942 = vpop.xlane.xlu0 %941
    %v943 = vsel %vm492, %v794, 0.0
    %944 = vadd.xlane.f32.xlu0 %v943
    %v945 = vpop.xlane.xlu0 %944
    %v946 = vsel %vm492, %v796, 0.0
    %947 = vadd.xlane.f32.xlu0 %v946
    %v948 = vpop.xlane.xlu0 %947
    %v949 = vsel %vm492, %v798, 0.0
    %950 = vadd.xlane.f32.xlu0 %v949
    %v951 = vpop.xlane.xlu0 %950
    %v952 = vsel %vm492, %v800, 0.0
    %953 = vadd.xlane.f32.xlu0 %v952
    %v954 = vpop.xlane.xlu0 %953
    %v955 = vsel %vm492, %v802, 0.0
    %956 = vadd.xlane.f32.xlu0 %v955
    %v957 = vpop.xlane.xlu0 %956
    %v958 = vsel %vm492, %v804, 0.0
    %959 = vadd.xlane.f32.xlu0 %v958
    %v960 = vpop.xlane.xlu0 %959
    %v961 = vsel %vm492, %v806, 0.0
    %962 = vadd.xlane.f32.xlu0 %v961
    %v963 = vpop.xlane.xlu0 %962
    %v964 = vsel %vm492, %v808, 0.0
    %965 = vadd.xlane.f32.xlu0 %v964
    %v966 = vpop.xlane.xlu0 %965
    %v967 = vsel %vm492, %v810, 0.0
    %968 = vadd.xlane.f32.xlu0 %v967
    %v969 = vpop.xlane.xlu0 %968
    %v970 = vsel %vm492, %v812, 0.0
    %971 = vadd.xlane.f32.xlu0 %v970
    %v972 = vpop.xlane.xlu0 %971
    %v973 = vsel %vm492, %v814, 0.0
    %974 = vadd.xlane.f32.xlu0 %v973
    %v975 = vpop.xlane.xlu0 %974
    %v976 = vsel %vm492, %v816, 0.0
    %977 = vadd.xlane.f32.xlu0 %v976
    %v978 = vpop.xlane.xlu0 %977
    %v979 = vsel %vm492, %v818, 0.0
    %980 = vadd.xlane.f32.xlu0 %v979
    %v981 = vpop.xlane.xlu0 %980
    %v982 = vsel %vm492, %v820, 0.0
    %983 = vadd.xlane.f32.xlu0 %v982
    %v984 = vpop.xlane.xlu0 %983
    %v985 = vsel %vm492, %v822, 0.0
    %986 = vadd.xlane.f32.xlu0 %v985
    %v987 = vpop.xlane.xlu0 %986
    %v988 = vsel %vm492, %v824, 0.0
    %989 = vadd.xlane.f32.xlu0 %v988
    %v990 = vpop.xlane.xlu0 %989
    %v991 = vsel %vm492, %v826, 0.0
    %992 = vadd.xlane.f32.xlu0 %v991
    %v993 = vpop.xlane.xlu0 %992
    %v994 = vsel %vm492, %v828, 0.0
    %995 = vadd.xlane.f32.xlu0 %v994
    %v996 = vpop.xlane.xlu0 %995
    %v997 = vsel %vm492, %v830, 0.0
    %998 = vadd.xlane.f32.xlu0 %v997
    %v999 = vpop.xlane.xlu0 %998
    %v1000 = vsel %vm492, %v832, 0.0
    %1001 = vadd.xlane.f32.xlu0 %v1000
    %v1002 = vpop.xlane.xlu0 %1001
    %v1003 = vsel %vm492, %v834, 0.0
    %1004 = vadd.xlane.f32.xlu0 %v1003
    %v1005 = vpop.xlane.xlu0 %1004
    %v1006 = vsel %vm492, %v836, 0.0
    %1007 = vadd.xlane.f32.xlu0 %v1006
    %v1008 = vpop.xlane.xlu0 %1007
    %v1009 = vsel %vm492, %v838, 0.0
    %1010 = vadd.xlane.f32.xlu0 %v1009
    %v1011 = vpop.xlane.xlu0 %1010
    %v1012 = vsel %vm492, %v840, 0.0
    %1013 = vadd.xlane.f32.xlu0 %v1012
    %v1014 = vpop.xlane.xlu0 %1013
    %v1015 = vsel %vm492, %v842, 0.0
    %1016 = vadd.xlane.f32.xlu0 %v1015
    %v1017 = vpop.xlane.xlu0 %1016
    %v1018 = vsel %vm492, %v844, 0.0
    %1019 = vadd.xlane.f32.xlu0 %v1018
    %v1020 = vpop.xlane.xlu0 %1019
    %v1021 = vsel %vm492, %v846, 0.0
    %1022 = vadd.xlane.f32.xlu0 %v1021
    %v1023 = vpop.xlane.xlu0 %1022
    %v1024 = vsel %vm492, %v848, 0.0
    %1025 = vadd.xlane.f32.xlu0 %v1024
    %v1026 = vpop.xlane.xlu0 %1025
    %v1027 = vsel %vm492, %v850, 0.0
    %1028 = vadd.xlane.f32.xlu0 %v1027
    %v1029 = vpop.xlane.xlu0 %1028
    %v1030 = vsel %vm492, %v852, 0.0
    %1031 = vadd.xlane.f32.xlu0 %v1030
    %v1032 = vpop.xlane.xlu0 %1031
    %v1033 = vsel %vm492, %v854, 0.0
    %1034 = vadd.xlane.f32.xlu0 %v1033
    %v1035 = vpop.xlane.xlu0 %1034
    %v1036 = vsel %vm492, %v856, 0.0
    %1037 = vadd.xlane.f32.xlu0 %v1036
    %v1038 = vpop.xlane.xlu0 %1037
    %v1039 = vsel %vm492, %v858, 0.0
    %1040 = vadd.xlane.f32.xlu0 %v1039
    %v1041 = vpop.xlane.xlu0 %1040
    %v1042 = vsel %vm492, %v860, 0.0
    %1043 = vadd.xlane.f32.xlu0 %v1042
    %v1044 = vpop.xlane.xlu0 %1043
    %v1045 = vsel %vm492, %v862, 0.0
    %1046 = vadd.xlane.f32.xlu0 %v1045
    %v1047 = vpop.xlane.xlu0 %1046
    %v1048 = vsel %vm492, %v864, 0.0
    %1049 = vadd.xlane.f32.xlu0 %v1048
    %v1050 = vpop.xlane.xlu0 %1049
    %v1051 = vsel %vm492, %v866, 0.0
    %1052 = vadd.xlane.f32.xlu0 %v1051
    %v1053 = vpop.xlane.xlu0 %1052
    %v1054 = vsel %vm492, %v868, 0.0
    %1055 = vadd.xlane.f32.xlu0 %v1054
    %v1056 = vpop.xlane.xlu0 %1055
    %v1057 = vsel %vm492, %v870, 0.0
    %1058 = vadd.xlane.f32.xlu0 %v1057
    %v1059 = vpop.xlane.xlu0 %1058
    %v1060 = vsel %vm492, %v872, 0.0
    %1061 = vadd.xlane.f32.xlu0 %v1060
    %v1062 = vpop.xlane.xlu0 %1061
    %v1063 = vsel %vm492, %v874, 0.0
    %1064 = vadd.xlane.f32.xlu0 %v1063
    %v1065 = vpop.xlane.xlu0 %1064
    %v1066 = vsel %vm492, %v876, 0.0
    %1067 = vadd.xlane.f32.xlu0 %v1066
    %v1068 = vpop.xlane.xlu0 %1067
    %v1069 = vrcp.pop %v879
    %v1070 = vrcp.pop %v882
    %v1071 = vrcp.pop %v885
    %v1072 = vrcp.pop %v888
    %v1073 = vrcp.pop %v891
    %v1074 = vrcp.pop %v894
    %v1075 = vrcp.pop %v897
    %v1076 = vrcp.pop %v900
    %v1077 = vrcp.pop %v903
    %v1078 = vrcp.pop %v906
    %v1079 = vrcp.pop %v909
    %v1080 = vrcp.pop %v912
    %v1081 = vrcp.pop %v915
    %v1082 = vrcp.pop %v918
    %v1083 = vrcp.pop %v921
    %v1084 = vrcp.pop %v924
    %v1085 = vrcp.pop %v927
    %v1086 = vrcp.pop %v930
    %v1087 = vrcp.pop %v933
    %v1088 = vrcp.pop %v936
    %v1089 = vrcp.pop %v939
    %v1090 = vrcp.pop %v942
    %v1091 = vrcp.pop %v945
    %v1092 = vrcp.pop %v948
    %v1093 = vrcp.pop %v951
    %v1094 = vrcp.pop %v954
    %v1095 = vrcp.pop %v957
    %v1096 = vrcp.pop %v960
    %v1097 = vrcp.pop %v963
    %v1098 = vrcp.pop %v966
    %v1099 = vrcp.pop %v969
    %v1100 = vrcp.pop %v972
    %v1101 = vrcp.pop %v975
    %v1102 = vrcp.pop %v978
    %v1103 = vrcp.pop %v981
    %v1104 = vrcp.pop %v984
    %v1105 = vrcp.pop %v987
    %v1106 = vrcp.pop %v990
    %v1107 = vrcp.pop %v993
    %v1108 = vrcp.pop %v996
    %v1109 = vrcp.pop %v999
    %v1110 = vrcp.pop %v1002
    %v1111 = vrcp.pop %v1005
    %v1112 = vrcp.pop %v1008
    %v1113 = vrcp.pop %v1011
    %v1114 = vrcp.pop %v1014
    %v1115 = vrcp.pop %v1017
    %v1116 = vrcp.pop %v1020
    %v1117 = vrcp.pop %v1023
    %v1118 = vrcp.pop %v1026
    %v1119 = vrcp.pop %v1029
    %v1120 = vrcp.pop %v1032
    %v1121 = vrcp.pop %v1035
    %v1122 = vrcp.pop %v1038
    %v1123 = vrcp.pop %v1041
    %v1124 = vrcp.pop %v1044
    %v1125 = vrcp.pop %v1047
    %v1126 = vrcp.pop %v1050
    %v1127 = vrcp.pop %v1053
    %v1128 = vrcp.pop %v1056
    %v1129 = vrcp.pop %v1059
    %v1130 = vrcp.pop %v1062
    %v1131 = vrcp.pop %v1065
    %v1132 = vrcp.pop %v1068
    %v1133 = vmul.f32 %v750, %v1069
    %v1134 = vmul.f32 %v752, %v1070
    %v1135 = vmul.f32 %v754, %v1071
    %v1136 = vmul.f32 %v756, %v1072
    %v1137 = vmul.f32 %v758, %v1073
    %v1138 = vmul.f32 %v760, %v1074
    %v1139 = vmul.f32 %v762, %v1075
    %v1140 = vmul.f32 %v764, %v1076
    %v1141 = vmul.f32 %v766, %v1077
    %v1142 = vmul.f32 %v768, %v1078
    %v1143 = vmul.f32 %v770, %v1079
    %v1144 = vmul.f32 %v772, %v1080
    %v1145 = vmul.f32 %v774, %v1081
    %v1146 = vmul.f32 %v776, %v1082
    %v1147 = vmul.f32 %v778, %v1083
    %v1148 = vmul.f32 %v780, %v1084
    %v1149 = vmul.f32 %v782, %v1085
    %v1150 = vmul.f32 %v784, %v1086
    %v1151 = vmul.f32 %v786, %v1087
    %v1152 = vmul.f32 %v788, %v1088
    %v1153 = vmul.f32 %v790, %v1089
    %v1154 = vmul.f32 %v792, %v1090
    %v1155 = vmul.f32 %v794, %v1091
    %v1156 = vmul.f32 %v796, %v1092
    %v1157 = vmul.f32 %v798, %v1093
    %v1158 = vmul.f32 %v800, %v1094
    %v1159 = vmul.f32 %v802, %v1095
    %v1160 = vmul.f32 %v804, %v1096
    %v1161 = vmul.f32 %v806, %v1097
    %v1162 = vmul.f32 %v808, %v1098
    %v1163 = vmul.f32 %v810, %v1099
    %v1164 = vmul.f32 %v812, %v1100
    %v1165 = vmul.f32 %v814, %v1101
    %v1166 = vmul.f32 %v816, %v1102
    %v1167 = vmul.f32 %v818, %v1103
    %v1168 = vmul.f32 %v820, %v1104
    %v1169 = vmul.f32 %v822, %v1105
    %v1170 = vmul.f32 %v824, %v1106
    %v1171 = vmul.f32 %v826, %v1107
    %v1172 = vmul.f32 %v828, %v1108
    %v1173 = vmul.f32 %v830, %v1109
    %v1174 = vmul.f32 %v832, %v1110
    %v1175 = vmul.f32 %v834, %v1111
    %v1176 = vmul.f32 %v836, %v1112
    %v1177 = vmul.f32 %v838, %v1113
    %v1178 = vmul.f32 %v840, %v1114
    %v1179 = vmul.f32 %v842, %v1115
    %v1180 = vmul.f32 %v844, %v1116
    %v1181 = vmul.f32 %v846, %v1117
    %v1182 = vmul.f32 %v848, %v1118
    %v1183 = vmul.f32 %v850, %v1119
    %v1184 = vmul.f32 %v852, %v1120
    %v1185 = vmul.f32 %v854, %v1121
    %v1186 = vmul.f32 %v856, %v1122
    %v1187 = vmul.f32 %v858, %v1123
    %v1188 = vmul.f32 %v860, %v1124
    %v1189 = vmul.f32 %v862, %v1125
    %v1190 = vmul.f32 %v864, %v1126
    %v1191 = vmul.f32 %v866, %v1127
    %v1192 = vmul.f32 %v868, %v1128
    %v1193 = vmul.f32 %v870, %v1129
    %v1194 = vmul.f32 %v872, %v1130
    %v1195 = vmul.f32 %v874, %v1131
    %v1196 = vmul.f32 %v876, %v1132
    %v1197 = vsub.f32 %v1133, 0.0025
    %v1198 = vsub.f32 %v1134, 0.0025
    %v1199 = vsub.f32 %v1135, 0.0025
    %v1200 = vsub.f32 %v1136, 0.0025
    %v1201 = vsub.f32 %v1137, 0.0025
    %v1202 = vsub.f32 %v1138, 0.0025
    %v1203 = vsub.f32 %v1139, 0.0025
    %v1204 = vsub.f32 %v1140, 0.0025
    %v1205 = vsub.f32 %v1141, 0.0025
    %v1206 = vsub.f32 %v1142, 0.0025
    %v1207 = vsub.f32 %v1143, 0.0025
    %v1208 = vsub.f32 %v1144, 0.0025
    %v1209 = vsub.f32 %v1145, 0.0025
    %v1210 = vsub.f32 %v1146, 0.0025
    %v1211 = vsub.f32 %v1147, 0.0025
    %v1212 = vsub.f32 %v1148, 0.0025
    %v1213 = vsub.f32 %v1149, 0.0025
    %v1214 = vsub.f32 %v1150, 0.0025
    %v1215 = vsub.f32 %v1151, 0.0025
    %v1216 = vsub.f32 %v1152, 0.0025
    %v1217 = vsub.f32 %v1153, 0.0025
    %v1218 = vsub.f32 %v1154, 0.0025
    %v1219 = vsub.f32 %v1155, 0.0025
    %v1220 = vsub.f32 %v1156, 0.0025
    %v1221 = vsub.f32 %v1157, 0.0025
    %v1222 = vsub.f32 %v1158, 0.0025
    %v1223 = vsub.f32 %v1159, 0.0025
    %v1224 = vsub.f32 %v1160, 0.0025
    %v1225 = vsub.f32 %v1161, 0.0025
    %v1226 = vsub.f32 %v1162, 0.0025
    %v1227 = vsub.f32 %v1163, 0.0025
    %v1228 = vsub.f32 %v1164, 0.0025
    %v1229 = vsub.f32 %v1165, 0.0025
    %v1230 = vsub.f32 %v1166, 0.0025
    %v1231 = vsub.f32 %v1167, 0.0025
    %v1232 = vsub.f32 %v1168, 0.0025
    %v1233 = vsub.f32 %v1169, 0.0025
    %v1234 = vsub.f32 %v1170, 0.0025
    %v1235 = vsub.f32 %v1171, 0.0025
    %v1236 = vsub.f32 %v1172, 0.0025
    %v1237 = vsub.f32 %v1173, 0.0025
    %v1238 = vsub.f32 %v1174, 0.0025
    %v1239 = vsub.f32 %v1175, 0.0025
    %v1240 = vsub.f32 %v1176, 0.0025
    %v1241 = vsub.f32 %v1177, 0.0025
    %v1242 = vsub.f32 %v1178, 0.0025
    %v1243 = vsub.f32 %v1179, 0.0025
    %v1244 = vsub.f32 %v1180, 0.0025
    %v1245 = vsub.f32 %v1181, 0.0025
    %v1246 = vsub.f32 %v1182, 0.0025
    %v1247 = vsub.f32 %v1183, 0.0025
    %v1248 = vsub.f32 %v1184, 0.0025
    %v1249 = vsub.f32 %v1185, 0.0025
    %v1250 = vsub.f32 %v1186, 0.0025
    %v1251 = vsub.f32 %v1187, 0.0025
    %v1252 = vsub.f32 %v1188, 0.0025
    %v1253 = vsub.f32 %v1189, 0.0025
    %v1254 = vsub.f32 %v1190, 0.0025
    %v1255 = vsub.f32 %v1191, 0.0025
    %v1256 = vsub.f32 %v1192, 0.0025
    %v1257 = vsub.f32 %v1193, 0.0025
    %v1258 = vsub.f32 %v1194, 0.0025
    %v1259 = vsub.f32 %v1195, 0.0025
    %v1260 = vsub.f32 %v1196, 0.0025
    %v1261 = vmax.f32 %v1197, 0.0
    %v1262 = vmax.f32 %v1198, 0.0
    %v1263 = vmax.f32 %v1199, 0.0
    %v1264 = vmax.f32 %v1200, 0.0
    %v1265 = vmax.f32 %v1201, 0.0
    %v1266 = vmax.f32 %v1202, 0.0
    %v1267 = vmax.f32 %v1203, 0.0
    %v1268 = vmax.f32 %v1204, 0.0
    %v1269 = vmax.f32 %v1205, 0.0
    %v1270 = vmax.f32 %v1206, 0.0
    %v1271 = vmax.f32 %v1207, 0.0
    %v1272 = vmax.f32 %v1208, 0.0
    %v1273 = vmax.f32 %v1209, 0.0
    %v1274 = vmax.f32 %v1210, 0.0
    %v1275 = vmax.f32 %v1211, 0.0
    %v1276 = vmax.f32 %v1212, 0.0
    %v1277 = vmax.f32 %v1213, 0.0
    %v1278 = vmax.f32 %v1214, 0.0
    %v1279 = vmax.f32 %v1215, 0.0
    %v1280 = vmax.f32 %v1216, 0.0
    %v1281 = vmax.f32 %v1217, 0.0
    %v1282 = vmax.f32 %v1218, 0.0
    %v1283 = vmax.f32 %v1219, 0.0
    %v1284 = vmax.f32 %v1220, 0.0
    %v1285 = vmax.f32 %v1221, 0.0
    %v1286 = vmax.f32 %v1222, 0.0
    %v1287 = vmax.f32 %v1223, 0.0
    %v1288 = vmax.f32 %v1224, 0.0
    %v1289 = vmax.f32 %v1225, 0.0
    %v1290 = vmax.f32 %v1226, 0.0
    %v1291 = vmax.f32 %v1227, 0.0
    %v1292 = vmax.f32 %v1228, 0.0
    %v1293 = vmax.f32 %v1229, 0.0
    %v1294 = vmax.f32 %v1230, 0.0
    %v1295 = vmax.f32 %v1231, 0.0
    %v1296 = vmax.f32 %v1232, 0.0
    %v1297 = vmax.f32 %v1233, 0.0
    %v1298 = vmax.f32 %v1234, 0.0
    %v1299 = vmax.f32 %v1235, 0.0
    %v1300 = vmax.f32 %v1236, 0.0
    %v1301 = vmax.f32 %v1237, 0.0
    %v1302 = vmax.f32 %v1238, 0.0
    %v1303 = vmax.f32 %v1239, 0.0
    %v1304 = vmax.f32 %v1240, 0.0
    %v1305 = vmax.f32 %v1241, 0.0
    %v1306 = vmax.f32 %v1242, 0.0
    %v1307 = vmax.f32 %v1243, 0.0
    %v1308 = vmax.f32 %v1244, 0.0
    %v1309 = vmax.f32 %v1245, 0.0
    %v1310 = vmax.f32 %v1246, 0.0
    %v1311 = vmax.f32 %v1247, 0.0
    %v1312 = vmax.f32 %v1248, 0.0
    %v1313 = vmax.f32 %v1249, 0.0
    %v1314 = vmax.f32 %v1250, 0.0
    %v1315 = vmax.f32 %v1251, 0.0
    %v1316 = vmax.f32 %v1252, 0.0
    %v1317 = vmax.f32 %v1253, 0.0
    %v1318 = vmax.f32 %v1254, 0.0
    %v1319 = vmax.f32 %v1255, 0.0
    %v1320 = vmax.f32 %v1256, 0.0
    %v1321 = vmax.f32 %v1257, 0.0
    %v1322 = vmax.f32 %v1258, 0.0
    %v1323 = vmax.f32 %v1259, 0.0
    %v1324 = vmax.f32 %v1260, 0.0
    %v1325 = vmul.f32 %v1261, %v1133
    %v1326 = vmul.f32 %v1262, %v1134
    %v1327 = vmul.f32 %v1263, %v1135
    %v1328 = vmul.f32 %v1264, %v1136
    %v1329 = vmul.f32 %v1265, %v1137
    %v1330 = vmul.f32 %v1266, %v1138
    %v1331 = vmul.f32 %v1267, %v1139
    %v1332 = vmul.f32 %v1268, %v1140
    %v1333 = vmul.f32 %v1269, %v1141
    %v1334 = vmul.f32 %v1270, %v1142
    %v1335 = vmul.f32 %v1271, %v1143
    %v1336 = vmul.f32 %v1272, %v1144
    %v1337 = vmul.f32 %v1273, %v1145
    %v1338 = vmul.f32 %v1274, %v1146
    %v1339 = vmul.f32 %v1275, %v1147
    %v1340 = vmul.f32 %v1276, %v1148
    %v1341 = vmul.f32 %v1277, %v1149
    %v1342 = vmul.f32 %v1278, %v1150
    %v1343 = vmul.f32 %v1279, %v1151
    %v1344 = vmul.f32 %v1280, %v1152
    %v1345 = vmul.f32 %v1281, %v1153
    %v1346 = vmul.f32 %v1282, %v1154
    %v1347 = vmul.f32 %v1283, %v1155
    %v1348 = vmul.f32 %v1284, %v1156
    %v1349 = vmul.f32 %v1285, %v1157
    %v1350 = vmul.f32 %v1286, %v1158
    %v1351 = vmul.f32 %v1287, %v1159
    %v1352 = vmul.f32 %v1288, %v1160
    %v1353 = vmul.f32 %v1289, %v1161
    %v1354 = vmul.f32 %v1290, %v1162
    %v1355 = vmul.f32 %v1291, %v1163
    %v1356 = vmul.f32 %v1292, %v1164
    %v1357 = vmul.f32 %v1293, %v1165
    %v1358 = vmul.f32 %v1294, %v1166
    %v1359 = vmul.f32 %v1295, %v1167
    %v1360 = vmul.f32 %v1296, %v1168
    %v1361 = vmul.f32 %v1297, %v1169
    %v1362 = vmul.f32 %v1298, %v1170
    %v1363 = vmul.f32 %v1299, %v1171
    %v1364 = vmul.f32 %v1300, %v1172
    %v1365 = vmul.f32 %v1301, %v1173
    %v1366 = vmul.f32 %v1302, %v1174
    %v1367 = vmul.f32 %v1303, %v1175
    %v1368 = vmul.f32 %v1304, %v1176
    %v1369 = vmul.f32 %v1305, %v1177
    %v1370 = vmul.f32 %v1306, %v1178
    %v1371 = vmul.f32 %v1307, %v1179
    %v1372 = vmul.f32 %v1308, %v1180
    %v1373 = vmul.f32 %v1309, %v1181
    %v1374 = vmul.f32 %v1310, %v1182
    %v1375 = vmul.f32 %v1311, %v1183
    %v1376 = vmul.f32 %v1312, %v1184
    %v1377 = vmul.f32 %v1313, %v1185
    %v1378 = vmul.f32 %v1314, %v1186
    %v1379 = vmul.f32 %v1315, %v1187
    %v1380 = vmul.f32 %v1316, %v1188
    %v1381 = vmul.f32 %v1317, %v1189
    %v1382 = vmul.f32 %v1318, %v1190
    %v1383 = vmul.f32 %v1319, %v1191
    %v1384 = vmul.f32 %v1320, %v1192
    %v1385 = vmul.f32 %v1321, %v1193
    %v1386 = vmul.f32 %v1322, %v1194
    %v1387 = vmul.f32 %v1323, %v1195
    %v1388 = vmul.f32 %v1324, %v1196
    %v1389 = vand.u32 2147483647, %v1197
    %v1390 = vand.u32 2147483647, %v1198
    %v1391 = vand.u32 2147483647, %v1199
    %v1392 = vand.u32 2147483647, %v1200
    %v1393 = vand.u32 2147483647, %v1201
    %v1394 = vand.u32 2147483647, %v1202
    %v1395 = vand.u32 2147483647, %v1203
    %v1396 = vand.u32 2147483647, %v1204
    %v1397 = vand.u32 2147483647, %v1205
    %v1398 = vand.u32 2147483647, %v1206
    %v1399 = vand.u32 2147483647, %v1207
    %v1400 = vand.u32 2147483647, %v1208
    %v1401 = vand.u32 2147483647, %v1209
    %v1402 = vand.u32 2147483647, %v1210
    %v1403 = vand.u32 2147483647, %v1211
    %v1404 = vand.u32 2147483647, %v1212
    %v1405 = vand.u32 2147483647, %v1213
    %v1406 = vand.u32 2147483647, %v1214
    %v1407 = vand.u32 2147483647, %v1215
    %v1408 = vand.u32 2147483647, %v1216
    %v1409 = vand.u32 2147483647, %v1217
    %v1410 = vand.u32 2147483647, %v1218
    %v1411 = vand.u32 2147483647, %v1219
    %v1412 = vand.u32 2147483647, %v1220
    %v1413 = vand.u32 2147483647, %v1221
    %v1414 = vand.u32 2147483647, %v1222
    %v1415 = vand.u32 2147483647, %v1223
    %v1416 = vand.u32 2147483647, %v1224
    %v1417 = vand.u32 2147483647, %v1225
    %v1418 = vand.u32 2147483647, %v1226
    %v1419 = vand.u32 2147483647, %v1227
    %v1420 = vand.u32 2147483647, %v1228
    %v1421 = vand.u32 2147483647, %v1229
    %v1422 = vand.u32 2147483647, %v1230
    %v1423 = vand.u32 2147483647, %v1231
    %v1424 = vand.u32 2147483647, %v1232
    %v1425 = vand.u32 2147483647, %v1233
    %v1426 = vand.u32 2147483647, %v1234
    %v1427 = vand.u32 2147483647, %v1235
    %v1428 = vand.u32 2147483647, %v1236
    %v1429 = vand.u32 2147483647, %v1237
    %v1430 = vand.u32 2147483647, %v1238
    %v1431 = vand.u32 2147483647, %v1239
    %v1432 = vand.u32 2147483647, %v1240
    %v1433 = vand.u32 2147483647, %v1241
    %v1434 = vand.u32 2147483647, %v1242
    %v1435 = vand.u32 2147483647, %v1243
    %v1436 = vand.u32 2147483647, %v1244
    %v1437 = vand.u32 2147483647, %v1245
    %v1438 = vand.u32 2147483647, %v1246
    %v1439 = vand.u32 2147483647, %v1247
    %v1440 = vand.u32 2147483647, %v1248
    %v1441 = vand.u32 2147483647, %v1249
    %v1442 = vand.u32 2147483647, %v1250
    %v1443 = vand.u32 2147483647, %v1251
    %v1444 = vand.u32 2147483647, %v1252
    %v1445 = vand.u32 2147483647, %v1253
    %v1446 = vand.u32 2147483647, %v1254
    %v1447 = vand.u32 2147483647, %v1255
    %v1448 = vand.u32 2147483647, %v1256
    %v1449 = vand.u32 2147483647, %v1257
    %v1450 = vand.u32 2147483647, %v1258
    %v1451 = vand.u32 2147483647, %v1259
    %v1452 = vand.u32 2147483647, %v1260
    %v1453 = vadd.f32 %v1389, 1e-12
    %v1454 = vadd.f32 %v1390, 1e-12
    %v1455 = vadd.f32 %v1391, 1e-12
    %v1456 = vadd.f32 %v1392, 1e-12
    %v1457 = vadd.f32 %v1393, 1e-12
    %v1458 = vadd.f32 %v1394, 1e-12
    %v1459 = vadd.f32 %v1395, 1e-12
    %v1460 = vadd.f32 %v1396, 1e-12
    %v1461 = vadd.f32 %v1397, 1e-12
    %v1462 = vadd.f32 %v1398, 1e-12
    %v1463 = vadd.f32 %v1399, 1e-12
    %v1464 = vadd.f32 %v1400, 1e-12
    %v1465 = vadd.f32 %v1401, 1e-12
    %v1466 = vadd.f32 %v1402, 1e-12
    %v1467 = vadd.f32 %v1403, 1e-12
    %v1468 = vadd.f32 %v1404, 1e-12
    %v1469 = vadd.f32 %v1405, 1e-12
    %v1470 = vadd.f32 %v1406, 1e-12
    %v1471 = vadd.f32 %v1407, 1e-12
    %v1472 = vadd.f32 %v1408, 1e-12
    %v1473 = vadd.f32 %v1409, 1e-12
    %v1474 = vadd.f32 %v1410, 1e-12
    %v1475 = vadd.f32 %v1411, 1e-12
    %v1476 = vadd.f32 %v1412, 1e-12
    %v1477 = vadd.f32 %v1413, 1e-12
    %v1478 = vadd.f32 %v1414, 1e-12
    %v1479 = vadd.f32 %v1415, 1e-12
    %v1480 = vadd.f32 %v1416, 1e-12
    %v1481 = vadd.f32 %v1417, 1e-12
    %v1482 = vadd.f32 %v1418, 1e-12
    %v1483 = vadd.f32 %v1419, 1e-12
    %v1484 = vadd.f32 %v1420, 1e-12
    %v1485 = vadd.f32 %v1421, 1e-12
    %v1486 = vadd.f32 %v1422, 1e-12
    %v1487 = vadd.f32 %v1423, 1e-12
    %v1488 = vadd.f32 %v1424, 1e-12
    %v1489 = vadd.f32 %v1425, 1e-12
    %v1490 = vadd.f32 %v1426, 1e-12
    %v1491 = vadd.f32 %v1427, 1e-12
    %v1492 = vadd.f32 %v1428, 1e-12
    %v1493 = vadd.f32 %v1429, 1e-12
    %v1494 = vadd.f32 %v1430, 1e-12
    %v1495 = vadd.f32 %v1431, 1e-12
    %v1496 = vadd.f32 %v1432, 1e-12
    %v1497 = vadd.f32 %v1433, 1e-12
    %v1498 = vadd.f32 %v1434, 1e-12
    %v1499 = vadd.f32 %v1435, 1e-12
    %v1500 = vadd.f32 %v1436, 1e-12
    %v1501 = vadd.f32 %v1437, 1e-12
    %v1502 = vadd.f32 %v1438, 1e-12
    %v1503 = vadd.f32 %v1439, 1e-12
    %v1504 = vadd.f32 %v1440, 1e-12
    %v1505 = vadd.f32 %v1441, 1e-12
    %v1506 = vadd.f32 %v1442, 1e-12
    %v1507 = vadd.f32 %v1443, 1e-12
    %v1508 = vadd.f32 %v1444, 1e-12
    %v1509 = vadd.f32 %v1445, 1e-12
    %v1510 = vadd.f32 %v1446, 1e-12
    %v1511 = vadd.f32 %v1447, 1e-12
    %v1512 = vadd.f32 %v1448, 1e-12
    %v1513 = vadd.f32 %v1449, 1e-12
    %v1514 = vadd.f32 %v1450, 1e-12
    %v1515 = vadd.f32 %v1451, 1e-12
    %v1516 = vadd.f32 %v1452, 1e-12
    %v1517 = vrcp.pop %v1453
    %v1518 = vrcp.pop %v1454
    %v1519 = vrcp.pop %v1455
    %v1520 = vrcp.pop %v1456
    %v1521 = vrcp.pop %v1457
    %v1522 = vrcp.pop %v1458
    %v1523 = vrcp.pop %v1459
    %v1524 = vrcp.pop %v1460
    %v1525 = vrcp.pop %v1461
    %v1526 = vrcp.pop %v1462
    %v1527 = vrcp.pop %v1463
    %v1528 = vrcp.pop %v1464
    %v1529 = vrcp.pop %v1465
    %v1530 = vrcp.pop %v1466
    %v1531 = vrcp.pop %v1467
    %v1532 = vrcp.pop %v1468
    %v1533 = vrcp.pop %v1469
    %v1534 = vrcp.pop %v1470
    %v1535 = vrcp.pop %v1471
    %v1536 = vrcp.pop %v1472
    %v1537 = vrcp.pop %v1473
    %v1538 = vrcp.pop %v1474
    %v1539 = vrcp.pop %v1475
    %v1540 = vrcp.pop %v1476
    %v1541 = vrcp.pop %v1477
    %v1542 = vrcp.pop %v1478
    %v1543 = vrcp.pop %v1479
    %v1544 = vrcp.pop %v1480
    %v1545 = vrcp.pop %v1481
    %v1546 = vrcp.pop %v1482
    %v1547 = vrcp.pop %v1483
    %v1548 = vrcp.pop %v1484
    %v1549 = vrcp.pop %v1485
    %v1550 = vrcp.pop %v1486
    %v1551 = vrcp.pop %v1487
    %v1552 = vrcp.pop %v1488
    %v1553 = vrcp.pop %v1489
    %v1554 = vrcp.pop %v1490
    %v1555 = vrcp.pop %v1491
    %v1556 = vrcp.pop %v1492
    %v1557 = vrcp.pop %v1493
    %v1558 = vrcp.pop %v1494
    %v1559 = vrcp.pop %v1495
    %v1560 = vrcp.pop %v1496
    %v1561 = vrcp.pop %v1497
    %v1562 = vrcp.pop %v1498
    %v1563 = vrcp.pop %v1499
    %v1564 = vrcp.pop %v1500
    %v1565 = vrcp.pop %v1501
    %v1566 = vrcp.pop %v1502
    %v1567 = vrcp.pop %v1503
    %v1568 = vrcp.pop %v1504
    %v1569 = vrcp.pop %v1505
    %v1570 = vrcp.pop %v1506
    %v1571 = vrcp.pop %v1507
    %v1572 = vrcp.pop %v1508
    %v1573 = vrcp.pop %v1509
    %v1574 = vrcp.pop %v1510
    %v1575 = vrcp.pop %v1511
    %v1576 = vrcp.pop %v1512
    %v1577 = vrcp.pop %v1513
    %v1578 = vrcp.pop %v1514
    %v1579 = vrcp.pop %v1515
    %v1580 = vrcp.pop %v1516
    %v1581 = vmul.f32 %v1325, %v1517
    %v1582 = vmul.f32 %v1326, %v1518
    %v1583 = vmul.f32 %v1327, %v1519
    %v1584 = vmul.f32 %v1328, %v1520
    %v1585 = vmul.f32 %v1329, %v1521
    %v1586 = vmul.f32 %v1330, %v1522
    %v1587 = vmul.f32 %v1331, %v1523
    %v1588 = vmul.f32 %v1332, %v1524
    %v1589 = vmul.f32 %v1333, %v1525
    %v1590 = vmul.f32 %v1334, %v1526
    %v1591 = vmul.f32 %v1335, %v1527
    %v1592 = vmul.f32 %v1336, %v1528
    %v1593 = vmul.f32 %v1337, %v1529
    %v1594 = vmul.f32 %v1338, %v1530
    %v1595 = vmul.f32 %v1339, %v1531
    %v1596 = vmul.f32 %v1340, %v1532
    %v1597 = vmul.f32 %v1341, %v1533
    %v1598 = vmul.f32 %v1342, %v1534
    %v1599 = vmul.f32 %v1343, %v1535
    %v1600 = vmul.f32 %v1344, %v1536
    %v1601 = vmul.f32 %v1345, %v1537
    %v1602 = vmul.f32 %v1346, %v1538
    %v1603 = vmul.f32 %v1347, %v1539
    %v1604 = vmul.f32 %v1348, %v1540
    %v1605 = vmul.f32 %v1349, %v1541
    %v1606 = vmul.f32 %v1350, %v1542
    %v1607 = vmul.f32 %v1351, %v1543
    %v1608 = vmul.f32 %v1352, %v1544
    %v1609 = vmul.f32 %v1353, %v1545
    %v1610 = vmul.f32 %v1354, %v1546
    %v1611 = vmul.f32 %v1355, %v1547
    %v1612 = vmul.f32 %v1356, %v1548
    %v1613 = vmul.f32 %v1357, %v1549
    %v1614 = vmul.f32 %v1358, %v1550
    %v1615 = vmul.f32 %v1359, %v1551
    %v1616 = vmul.f32 %v1360, %v1552
    %v1617 = vmul.f32 %v1361, %v1553
    %v1618 = vmul.f32 %v1362, %v1554
    %v1619 = vmul.f32 %v1363, %v1555
    %v1620 = vmul.f32 %v1364, %v1556
    %v1621 = vmul.f32 %v1365, %v1557
    %v1622 = vmul.f32 %v1366, %v1558
    %v1623 = vmul.f32 %v1367, %v1559
    %v1624 = vmul.f32 %v1368, %v1560
    %v1625 = vmul.f32 %v1369, %v1561
    %v1626 = vmul.f32 %v1370, %v1562
    %v1627 = vmul.f32 %v1371, %v1563
    %v1628 = vmul.f32 %v1372, %v1564
    %v1629 = vmul.f32 %v1373, %v1565
    %v1630 = vmul.f32 %v1374, %v1566
    %v1631 = vmul.f32 %v1375, %v1567
    %v1632 = vmul.f32 %v1376, %v1568
    %v1633 = vmul.f32 %v1377, %v1569
    %v1634 = vmul.f32 %v1378, %v1570
    %v1635 = vmul.f32 %v1379, %v1571
    %v1636 = vmul.f32 %v1380, %v1572
    %v1637 = vmul.f32 %v1381, %v1573
    %v1638 = vmul.f32 %v1382, %v1574
    %v1639 = vmul.f32 %v1383, %v1575
    %v1640 = vmul.f32 %v1384, %v1576
    %v1641 = vmul.f32 %v1385, %v1577
    %v1642 = vmul.f32 %v1386, %v1578
    %v1643 = vmul.f32 %v1387, %v1579
    %v1644 = vmul.f32 %v1388, %v1580
    %v1645 = vand.u32 2147483647, %v1581
    %v1646 = vand.u32 2147483647, %v1582
    %v1647 = vand.u32 2147483647, %v1583
    %v1648 = vand.u32 2147483647, %v1584
    %v1649 = vand.u32 2147483647, %v1585
    %v1650 = vand.u32 2147483647, %v1586
    %v1651 = vand.u32 2147483647, %v1587
    %v1652 = vand.u32 2147483647, %v1588
    %v1653 = vand.u32 2147483647, %v1589
    %v1654 = vand.u32 2147483647, %v1590
    %v1655 = vand.u32 2147483647, %v1591
    %v1656 = vand.u32 2147483647, %v1592
    %v1657 = vand.u32 2147483647, %v1593
    %v1658 = vand.u32 2147483647, %v1594
    %v1659 = vand.u32 2147483647, %v1595
    %v1660 = vand.u32 2147483647, %v1596
    %v1661 = vand.u32 2147483647, %v1597
    %v1662 = vand.u32 2147483647, %v1598
    %v1663 = vand.u32 2147483647, %v1599
    %v1664 = vand.u32 2147483647, %v1600
    %v1665 = vand.u32 2147483647, %v1601
    %v1666 = vand.u32 2147483647, %v1602
    %v1667 = vand.u32 2147483647, %v1603
    %v1668 = vand.u32 2147483647, %v1604
    %v1669 = vand.u32 2147483647, %v1605
    %v1670 = vand.u32 2147483647, %v1606
    %v1671 = vand.u32 2147483647, %v1607
    %v1672 = vand.u32 2147483647, %v1608
    %v1673 = vand.u32 2147483647, %v1609
    %v1674 = vand.u32 2147483647, %v1610
    %v1675 = vand.u32 2147483647, %v1611
    %v1676 = vand.u32 2147483647, %v1612
    %v1677 = vand.u32 2147483647, %v1613
    %v1678 = vand.u32 2147483647, %v1614
    %v1679 = vand.u32 2147483647, %v1615
    %v1680 = vand.u32 2147483647, %v1616
    %v1681 = vand.u32 2147483647, %v1617
    %v1682 = vand.u32 2147483647, %v1618
    %v1683 = vand.u32 2147483647, %v1619
    %v1684 = vand.u32 2147483647, %v1620
    %v1685 = vand.u32 2147483647, %v1621
    %v1686 = vand.u32 2147483647, %v1622
    %v1687 = vand.u32 2147483647, %v1623
    %v1688 = vand.u32 2147483647, %v1624
    %v1689 = vand.u32 2147483647, %v1625
    %v1690 = vand.u32 2147483647, %v1626
    %v1691 = vand.u32 2147483647, %v1627
    %v1692 = vand.u32 2147483647, %v1628
    %v1693 = vand.u32 2147483647, %v1629
    %v1694 = vand.u32 2147483647, %v1630
    %v1695 = vand.u32 2147483647, %v1631
    %v1696 = vand.u32 2147483647, %v1632
    %v1697 = vand.u32 2147483647, %v1633
    %v1698 = vand.u32 2147483647, %v1634
    %v1699 = vand.u32 2147483647, %v1635
    %v1700 = vand.u32 2147483647, %v1636
    %v1701 = vand.u32 2147483647, %v1637
    %v1702 = vand.u32 2147483647, %v1638
    %v1703 = vand.u32 2147483647, %v1639
    %v1704 = vand.u32 2147483647, %v1640
    %v1705 = vand.u32 2147483647, %v1641
    %v1706 = vand.u32 2147483647, %v1642
    %v1707 = vand.u32 2147483647, %v1643
    %v1708 = vand.u32 2147483647, %v1644
    %v1709 = vsel %vm492, %v1645, 0.0
    %1710 = vadd.xlane.f32.xlu0 %v1709
    %v1711 = vpop.xlane.xlu0 %1710
    %v1712 = vsel %vm492, %v1646, 0.0
    %1713 = vadd.xlane.f32.xlu0 %v1712
    %v1714 = vpop.xlane.xlu0 %1713
    %v1715 = vsel %vm492, %v1647, 0.0
    %1716 = vadd.xlane.f32.xlu0 %v1715
    %v1717 = vpop.xlane.xlu0 %1716
    %v1718 = vsel %vm492, %v1648, 0.0
    %1719 = vadd.xlane.f32.xlu0 %v1718
    %v1720 = vpop.xlane.xlu0 %1719
    %v1721 = vsel %vm492, %v1649, 0.0
    %1722 = vadd.xlane.f32.xlu0 %v1721
    %v1723 = vpop.xlane.xlu0 %1722
    %v1724 = vsel %vm492, %v1650, 0.0
    %1725 = vadd.xlane.f32.xlu0 %v1724
    %v1726 = vpop.xlane.xlu0 %1725
    %v1727 = vsel %vm492, %v1651, 0.0
    %1728 = vadd.xlane.f32.xlu0 %v1727
    %v1729 = vpop.xlane.xlu0 %1728
    %v1730 = vsel %vm492, %v1652, 0.0
    %1731 = vadd.xlane.f32.xlu0 %v1730
    %v1732 = vpop.xlane.xlu0 %1731
    %v1733 = vsel %vm492, %v1653, 0.0
    %1734 = vadd.xlane.f32.xlu0 %v1733
    %v1735 = vpop.xlane.xlu0 %1734
    %v1736 = vsel %vm492, %v1654, 0.0
    %1737 = vadd.xlane.f32.xlu0 %v1736
    %v1738 = vpop.xlane.xlu0 %1737
    %v1739 = vsel %vm492, %v1655, 0.0
    %1740 = vadd.xlane.f32.xlu0 %v1739
    %v1741 = vpop.xlane.xlu0 %1740
    %v1742 = vsel %vm492, %v1656, 0.0
    %1743 = vadd.xlane.f32.xlu0 %v1742
    %v1744 = vpop.xlane.xlu0 %1743
    %v1745 = vsel %vm492, %v1657, 0.0
    %1746 = vadd.xlane.f32.xlu0 %v1745
    %v1747 = vpop.xlane.xlu0 %1746
    %v1748 = vsel %vm492, %v1658, 0.0
    %1749 = vadd.xlane.f32.xlu0 %v1748
    %v1750 = vpop.xlane.xlu0 %1749
    %v1751 = vsel %vm492, %v1659, 0.0
    %1752 = vadd.xlane.f32.xlu0 %v1751
    %v1753 = vpop.xlane.xlu0 %1752
    %v1754 = vsel %vm492, %v1660, 0.0
    %1755 = vadd.xlane.f32.xlu0 %v1754
    %v1756 = vpop.xlane.xlu0 %1755
    %v1757 = vsel %vm492, %v1661, 0.0
    %1758 = vadd.xlane.f32.xlu0 %v1757
    %v1759 = vpop.xlane.xlu0 %1758
    %v1760 = vsel %vm492, %v1662, 0.0
    %1761 = vadd.xlane.f32.xlu0 %v1760
    %v1762 = vpop.xlane.xlu0 %1761
    %v1763 = vsel %vm492, %v1663, 0.0
    %1764 = vadd.xlane.f32.xlu0 %v1763
    %v1765 = vpop.xlane.xlu0 %1764
    %v1766 = vsel %vm492, %v1664, 0.0
    %1767 = vadd.xlane.f32.xlu0 %v1766
    %v1768 = vpop.xlane.xlu0 %1767
    %v1769 = vsel %vm492, %v1665, 0.0
    %1770 = vadd.xlane.f32.xlu0 %v1769
    %v1771 = vpop.xlane.xlu0 %1770
    %v1772 = vsel %vm492, %v1666, 0.0
    %1773 = vadd.xlane.f32.xlu0 %v1772
    %v1774 = vpop.xlane.xlu0 %1773
    %v1775 = vsel %vm492, %v1667, 0.0
    %1776 = vadd.xlane.f32.xlu0 %v1775
    %v1777 = vpop.xlane.xlu0 %1776
    %v1778 = vsel %vm492, %v1668, 0.0
    %1779 = vadd.xlane.f32.xlu0 %v1778
    %v1780 = vpop.xlane.xlu0 %1779
    %v1781 = vsel %vm492, %v1669, 0.0
    %1782 = vadd.xlane.f32.xlu0 %v1781
    %v1783 = vpop.xlane.xlu0 %1782
    %v1784 = vsel %vm492, %v1670, 0.0
    %1785 = vadd.xlane.f32.xlu0 %v1784
    %v1786 = vpop.xlane.xlu0 %1785
    %v1787 = vsel %vm492, %v1671, 0.0
    %1788 = vadd.xlane.f32.xlu0 %v1787
    %v1789 = vpop.xlane.xlu0 %1788
    %v1790 = vsel %vm492, %v1672, 0.0
    %1791 = vadd.xlane.f32.xlu0 %v1790
    %v1792 = vpop.xlane.xlu0 %1791
    %v1793 = vsel %vm492, %v1673, 0.0
    %1794 = vadd.xlane.f32.xlu0 %v1793
    %v1795 = vpop.xlane.xlu0 %1794
    %v1796 = vsel %vm492, %v1674, 0.0
    %1797 = vadd.xlane.f32.xlu0 %v1796
    %v1798 = vpop.xlane.xlu0 %1797
    %v1799 = vsel %vm492, %v1675, 0.0
    %1800 = vadd.xlane.f32.xlu0 %v1799
    %v1801 = vpop.xlane.xlu0 %1800
    %v1802 = vsel %vm492, %v1676, 0.0
    %1803 = vadd.xlane.f32.xlu0 %v1802
    %v1804 = vpop.xlane.xlu0 %1803
    %v1805 = vsel %vm492, %v1677, 0.0
    %1806 = vadd.xlane.f32.xlu0 %v1805
    %v1807 = vpop.xlane.xlu0 %1806
    %v1808 = vsel %vm492, %v1678, 0.0
    %1809 = vadd.xlane.f32.xlu0 %v1808
    %v1810 = vpop.xlane.xlu0 %1809
    %v1811 = vsel %vm492, %v1679, 0.0
    %1812 = vadd.xlane.f32.xlu0 %v1811
    %v1813 = vpop.xlane.xlu0 %1812
    %v1814 = vsel %vm492, %v1680, 0.0
    %1815 = vadd.xlane.f32.xlu0 %v1814
    %v1816 = vpop.xlane.xlu0 %1815
    %v1817 = vsel %vm492, %v1681, 0.0
    %1818 = vadd.xlane.f32.xlu0 %v1817
    %v1819 = vpop.xlane.xlu0 %1818
    %v1820 = vsel %vm492, %v1682, 0.0
    %1821 = vadd.xlane.f32.xlu0 %v1820
    %v1822 = vpop.xlane.xlu0 %1821
    %v1823 = vsel %vm492, %v1683, 0.0
    %1824 = vadd.xlane.f32.xlu0 %v1823
    %v1825 = vpop.xlane.xlu0 %1824
    %v1826 = vsel %vm492, %v1684, 0.0
    %1827 = vadd.xlane.f32.xlu0 %v1826
    %v1828 = vpop.xlane.xlu0 %1827
    %v1829 = vsel %vm492, %v1685, 0.0
    %1830 = vadd.xlane.f32.xlu0 %v1829
    %v1831 = vpop.xlane.xlu0 %1830
    %v1832 = vsel %vm492, %v1686, 0.0
    %1833 = vadd.xlane.f32.xlu0 %v1832
    %v1834 = vpop.xlane.xlu0 %1833
    %v1835 = vsel %vm492, %v1687, 0.0
    %1836 = vadd.xlane.f32.xlu0 %v1835
    %v1837 = vpop.xlane.xlu0 %1836
    %v1838 = vsel %vm492, %v1688, 0.0
    %1839 = vadd.xlane.f32.xlu0 %v1838
    %v1840 = vpop.xlane.xlu0 %1839
    %v1841 = vsel %vm492, %v1689, 0.0
    %1842 = vadd.xlane.f32.xlu0 %v1841
    %v1843 = vpop.xlane.xlu0 %1842
    %v1844 = vsel %vm492, %v1690, 0.0
    %1845 = vadd.xlane.f32.xlu0 %v1844
    %v1846 = vpop.xlane.xlu0 %1845
    %v1847 = vsel %vm492, %v1691, 0.0
    %1848 = vadd.xlane.f32.xlu0 %v1847
    %v1849 = vpop.xlane.xlu0 %1848
    %v1850 = vsel %vm492, %v1692, 0.0
    %1851 = vadd.xlane.f32.xlu0 %v1850
    %v1852 = vpop.xlane.xlu0 %1851
    %v1853 = vsel %vm492, %v1693, 0.0
    %1854 = vadd.xlane.f32.xlu0 %v1853
    %v1855 = vpop.xlane.xlu0 %1854
    %v1856 = vsel %vm492, %v1694, 0.0
    %1857 = vadd.xlane.f32.xlu0 %v1856
    %v1858 = vpop.xlane.xlu0 %1857
    %v1859 = vsel %vm492, %v1695, 0.0
    %1860 = vadd.xlane.f32.xlu0 %v1859
    %v1861 = vpop.xlane.xlu0 %1860
    %v1862 = vsel %vm492, %v1696, 0.0
    %1863 = vadd.xlane.f32.xlu0 %v1862
    %v1864 = vpop.xlane.xlu0 %1863
    %v1865 = vsel %vm492, %v1697, 0.0
    %1866 = vadd.xlane.f32.xlu0 %v1865
    %v1867 = vpop.xlane.xlu0 %1866
    %v1868 = vsel %vm492, %v1698, 0.0
    %1869 = vadd.xlane.f32.xlu0 %v1868
    %v1870 = vpop.xlane.xlu0 %1869
    %v1871 = vsel %vm492, %v1699, 0.0
    %1872 = vadd.xlane.f32.xlu0 %v1871
    %v1873 = vpop.xlane.xlu0 %1872
    %v1874 = vsel %vm492, %v1700, 0.0
    %1875 = vadd.xlane.f32.xlu0 %v1874
    %v1876 = vpop.xlane.xlu0 %1875
    %v1877 = vsel %vm492, %v1701, 0.0
    %1878 = vadd.xlane.f32.xlu0 %v1877
    %v1879 = vpop.xlane.xlu0 %1878
    %v1880 = vsel %vm492, %v1702, 0.0
    %1881 = vadd.xlane.f32.xlu0 %v1880
    %v1882 = vpop.xlane.xlu0 %1881
    %v1883 = vsel %vm492, %v1703, 0.0
    %1884 = vadd.xlane.f32.xlu0 %v1883
    %v1885 = vpop.xlane.xlu0 %1884
    %v1886 = vsel %vm492, %v1704, 0.0
    %1887 = vadd.xlane.f32.xlu0 %v1886
    %v1888 = vpop.xlane.xlu0 %1887
    %v1889 = vsel %vm492, %v1705, 0.0
    %1890 = vadd.xlane.f32.xlu0 %v1889
    %v1891 = vpop.xlane.xlu0 %1890
    %v1892 = vsel %vm492, %v1706, 0.0
    %1893 = vadd.xlane.f32.xlu0 %v1892
    %v1894 = vpop.xlane.xlu0 %1893
    %v1895 = vsel %vm492, %v1707, 0.0
    %1896 = vadd.xlane.f32.xlu0 %v1895
    %v1897 = vpop.xlane.xlu0 %1896
    %v1898 = vsel %vm492, %v1708, 0.0
    %1899 = vadd.xlane.f32.xlu0 %v1898
    %v1900 = vpop.xlane.xlu0 %1899
    %v1901 = vmax.f32 %v1711, 1e-12
    %v1902 = vmax.f32 %v1714, 1e-12
    %v1903 = vmax.f32 %v1717, 1e-12
    %v1904 = vmax.f32 %v1720, 1e-12
    %v1905 = vmax.f32 %v1723, 1e-12
    %v1906 = vmax.f32 %v1726, 1e-12
    %v1907 = vmax.f32 %v1729, 1e-12
    %v1908 = vmax.f32 %v1732, 1e-12
    %v1909 = vmax.f32 %v1735, 1e-12
    %v1910 = vmax.f32 %v1738, 1e-12
    %v1911 = vmax.f32 %v1741, 1e-12
    %v1912 = vmax.f32 %v1744, 1e-12
    %v1913 = vmax.f32 %v1747, 1e-12
    %v1914 = vmax.f32 %v1750, 1e-12
    %v1915 = vmax.f32 %v1753, 1e-12
    %v1916 = vmax.f32 %v1756, 1e-12
    %v1917 = vmax.f32 %v1759, 1e-12
    %v1918 = vmax.f32 %v1762, 1e-12
    %v1919 = vmax.f32 %v1765, 1e-12
    %v1920 = vmax.f32 %v1768, 1e-12
    %v1921 = vmax.f32 %v1771, 1e-12
    %v1922 = vmax.f32 %v1774, 1e-12
    %v1923 = vmax.f32 %v1777, 1e-12
    %v1924 = vmax.f32 %v1780, 1e-12
    %v1925 = vmax.f32 %v1783, 1e-12
    %v1926 = vmax.f32 %v1786, 1e-12
    %v1927 = vmax.f32 %v1789, 1e-12
    %v1928 = vmax.f32 %v1792, 1e-12
    %v1929 = vmax.f32 %v1795, 1e-12
    %v1930 = vmax.f32 %v1798, 1e-12
    %v1931 = vmax.f32 %v1801, 1e-12
    %v1932 = vmax.f32 %v1804, 1e-12
    %v1933 = vmax.f32 %v1807, 1e-12
    %v1934 = vmax.f32 %v1810, 1e-12
    %v1935 = vmax.f32 %v1813, 1e-12
    %v1936 = vmax.f32 %v1816, 1e-12
    %v1937 = vmax.f32 %v1819, 1e-12
    %v1938 = vmax.f32 %v1822, 1e-12
    %v1939 = vmax.f32 %v1825, 1e-12
    %v1940 = vmax.f32 %v1828, 1e-12
    %v1941 = vmax.f32 %v1831, 1e-12
    %v1942 = vmax.f32 %v1834, 1e-12
    %v1943 = vmax.f32 %v1837, 1e-12
    %v1944 = vmax.f32 %v1840, 1e-12
    %v1945 = vmax.f32 %v1843, 1e-12
    %v1946 = vmax.f32 %v1846, 1e-12
    %v1947 = vmax.f32 %v1849, 1e-12
    %v1948 = vmax.f32 %v1852, 1e-12
    %v1949 = vmax.f32 %v1855, 1e-12
    %v1950 = vmax.f32 %v1858, 1e-12
    %v1951 = vmax.f32 %v1861, 1e-12
    %v1952 = vmax.f32 %v1864, 1e-12
    %v1953 = vmax.f32 %v1867, 1e-12
    %v1954 = vmax.f32 %v1870, 1e-12
    %v1955 = vmax.f32 %v1873, 1e-12
    %v1956 = vmax.f32 %v1876, 1e-12
    %v1957 = vmax.f32 %v1879, 1e-12
    %v1958 = vmax.f32 %v1882, 1e-12
    %v1959 = vmax.f32 %v1885, 1e-12
    %v1960 = vmax.f32 %v1888, 1e-12
    %v1961 = vmax.f32 %v1891, 1e-12
    %v1962 = vmax.f32 %v1894, 1e-12
    %v1963 = vmax.f32 %v1897, 1e-12
    %v1964 = vmax.f32 %v1900, 1e-12
    %v1965 = vrcp.pop %v1901
    %v1966 = vrcp.pop %v1902
    %v1967 = vrcp.pop %v1903
    %v1968 = vrcp.pop %v1904
    %v1969 = vrcp.pop %v1905
    %v1970 = vrcp.pop %v1906
    %v1971 = vrcp.pop %v1907
    %v1972 = vrcp.pop %v1908
    %v1973 = vrcp.pop %v1909
    %v1974 = vrcp.pop %v1910
    %v1975 = vrcp.pop %v1911
    %v1976 = vrcp.pop %v1912
    %v1977 = vrcp.pop %v1913
    %v1978 = vrcp.pop %v1914
    %v1979 = vrcp.pop %v1915
    %v1980 = vrcp.pop %v1916
    %v1981 = vrcp.pop %v1917
    %v1982 = vrcp.pop %v1918
    %v1983 = vrcp.pop %v1919
    %v1984 = vrcp.pop %v1920
    %v1985 = vrcp.pop %v1921
    %v1986 = vrcp.pop %v1922
    %v1987 = vrcp.pop %v1923
    %v1988 = vrcp.pop %v1924
    %v1989 = vrcp.pop %v1925
    %v1990 = vrcp.pop %v1926
    %v1991 = vrcp.pop %v1927
    %v1992 = vrcp.pop %v1928
    %v1993 = vrcp.pop %v1929
    %v1994 = vrcp.pop %v1930
    %v1995 = vrcp.pop %v1931
    %v1996 = vrcp.pop %v1932
    %v1997 = vrcp.pop %v1933
    %v1998 = vrcp.pop %v1934
    %v1999 = vrcp.pop %v1935
    %v2000 = vrcp.pop %v1936
    %v2001 = vrcp.pop %v1937
    %v2002 = vrcp.pop %v1938
    %v2003 = vrcp.pop %v1939
    %v2004 = vrcp.pop %v1940
    %v2005 = vrcp.pop %v1941
    %v2006 = vrcp.pop %v1942
    %v2007 = vrcp.pop %v1943
    %v2008 = vrcp.pop %v1944
    %v2009 = vrcp.pop %v1945
    %v2010 = vrcp.pop %v1946
    %v2011 = vrcp.pop %v1947
    %v2012 = vrcp.pop %v1948
    %v2013 = vrcp.pop %v1949
    %v2014 = vrcp.pop %v1950
    %v2015 = vrcp.pop %v1951
    %v2016 = vrcp.pop %v1952
    %v2017 = vrcp.pop %v1953
    %v2018 = vrcp.pop %v1954
    %v2019 = vrcp.pop %v1955
    %v2020 = vrcp.pop %v1956
    %v2021 = vrcp.pop %v1957
    %v2022 = vrcp.pop %v1958
    %v2023 = vrcp.pop %v1959
    %v2024 = vrcp.pop %v1960
    %v2025 = vrcp.pop %v1961
    %v2026 = vrcp.pop %v1962
    %v2027 = vrcp.pop %v1963
    %v2028 = vrcp.pop %v1964
    %v2029 = vmul.f32 %v1581, %v1965
    %v2030 = vmul.f32 %v1582, %v1966
    %v2031 = vmul.f32 %v1583, %v1967
    %v2032 = vmul.f32 %v1584, %v1968
    %v2033 = vmul.f32 %v1585, %v1969
    %v2034 = vmul.f32 %v1586, %v1970
    %v2035 = vmul.f32 %v1587, %v1971
    %v2036 = vmul.f32 %v1588, %v1972
    %v2037 = vmul.f32 %v1589, %v1973
    %v2038 = vmul.f32 %v1590, %v1974
    %v2039 = vmul.f32 %v1591, %v1975
    %v2040 = vmul.f32 %v1592, %v1976
    %v2041 = vmul.f32 %v1593, %v1977
    %v2042 = vmul.f32 %v1594, %v1978
    %v2043 = vmul.f32 %v1595, %v1979
    %v2044 = vmul.f32 %v1596, %v1980
    %v2045 = vmul.f32 %v1597, %v1981
    %v2046 = vmul.f32 %v1598, %v1982
    %v2047 = vmul.f32 %v1599, %v1983
    %v2048 = vmul.f32 %v1600, %v1984
    %v2049 = vmul.f32 %v1601, %v1985
    %v2050 = vmul.f32 %v1602, %v1986
    %v2051 = vmul.f32 %v1603, %v1987
    %v2052 = vmul.f32 %v1604, %v1988
    %v2053 = vmul.f32 %v1605, %v1989
    %v2054 = vmul.f32 %v1606, %v1990
    %v2055 = vmul.f32 %v1607, %v1991
    %v2056 = vmul.f32 %v1608, %v1992
    %v2057 = vmul.f32 %v1609, %v1993
    %v2058 = vmul.f32 %v1610, %v1994
    %v2059 = vmul.f32 %v1611, %v1995
    %v2060 = vmul.f32 %v1612, %v1996
    %v2061 = vmul.f32 %v1613, %v1997
    %v2062 = vmul.f32 %v1614, %v1998
    %v2063 = vmul.f32 %v1615, %v1999
    %v2064 = vmul.f32 %v1616, %v2000
    %v2065 = vmul.f32 %v1617, %v2001
    %v2066 = vmul.f32 %v1618, %v2002
    %v2067 = vmul.f32 %v1619, %v2003
    %v2068 = vmul.f32 %v1620, %v2004
    %v2069 = vmul.f32 %v1621, %v2005
    %v2070 = vmul.f32 %v1622, %v2006
    %v2071 = vmul.f32 %v1623, %v2007
    %v2072 = vmul.f32 %v1624, %v2008
    %v2073 = vmul.f32 %v1625, %v2009
    %v2074 = vmul.f32 %v1626, %v2010
    %v2075 = vmul.f32 %v1627, %v2011
    %v2076 = vmul.f32 %v1628, %v2012
    %v2077 = vmul.f32 %v1629, %v2013
    %v2078 = vmul.f32 %v1630, %v2014
    %v2079 = vmul.f32 %v1631, %v2015
    %v2080 = vmul.f32 %v1632, %v2016
    %v2081 = vmul.f32 %v1633, %v2017
    %v2082 = vmul.f32 %v1634, %v2018
    %v2083 = vmul.f32 %v1635, %v2019
    %v2084 = vmul.f32 %v1636, %v2020
    %v2085 = vmul.f32 %v1637, %v2021
    %v2086 = vmul.f32 %v1638, %v2022
    %v2087 = vmul.f32 %v1639, %v2023
    %v2088 = vmul.f32 %v1640, %v2024
    %v2089 = vmul.f32 %v1641, %v2025
    %v2090 = vmul.f32 %v1642, %v2026
    %v2091 = vmul.f32 %v1643, %v2027
    %v2092 = vmul.f32 %v1644, %v2028
    %v2093 = vpack.c.bf16 %v2030, %v2029
    %v2094 = vpack.c.bf16 %v2032, %v2031
    %v2095 = vpack.c.bf16 %v2034, %v2033
    %v2096 = vpack.c.bf16 %v2036, %v2035
    %v2097 = vpack.c.bf16 %v2038, %v2037
    %v2098 = vpack.c.bf16 %v2040, %v2039
    %v2099 = vpack.c.bf16 %v2042, %v2041
    %v2100 = vpack.c.bf16 %v2044, %v2043
    %v2101 = vpack.c.bf16 %v2046, %v2045
    %v2102 = vpack.c.bf16 %v2048, %v2047
    %v2103 = vpack.c.bf16 %v2050, %v2049
    %v2104 = vpack.c.bf16 %v2052, %v2051
    %v2105 = vpack.c.bf16 %v2054, %v2053
    %v2106 = vpack.c.bf16 %v2056, %v2055
    %v2107 = vpack.c.bf16 %v2058, %v2057
    %v2108 = vpack.c.bf16 %v2060, %v2059
    %v2109 = vpack.c.bf16 %v2062, %v2061
    %v2110 = vpack.c.bf16 %v2064, %v2063
    %v2111 = vpack.c.bf16 %v2066, %v2065
    %v2112 = vpack.c.bf16 %v2068, %v2067
    %v2113 = vpack.c.bf16 %v2070, %v2069
    %v2114 = vpack.c.bf16 %v2072, %v2071
    %v2115 = vpack.c.bf16 %v2074, %v2073
    %v2116 = vpack.c.bf16 %v2076, %v2075
    %v2117 = vpack.c.bf16 %v2078, %v2077
    %v2118 = vpack.c.bf16 %v2080, %v2079
    %v2119 = vpack.c.bf16 %v2082, %v2081
    %v2120 = vpack.c.bf16 %v2084, %v2083
    %v2121 = vpack.c.bf16 %v2086, %v2085
    %v2122 = vpack.c.bf16 %v2088, %v2087
    %v2123 = vpack.c.bf16 %v2090, %v2089
    %v2124 = vpack.c.bf16 %v2092, %v2091
    %v2126 = vsel %vm492, %v2093, 0
    %v2129 = vsel %vm492, %v2094, 0
    %v2132 = vsel %vm492, %v2095, 0
    %v2135 = vsel %vm492, %v2096, 0
    %v2138 = vsel %vm492, %v2097, 0
    %v2141 = vsel %vm492, %v2098, 0
    %v2144 = vsel %vm492, %v2099, 0
    %v2147 = vsel %vm492, %v2100, 0
    %v2150 = vsel %vm492, %v2101, 0
    %v2153 = vsel %vm492, %v2102, 0
    %v2156 = vsel %vm492, %v2103, 0
    %v2159 = vsel %vm492, %v2104, 0
    %v2162 = vsel %vm492, %v2105, 0
    %v2165 = vsel %vm492, %v2106, 0
    %v2168 = vsel %vm492, %v2107, 0
    %v2171 = vsel %vm492, %v2108, 0
    %v2174 = vsel %vm492, %v2109, 0
    %v2177 = vsel %vm492, %v2110, 0
    %v2180 = vsel %vm492, %v2111, 0
    %v2183 = vsel %vm492, %v2112, 0
    %v2186 = vsel %vm492, %v2113, 0
    %v2189 = vsel %vm492, %v2114, 0
    %v2192 = vsel %vm492, %v2115, 0
    %v2195 = vsel %vm492, %v2116, 0
    %v2198 = vsel %vm492, %v2117, 0
    %v2201 = vsel %vm492, %v2118, 0
    %v2204 = vsel %vm492, %v2119, 0
    %v2207 = vsel %vm492, %v2120, 0
    %v2210 = vsel %vm492, %v2121, 0
    %v2213 = vsel %vm492, %v2122, 0
    %v2216 = vsel %vm492, %v2123, 0
    %v2219 = vsel %vm492, %v2124, 0
    %2221 = vmatpush.bf16.msra.mxu0 0
    %2222 = vmatpush.bf16.msra.mxu0 0
    %2223 = vmatpush.bf16.msra.mxu0 0
    %2224 = vmatpush.bf16.msra.mxu0 0
    %2225 = vmatpush.bf16.msra.mxu0 0
    %2226 = vmatpush.bf16.msra.mxu0 0
    %2227 = vmatpush.bf16.msra.mxu0 0
    %2228 = vmatpush.bf16.msra.mxu0 %v130
    %2229 = vmatmul.bf16.gmra.mxu0 %v2126
    %v2230 = vpop.f32.mrf.mxu0
    %v2231 = vadd.f32 0.0, %v2230
    %v2232 = vpop.f32.mrf.mxu0
    %v2233 = vadd.f32 0.0, %v2232
    %2234 = vmatmul.bf16.gmra.mxu0 %v2129
    %v2235 = vpop.f32.mrf.mxu0
    %v2236 = vadd.f32 0.0, %v2235
    %v2237 = vpop.f32.mrf.mxu0
    %v2238 = vadd.f32 0.0, %v2237
    %2239 = vmatmul.bf16.gmra.mxu0 %v2132
    %v2240 = vpop.f32.mrf.mxu0
    %v2241 = vadd.f32 0.0, %v2240
    %v2242 = vpop.f32.mrf.mxu0
    %v2243 = vadd.f32 0.0, %v2242
    %2244 = vmatmul.bf16.gmra.mxu0 %v2135
    %v2245 = vpop.f32.mrf.mxu0
    %v2246 = vadd.f32 0.0, %v2245
    %v2247 = vpop.f32.mrf.mxu0
    %v2248 = vadd.f32 0.0, %v2247
    %2249 = vmatmul.bf16.gmra.mxu0 %v2138
    %v2250 = vpop.f32.mrf.mxu0
    %v2251 = vadd.f32 0.0, %v2250
    %v2252 = vpop.f32.mrf.mxu0
    %v2253 = vadd.f32 0.0, %v2252
    %2254 = vmatmul.bf16.gmra.mxu0 %v2141
    %v2255 = vpop.f32.mrf.mxu0
    %v2256 = vadd.f32 0.0, %v2255
    %v2257 = vpop.f32.mrf.mxu0
    %v2258 = vadd.f32 0.0, %v2257
    %2259 = vmatmul.bf16.gmra.mxu0 %v2144
    %v2260 = vpop.f32.mrf.mxu0
    %v2261 = vadd.f32 0.0, %v2260
    %v2262 = vpop.f32.mrf.mxu0
    %v2263 = vadd.f32 0.0, %v2262
    %2264 = vmatmul.bf16.gmra.mxu0 %v2147
    %v2265 = vpop.f32.mrf.mxu0
    %v2266 = vadd.f32 0.0, %v2265
    %v2267 = vpop.f32.mrf.mxu0
    %v2268 = vadd.f32 0.0, %v2267
    %2269 = vmatmul.bf16.gmra.mxu0 %v2150
    %v2270 = vpop.f32.mrf.mxu0
    %v2271 = vadd.f32 0.0, %v2270
    %v2272 = vpop.f32.mrf.mxu0
    %v2273 = vadd.f32 0.0, %v2272
    %2274 = vmatmul.bf16.gmra.mxu0 %v2153
    %v2275 = vpop.f32.mrf.mxu0
    %v2276 = vadd.f32 0.0, %v2275
    %v2277 = vpop.f32.mrf.mxu0
    %v2278 = vadd.f32 0.0, %v2277
    %2279 = vmatmul.bf16.gmra.mxu0 %v2156
    %v2280 = vpop.f32.mrf.mxu0
    %v2281 = vadd.f32 0.0, %v2280
    %v2282 = vpop.f32.mrf.mxu0
    %v2283 = vadd.f32 0.0, %v2282
    %2284 = vmatmul.bf16.gmra.mxu0 %v2159
    %v2285 = vpop.f32.mrf.mxu0
    %v2286 = vadd.f32 0.0, %v2285
    %v2287 = vpop.f32.mrf.mxu0
    %v2288 = vadd.f32 0.0, %v2287
    %2289 = vmatmul.bf16.gmra.mxu0 %v2162
    %v2290 = vpop.f32.mrf.mxu0
    %v2291 = vadd.f32 0.0, %v2290
    %v2292 = vpop.f32.mrf.mxu0
    %v2293 = vadd.f32 0.0, %v2292
    %2294 = vmatmul.bf16.gmra.mxu0 %v2165
    %v2295 = vpop.f32.mrf.mxu0
    %v2296 = vadd.f32 0.0, %v2295
    %v2297 = vpop.f32.mrf.mxu0
    %v2298 = vadd.f32 0.0, %v2297
    %2299 = vmatmul.bf16.gmra.mxu0 %v2168
    %v2300 = vpop.f32.mrf.mxu0
    %v2301 = vadd.f32 0.0, %v2300
    %v2302 = vpop.f32.mrf.mxu0
    %v2303 = vadd.f32 0.0, %v2302
    %2304 = vmatmul.bf16.gmra.mxu0 %v2171
    %v2305 = vpop.f32.mrf.mxu0
    %v2306 = vadd.f32 0.0, %v2305
    %v2307 = vpop.f32.mrf.mxu0
    %v2308 = vadd.f32 0.0, %v2307
    %2309 = vmatmul.bf16.gmra.mxu0 %v2174
    %v2310 = vpop.f32.mrf.mxu0
    %v2311 = vadd.f32 0.0, %v2310
    %v2312 = vpop.f32.mrf.mxu0
    %v2313 = vadd.f32 0.0, %v2312
    %2314 = vmatmul.bf16.gmra.mxu0 %v2177
    %v2315 = vpop.f32.mrf.mxu0
    %v2316 = vadd.f32 0.0, %v2315
    %v2317 = vpop.f32.mrf.mxu0
    %v2318 = vadd.f32 0.0, %v2317
    %2319 = vmatmul.bf16.gmra.mxu0 %v2180
    %v2320 = vpop.f32.mrf.mxu0
    %v2321 = vadd.f32 0.0, %v2320
    %v2322 = vpop.f32.mrf.mxu0
    %v2323 = vadd.f32 0.0, %v2322
    %2324 = vmatmul.bf16.gmra.mxu0 %v2183
    %v2325 = vpop.f32.mrf.mxu0
    %v2326 = vadd.f32 0.0, %v2325
    %v2327 = vpop.f32.mrf.mxu0
    %v2328 = vadd.f32 0.0, %v2327
    %2329 = vmatmul.bf16.gmra.mxu0 %v2186
    %v2330 = vpop.f32.mrf.mxu0
    %v2331 = vadd.f32 0.0, %v2330
    %v2332 = vpop.f32.mrf.mxu0
    %v2333 = vadd.f32 0.0, %v2332
    %2334 = vmatmul.bf16.gmra.mxu0 %v2189
    %v2335 = vpop.f32.mrf.mxu0
    %v2336 = vadd.f32 0.0, %v2335
    %v2337 = vpop.f32.mrf.mxu0
    %v2338 = vadd.f32 0.0, %v2337
    %2339 = vmatmul.bf16.gmra.mxu0 %v2192
    %v2340 = vpop.f32.mrf.mxu0
    %v2341 = vadd.f32 0.0, %v2340
    %v2342 = vpop.f32.mrf.mxu0
    %v2343 = vadd.f32 0.0, %v2342
    %2344 = vmatmul.bf16.gmra.mxu0 %v2195
    %v2345 = vpop.f32.mrf.mxu0
    %v2346 = vadd.f32 0.0, %v2345
    %v2347 = vpop.f32.mrf.mxu0
    %v2348 = vadd.f32 0.0, %v2347
    %2349 = vmatmul.bf16.gmra.mxu0 %v2198
    %v2350 = vpop.f32.mrf.mxu0
    %v2351 = vadd.f32 0.0, %v2350
    %v2352 = vpop.f32.mrf.mxu0
    %v2353 = vadd.f32 0.0, %v2352
    %2354 = vmatmul.bf16.gmra.mxu0 %v2201
    %v2355 = vpop.f32.mrf.mxu0
    %v2356 = vadd.f32 0.0, %v2355
    %v2357 = vpop.f32.mrf.mxu0
    %v2358 = vadd.f32 0.0, %v2357
    %2359 = vmatmul.bf16.gmra.mxu0 %v2204
    %v2360 = vpop.f32.mrf.mxu0
    %v2361 = vadd.f32 0.0, %v2360
    %v2362 = vpop.f32.mrf.mxu0
    %v2363 = vadd.f32 0.0, %v2362
    %2364 = vmatmul.bf16.gmra.mxu0 %v2207
    %v2365 = vpop.f32.mrf.mxu0
    %v2366 = vadd.f32 0.0, %v2365
    %v2367 = vpop.f32.mrf.mxu0
    %v2368 = vadd.f32 0.0, %v2367
    %2369 = vmatmul.bf16.gmra.mxu0 %v2210
    %v2370 = vpop.f32.mrf.mxu0
    %v2371 = vadd.f32 0.0, %v2370
    %v2372 = vpop.f32.mrf.mxu0
    %v2373 = vadd.f32 0.0, %v2372
    %2374 = vmatmul.bf16.gmra.mxu0 %v2213
    %v2375 = vpop.f32.mrf.mxu0
    %v2376 = vadd.f32 0.0, %v2375
    %v2377 = vpop.f32.mrf.mxu0
    %v2378 = vadd.f32 0.0, %v2377
    %2379 = vmatmul.bf16.gmra.mxu0 %v2216
    %v2380 = vpop.f32.mrf.mxu0
    %v2381 = vadd.f32 0.0, %v2380
    %v2382 = vpop.f32.mrf.mxu0
    %v2383 = vadd.f32 0.0, %v2382
    %2384 = vmatmul.bf16.gmra.mxu0 %v2219
    %v2385 = vpop.f32.mrf.mxu0
    %v2386 = vadd.f32 0.0, %v2385
    %v2387 = vpop.f32.mrf.mxu0
    %v2388 = vadd.f32 0.0, %v2387
    %2389 = vdwg.mxu0
    %2390 = vst [vmem:[#allocation8] sm:$0xff] %v2231
    %2391 = vst [vmem:[#allocation8 + $0x8] sm:$0xff] %v2233
    %2392 = vst [vmem:[#allocation8 + $0x10] sm:$0xff] %v2236
    %2393 = vst [vmem:[#allocation8 + $0x18] sm:$0xff] %v2238
    %2394 = vst [vmem:[#allocation8 + $0x20] sm:$0xff] %v2241
    %2395 = vst [vmem:[#allocation8 + $0x28] sm:$0xff] %v2243
    %2396 = vst [vmem:[#allocation8 + $0x30] sm:$0xff] %v2246
    %2397 = vst [vmem:[#allocation8 + $0x38] sm:$0xff] %v2248
    %2398 = vst [vmem:[#allocation8 + $0x40] sm:$0xff] %v2251
    %2399 = vst [vmem:[#allocation8 + $0x48] sm:$0xff] %v2253
    %2400 = vst [vmem:[#allocation8 + $0x50] sm:$0xff] %v2256
    %2401 = vst [vmem:[#allocation8 + $0x58] sm:$0xff] %v2258
    %2402 = vst [vmem:[#allocation8 + $0x60] sm:$0xff] %v2261
    %2403 = vst [vmem:[#allocation8 + $0x68] sm:$0xff] %v2263
    %2404 = vst [vmem:[#allocation8 + $0x70] sm:$0xff] %v2266
    %2405 = vst [vmem:[#allocation8 + $0x78] sm:$0xff] %v2268
    %2406 = vst [vmem:[#allocation8 + $0x80] sm:$0xff] %v2271
    %2407 = vst [vmem:[#allocation8 + $0x88] sm:$0xff] %v2273
    %2408 = vst [vmem:[#allocation8 + $0x90] sm:$0xff] %v2276
    %2409 = vst [vmem:[#allocation8 + $0x98] sm:$0xff] %v2278
    %2410 = vst [vmem:[#allocation8 + $0xa0] sm:$0xff] %v2281
    %2411 = vst [vmem:[#allocation8 + $0xa8] sm:$0xff] %v2283
    %2412 = vst [vmem:[#allocation8 + $0xb0] sm:$0xff] %v2286
    %2413 = vst [vmem:[#allocation8 + $0xb8] sm:$0xff] %v2288
    %2414 = vst [vmem:[#allocation8 + $0xc0] sm:$0xff] %v2291
    %2415 = vst [vmem:[#allocation8 + $0xc8] sm:$0xff] %v2293
    %2416 = vst [vmem:[#allocation8 + $0xd0] sm:$0xff] %v2296
    %2417 = vst [vmem:[#allocation8 + $0xd8] sm:$0xff] %v2298
    %2418 = vst [vmem:[#allocation8 + $0xe0] sm:$0xff] %v2301
    %2419 = vst [vmem:[#allocation8 + $0xe8] sm:$0xff] %v2303
    %2420 = vst [vmem:[#allocation8 + $0xf0] sm:$0xff] %v2306
    %2421 = vst [vmem:[#allocation8 + $0xf8] sm:$0xff] %v2308
    %2422 = vst [vmem:[#allocation8 + $0x100] sm:$0xff] %v2311
    %2423 = vst [vmem:[#allocation8 + $0x108] sm:$0xff] %v2313
    %2424 = vst [vmem:[#allocation8 + $0x110] sm:$0xff] %v2316
    %2425 = vst [vmem:[#allocation8 + $0x118] sm:$0xff] %v2318
    %2426 = vst [vmem:[#allocation8 + $0x120] sm:$0xff] %v2321
    %2427 = vst [vmem:[#allocation8 + $0x128] sm:$0xff] %v2323
    %2428 = vst [vmem:[#allocation8 + $0x130] sm:$0xff] %v2326
    %2429 = vst [vmem:[#allocation8 + $0x138] sm:$0xff] %v2328
    %2430 = vst [vmem:[#allocation8 + $0x140] sm:$0xff] %v2331
    %2431 = vst [vmem:[#allocation8 + $0x148] sm:$0xff] %v2333
    %2432 = vst [vmem:[#allocation8 + $0x150] sm:$0xff] %v2336
    %2433 = vst [vmem:[#allocation8 + $0x158] sm:$0xff] %v2338
    %2434 = vst [vmem:[#allocation8 + $0x160] sm:$0xff] %v2341
    %2435 = vst [vmem:[#allocation8 + $0x168] sm:$0xff] %v2343
    %2436 = vst [vmem:[#allocation8 + $0x170] sm:$0xff] %v2346
    %2437 = vst [vmem:[#allocation8 + $0x178] sm:$0xff] %v2348
    %2438 = vst [vmem:[#allocation8 + $0x180] sm:$0xff] %v2351
    %2439 = vst [vmem:[#allocation8 + $0x188] sm:$0xff] %v2353
    %2440 = vst [vmem:[#allocation8 + $0x190] sm:$0xff] %v2356
    %2441 = vst [vmem:[#allocation8 + $0x198] sm:$0xff] %v2358
    %2442 = vst [vmem:[#allocation8 + $0x1a0] sm:$0xff] %v2361
    %2443 = vst [vmem:[#allocation8 + $0x1a8] sm:$0xff] %v2363
    %2444 = vst [vmem:[#allocation8 + $0x1b0] sm:$0xff] %v2366
    %2445 = vst [vmem:[#allocation8 + $0x1b8] sm:$0xff] %v2368
    %2446 = vst [vmem:[#allocation8 + $0x1c0] sm:$0xff] %v2371
    %2447 = vst [vmem:[#allocation8 + $0x1c8] sm:$0xff] %v2373
    %2448 = vst [vmem:[#allocation8 + $0x1d0] sm:$0xff] %v2376
    %2449 = vst [vmem:[#allocation8 + $0x1d8] sm:$0xff] %v2378
    %2450 = vst [vmem:[#allocation8 + $0x1e0] sm:$0xff] %v2381
    %2451 = vst [vmem:[#allocation8 + $0x1e8] sm:$0xff] %v2383
    %2452 = vst [vmem:[#allocation8 + $0x1f0] sm:$0xff] %v2386
    %2453 = vst [vmem:[#allocation8 + $0x1f8] sm:$0xff] %v2388
    %v2454 = vld [vmem:[#allocation7] sm:$0xf]
    %v2455 = vpack.c.bf16 %v2454, %v2454
    %2456 = vmatpush.bf16.xpose.msra.mxu0 0
    %2457 = vmatpush.bf16.xpose.msra.mxu0 0
    %2458 = vmatpush.bf16.xpose.msra.mxu0 0
    %2459 = vmatpush.bf16.xpose.msra.mxu0 0
    %2460 = vmatpush.bf16.xpose.msra.mxu0 0
    %2461 = vmatpush.bf16.xpose.msra.mxu0 0
    %2462 = vmatpush.bf16.xpose.msra.mxu0 0
    %2463 = vmatpush.bf16.xpose.msra.mxu0 %v2455
    %2464 = vmatmul.bf16.gmra.mxu0 %v259
    %v2465 = vpop.f32.mrf.mxu0
    %v2466 = vadd.f32 0.0, %v2465
    %v2467 = vpop.f32.mrf.mxu0
    %v2468 = vadd.f32 0.0, %v2467
    %2469 = vmatmul.bf16.gmra.mxu0 %v260
    %v2470 = vpop.f32.mrf.mxu0
    %v2471 = vadd.f32 0.0, %v2470
    %v2472 = vpop.f32.mrf.mxu0
    %v2473 = vadd.f32 0.0, %v2472
    %2474 = vmatmul.bf16.gmra.mxu0 %v261
    %v2475 = vpop.f32.mrf.mxu0
    %v2476 = vadd.f32 0.0, %v2475
    %v2477 = vpop.f32.mrf.mxu0
    %v2478 = vadd.f32 0.0, %v2477
    %2479 = vmatmul.bf16.gmra.mxu0 %v262
    %v2480 = vpop.f32.mrf.mxu0
    %v2481 = vadd.f32 0.0, %v2480
    %v2482 = vpop.f32.mrf.mxu0
    %v2483 = vadd.f32 0.0, %v2482
    %2484 = vmatmul.bf16.gmra.mxu0 %v263
    %v2485 = vpop.f32.mrf.mxu0
    %v2486 = vadd.f32 0.0, %v2485
    %v2487 = vpop.f32.mrf.mxu0
    %v2488 = vadd.f32 0.0, %v2487
    %2489 = vmatmul.bf16.gmra.mxu0 %v264
    %v2490 = vpop.f32.mrf.mxu0
    %v2491 = vadd.f32 0.0, %v2490
    %v2492 = vpop.f32.mrf.mxu0
    %v2493 = vadd.f32 0.0, %v2492
    %2494 = vmatmul.bf16.gmra.mxu0 %v265
    %v2495 = vpop.f32.mrf.mxu0
    %v2496 = vadd.f32 0.0, %v2495
    %v2497 = vpop.f32.mrf.mxu0
    %v2498 = vadd.f32 0.0, %v2497
    %2499 = vmatmul.bf16.gmra.mxu0 %v266
    %v2500 = vpop.f32.mrf.mxu0
    %v2501 = vadd.f32 0.0, %v2500
    %v2502 = vpop.f32.mrf.mxu0
    %v2503 = vadd.f32 0.0, %v2502
    %2504 = vmatmul.bf16.gmra.mxu0 %v267
    %v2505 = vpop.f32.mrf.mxu0
    %v2506 = vadd.f32 0.0, %v2505
    %v2507 = vpop.f32.mrf.mxu0
    %v2508 = vadd.f32 0.0, %v2507
    %2509 = vmatmul.bf16.gmra.mxu0 %v268
    %v2510 = vpop.f32.mrf.mxu0
    %v2511 = vadd.f32 0.0, %v2510
    %v2512 = vpop.f32.mrf.mxu0
    %v2513 = vadd.f32 0.0, %v2512
    %2514 = vmatmul.bf16.gmra.mxu0 %v269
    %v2515 = vpop.f32.mrf.mxu0
    %v2516 = vadd.f32 0.0, %v2515
    %v2517 = vpop.f32.mrf.mxu0
    %v2518 = vadd.f32 0.0, %v2517
    %2519 = vmatmul.bf16.gmra.mxu0 %v270
    %v2520 = vpop.f32.mrf.mxu0
    %v2521 = vadd.f32 0.0, %v2520
    %v2522 = vpop.f32.mrf.mxu0
    %v2523 = vadd.f32 0.0, %v2522
    %2524 = vmatmul.bf16.gmra.mxu0 %v271
    %v2525 = vpop.f32.mrf.mxu0
    %v2526 = vadd.f32 0.0, %v2525
    %v2527 = vpop.f32.mrf.mxu0
    %v2528 = vadd.f32 0.0, %v2527
    %2529 = vmatmul.bf16.gmra.mxu0 %v272
    %v2530 = vpop.f32.mrf.mxu0
    %v2531 = vadd.f32 0.0, %v2530
    %v2532 = vpop.f32.mrf.mxu0
    %v2533 = vadd.f32 0.0, %v2532
    %2534 = vmatmul.bf16.gmra.mxu0 %v273
    %v2535 = vpop.f32.mrf.mxu0
    %v2536 = vadd.f32 0.0, %v2535
    %v2537 = vpop.f32.mrf.mxu0
    %v2538 = vadd.f32 0.0, %v2537
    %2539 = vmatmul.bf16.gmra.mxu0 %v274
    %v2540 = vpop.f32.mrf.mxu0
    %v2541 = vadd.f32 0.0, %v2540
    %v2542 = vpop.f32.mrf.mxu0
    %v2543 = vadd.f32 0.0, %v2542
    %2544 = vmatmul.bf16.gmra.mxu0 %v275
    %v2545 = vpop.f32.mrf.mxu0
    %v2546 = vadd.f32 0.0, %v2545
    %v2547 = vpop.f32.mrf.mxu0
    %v2548 = vadd.f32 0.0, %v2547
    %2549 = vmatmul.bf16.gmra.mxu0 %v276
    %v2550 = vpop.f32.mrf.mxu0
    %v2551 = vadd.f32 0.0, %v2550
    %v2552 = vpop.f32.mrf.mxu0
    %v2553 = vadd.f32 0.0, %v2552
    %2554 = vmatmul.bf16.gmra.mxu0 %v277
    %v2555 = vpop.f32.mrf.mxu0
    %v2556 = vadd.f32 0.0, %v2555
    %v2557 = vpop.f32.mrf.mxu0
    %v2558 = vadd.f32 0.0, %v2557
    %2559 = vmatmul.bf16.gmra.mxu0 %v278
    %v2560 = vpop.f32.mrf.mxu0
    %v2561 = vadd.f32 0.0, %v2560
    %v2562 = vpop.f32.mrf.mxu0
    %v2563 = vadd.f32 0.0, %v2562
    %2564 = vmatmul.bf16.gmra.mxu0 %v279
    %v2565 = vpop.f32.mrf.mxu0
    %v2566 = vadd.f32 0.0, %v2565
    %v2567 = vpop.f32.mrf.mxu0
    %v2568 = vadd.f32 0.0, %v2567
    %2569 = vmatmul.bf16.gmra.mxu0 %v280
    %v2570 = vpop.f32.mrf.mxu0
    %v2571 = vadd.f32 0.0, %v2570
    %v2572 = vpop.f32.mrf.mxu0
    %v2573 = vadd.f32 0.0, %v2572
    %2574 = vmatmul.bf16.gmra.mxu0 %v281
    %v2575 = vpop.f32.mrf.mxu0
    %v2576 = vadd.f32 0.0, %v2575
    %v2577 = vpop.f32.mrf.mxu0
    %v2578 = vadd.f32 0.0, %v2577
    %2579 = vmatmul.bf16.gmra.mxu0 %v282
    %v2580 = vpop.f32.mrf.mxu0
    %v2581 = vadd.f32 0.0, %v2580
    %v2582 = vpop.f32.mrf.mxu0
    %v2583 = vadd.f32 0.0, %v2582
    %2584 = vmatmul.bf16.gmra.mxu0 %v283
    %v2585 = vpop.f32.mrf.mxu0
    %v2586 = vadd.f32 0.0, %v2585
    %v2587 = vpop.f32.mrf.mxu0
    %v2588 = vadd.f32 0.0, %v2587
    %2589 = vmatmul.bf16.gmra.mxu0 %v284
    %v2590 = vpop.f32.mrf.mxu0
    %v2591 = vadd.f32 0.0, %v2590
    %v2592 = vpop.f32.mrf.mxu0
    %v2593 = vadd.f32 0.0, %v2592
    %2594 = vmatmul.bf16.gmra.mxu0 %v285
    %v2595 = vpop.f32.mrf.mxu0
    %v2596 = vadd.f32 0.0, %v2595
    %v2597 = vpop.f32.mrf.mxu0
    %v2598 = vadd.f32 0.0, %v2597
    %2599 = vmatmul.bf16.gmra.mxu0 %v286
    %v2600 = vpop.f32.mrf.mxu0
    %v2601 = vadd.f32 0.0, %v2600
    %v2602 = vpop.f32.mrf.mxu0
    %v2603 = vadd.f32 0.0, %v2602
    %2604 = vmatmul.bf16.gmra.mxu0 %v287
    %v2605 = vpop.f32.mrf.mxu0
    %v2606 = vadd.f32 0.0, %v2605
    %v2607 = vpop.f32.mrf.mxu0
    %v2608 = vadd.f32 0.0, %v2607
    %2609 = vmatmul.bf16.gmra.mxu0 %v288
    %v2610 = vpop.f32.mrf.mxu0
    %v2611 = vadd.f32 0.0, %v2610
    %v2612 = vpop.f32.mrf.mxu0
    %v2613 = vadd.f32 0.0, %v2612
    %2614 = vmatmul.bf16.gmra.mxu0 %v289
    %v2615 = vpop.f32.mrf.mxu0
    %v2616 = vadd.f32 0.0, %v2615
    %v2617 = vpop.f32.mrf.mxu0
    %v2618 = vadd.f32 0.0, %v2617
    %2619 = vmatmul.bf16.gmra.mxu0 %v290
    %v2620 = vpop.f32.mrf.mxu0
    %v2621 = vadd.f32 0.0, %v2620
    %v2622 = vpop.f32.mrf.mxu0
    %v2623 = vadd.f32 0.0, %v2622
    %2624 = vdwg.mxu0
    %vm2625 = vcmask 31744
    %v2626 = vsel %vm2625, %v2466, -inf
    %2627 = vmax.xlane.f32.xlu0 %v2626
    %v2628 = vpop.xlane.xlu0 %2627
    %v2629 = vsel %vm2625, %v2468, -inf
    %2630 = vmax.xlane.f32.xlu0 %v2629
    %v2631 = vpop.xlane.xlu0 %2630
    %v2632 = vsel %vm2625, %v2471, -inf
    %2633 = vmax.xlane.f32.xlu0 %v2632
    %v2634 = vpop.xlane.xlu0 %2633
    %v2635 = vsel %vm2625, %v2473, -inf
    %2636 = vmax.xlane.f32.xlu0 %v2635
    %v2637 = vpop.xlane.xlu0 %2636
    %v2638 = vsel %vm2625, %v2476, -inf
    %2639 = vmax.xlane.f32.xlu0 %v2638
    %v2640 = vpop.xlane.xlu0 %2639
    %v2641 = vsel %vm2625, %v2478, -inf
    %2642 = vmax.xlane.f32.xlu0 %v2641
    %v2643 = vpop.xlane.xlu0 %2642
    %v2644 = vsel %vm2625, %v2481, -inf
    %2645 = vmax.xlane.f32.xlu0 %v2644
    %v2646 = vpop.xlane.xlu0 %2645
    %v2647 = vsel %vm2625, %v2483, -inf
    %2648 = vmax.xlane.f32.xlu0 %v2647
    %v2649 = vpop.xlane.xlu0 %2648
    %v2650 = vsel %vm2625, %v2486, -inf
    %2651 = vmax.xlane.f32.xlu0 %v2650
    %v2652 = vpop.xlane.xlu0 %2651
    %v2653 = vsel %vm2625, %v2488, -inf
    %2654 = vmax.xlane.f32.xlu0 %v2653
    %v2655 = vpop.xlane.xlu0 %2654
    %v2656 = vsel %vm2625, %v2491, -inf
    %2657 = vmax.xlane.f32.xlu0 %v2656
    %v2658 = vpop.xlane.xlu0 %2657
    %v2659 = vsel %vm2625, %v2493, -inf
    %2660 = vmax.xlane.f32.xlu0 %v2659
    %v2661 = vpop.xlane.xlu0 %2660
    %v2662 = vsel %vm2625, %v2496, -inf
    %2663 = vmax.xlane.f32.xlu0 %v2662
    %v2664 = vpop.xlane.xlu0 %2663
    %v2665 = vsel %vm2625, %v2498, -inf
    %2666 = vmax.xlane.f32.xlu0 %v2665
    %v2667 = vpop.xlane.xlu0 %2666
    %v2668 = vsel %vm2625, %v2501, -inf
    %2669 = vmax.xlane.f32.xlu0 %v2668
    %v2670 = vpop.xlane.xlu0 %2669
    %v2671 = vsel %vm2625, %v2503, -inf
    %2672 = vmax.xlane.f32.xlu0 %v2671
    %v2673 = vpop.xlane.xlu0 %2672
    %v2674 = vsel %vm2625, %v2506, -inf
    %2675 = vmax.xlane.f32.xlu0 %v2674
    %v2676 = vpop.xlane.xlu0 %2675
    %v2677 = vsel %vm2625, %v2508, -inf
    %2678 = vmax.xlane.f32.xlu0 %v2677
    %v2679 = vpop.xlane.xlu0 %2678
    %v2680 = vsel %vm2625, %v2511, -inf
    %2681 = vmax.xlane.f32.xlu0 %v2680
    %v2682 = vpop.xlane.xlu0 %2681
    %v2683 = vsel %vm2625, %v2513, -inf
    %2684 = vmax.xlane.f32.xlu0 %v2683
    %v2685 = vpop.xlane.xlu0 %2684
    %v2686 = vsel %vm2625, %v2516, -inf
    %2687 = vmax.xlane.f32.xlu0 %v2686
    %v2688 = vpop.xlane.xlu0 %2687
    %v2689 = vsel %vm2625, %v2518, -inf
    %2690 = vmax.xlane.f32.xlu0 %v2689
    %v2691 = vpop.xlane.xlu0 %2690
    %v2692 = vsel %vm2625, %v2521, -inf
    %2693 = vmax.xlane.f32.xlu0 %v2692
    %v2694 = vpop.xlane.xlu0 %2693
    %v2695 = vsel %vm2625, %v2523, -inf
    %2696 = vmax.xlane.f32.xlu0 %v2695
    %v2697 = vpop.xlane.xlu0 %2696
    %v2698 = vsel %vm2625, %v2526, -inf
    %2699 = vmax.xlane.f32.xlu0 %v2698
    %v2700 = vpop.xlane.xlu0 %2699
    %v2701 = vsel %vm2625, %v2528, -inf
    %2702 = vmax.xlane.f32.xlu0 %v2701
    %v2703 = vpop.xlane.xlu0 %2702
    %v2704 = vsel %vm2625, %v2531, -inf
    %2705 = vmax.xlane.f32.xlu0 %v2704
    %v2706 = vpop.xlane.xlu0 %2705
    %v2707 = vsel %vm2625, %v2533, -inf
    %2708 = vmax.xlane.f32.xlu0 %v2707
    %v2709 = vpop.xlane.xlu0 %2708
    %v2710 = vsel %vm2625, %v2536, -inf
    %2711 = vmax.xlane.f32.xlu0 %v2710
    %v2712 = vpop.xlane.xlu0 %2711
    %v2713 = vsel %vm2625, %v2538, -inf
    %2714 = vmax.xlane.f32.xlu0 %v2713
    %v2715 = vpop.xlane.xlu0 %2714
    %v2716 = vsel %vm2625, %v2541, -inf
    %2717 = vmax.xlane.f32.xlu0 %v2716
    %v2718 = vpop.xlane.xlu0 %2717
    %v2719 = vsel %vm2625, %v2543, -inf
    %2720 = vmax.xlane.f32.xlu0 %v2719
    %v2721 = vpop.xlane.xlu0 %2720
    %v2722 = vsel %vm2625, %v2546, -inf
    %2723 = vmax.xlane.f32.xlu0 %v2722
    %v2724 = vpop.xlane.xlu0 %2723
    %v2725 = vsel %vm2625, %v2548, -inf
    %2726 = vmax.xlane.f32.xlu0 %v2725
    %v2727 = vpop.xlane.xlu0 %2726
    %v2728 = vsel %vm2625, %v2551, -inf
    %2729 = vmax.xlane.f32.xlu0 %v2728
    %v2730 = vpop.xlane.xlu0 %2729
    %v2731 = vsel %vm2625, %v2553, -inf
    %2732 = vmax.xlane.f32.xlu0 %v2731
    %v2733 = vpop.xlane.xlu0 %2732
    %v2734 = vsel %vm2625, %v2556, -inf
    %2735 = vmax.xlane.f32.xlu0 %v2734
    %v2736 = vpop.xlane.xlu0 %2735
    %v2737 = vsel %vm2625, %v2558, -inf
    %2738 = vmax.xlane.f32.xlu0 %v2737
    %v2739 = vpop.xlane.xlu0 %2738
    %v2740 = vsel %vm2625, %v2561, -inf
    %2741 = vmax.xlane.f32.xlu0 %v2740
    %v2742 = vpop.xlane.xlu0 %2741
    %v2743 = vsel %vm2625, %v2563, -inf
    %2744 = vmax.xlane.f32.xlu0 %v2743
    %v2745 = vpop.xlane.xlu0 %2744
    %v2746 = vsel %vm2625, %v2566, -inf
    %2747 = vmax.xlane.f32.xlu0 %v2746
    %v2748 = vpop.xlane.xlu0 %2747
    %v2749 = vsel %vm2625, %v2568, -inf
    %2750 = vmax.xlane.f32.xlu0 %v2749
    %v2751 = vpop.xlane.xlu0 %2750
    %v2752 = vsel %vm2625, %v2571, -inf
    %2753 = vmax.xlane.f32.xlu0 %v2752
    %v2754 = vpop.xlane.xlu0 %2753
    %v2755 = vsel %vm2625, %v2573, -inf
    %2756 = vmax.xlane.f32.xlu0 %v2755
    %v2757 = vpop.xlane.xlu0 %2756
    %v2758 = vsel %vm2625, %v2576, -inf
    %2759 = vmax.xlane.f32.xlu0 %v2758
    %v2760 = vpop.xlane.xlu0 %2759
    %v2761 = vsel %vm2625, %v2578, -inf
    %2762 = vmax.xlane.f32.xlu0 %v2761
    %v2763 = vpop.xlane.xlu0 %2762
    %v2764 = vsel %vm2625, %v2581, -inf
    %2765 = vmax.xlane.f32.xlu0 %v2764
    %v2766 = vpop.xlane.xlu0 %2765
    %v2767 = vsel %vm2625, %v2583, -inf
    %2768 = vmax.xlane.f32.xlu0 %v2767
    %v2769 = vpop.xlane.xlu0 %2768
    %v2770 = vsel %vm2625, %v2586, -inf
    %2771 = vmax.xlane.f32.xlu0 %v2770
    %v2772 = vpop.xlane.xlu0 %2771
    %v2773 = vsel %vm2625, %v2588, -inf
    %2774 = vmax.xlane.f32.xlu0 %v2773
    %v2775 = vpop.xlane.xlu0 %2774
    %v2776 = vsel %vm2625, %v2591, -inf
    %2777 = vmax.xlane.f32.xlu0 %v2776
    %v2778 = vpop.xlane.xlu0 %2777
    %v2779 = vsel %vm2625, %v2593, -inf
    %2780 = vmax.xlane.f32.xlu0 %v2779
    %v2781 = vpop.xlane.xlu0 %2780
    %v2782 = vsel %vm2625, %v2596, -inf
    %2783 = vmax.xlane.f32.xlu0 %v2782
    %v2784 = vpop.xlane.xlu0 %2783
    %v2785 = vsel %vm2625, %v2598, -inf
    %2786 = vmax.xlane.f32.xlu0 %v2785
    %v2787 = vpop.xlane.xlu0 %2786
    %v2788 = vsel %vm2625, %v2601, -inf
    %2789 = vmax.xlane.f32.xlu0 %v2788
    %v2790 = vpop.xlane.xlu0 %2789
    %v2791 = vsel %vm2625, %v2603, -inf
    %2792 = vmax.xlane.f32.xlu0 %v2791
    %v2793 = vpop.xlane.xlu0 %2792
    %v2794 = vsel %vm2625, %v2606, -inf
    %2795 = vmax.xlane.f32.xlu0 %v2794
    %v2796 = vpop.xlane.xlu0 %2795
    %v2797 = vsel %vm2625, %v2608, -inf
    %2798 = vmax.xlane.f32.xlu0 %v2797
    %v2799 = vpop.xlane.xlu0 %2798
    %v2800 = vsel %vm2625, %v2611, -inf
    %2801 = vmax.xlane.f32.xlu0 %v2800
    %v2802 = vpop.xlane.xlu0 %2801
    %v2803 = vsel %vm2625, %v2613, -inf
    %2804 = vmax.xlane.f32.xlu0 %v2803
    %v2805 = vpop.xlane.xlu0 %2804
    %v2806 = vsel %vm2625, %v2616, -inf
    %2807 = vmax.xlane.f32.xlu0 %v2806
    %v2808 = vpop.xlane.xlu0 %2807
    %v2809 = vsel %vm2625, %v2618, -inf
    %2810 = vmax.xlane.f32.xlu0 %v2809
    %v2811 = vpop.xlane.xlu0 %2810
    %v2812 = vsel %vm2625, %v2621, -inf
    %2813 = vmax.xlane.f32.xlu0 %v2812
    %v2814 = vpop.xlane.xlu0 %2813
    %v2815 = vsel %vm2625, %v2623, -inf
    %2816 = vmax.xlane.f32.xlu0 %v2815
    %v2817 = vpop.xlane.xlu0 %2816
    %v2818 = vsub.f32 %v2466, %v2628
    %v2819 = vsub.f32 %v2468, %v2631
    %v2820 = vsub.f32 %v2471, %v2634
    %v2821 = vsub.f32 %v2473, %v2637
    %v2822 = vsub.f32 %v2476, %v2640
    %v2823 = vsub.f32 %v2478, %v2643
    %v2824 = vsub.f32 %v2481, %v2646
    %v2825 = vsub.f32 %v2483, %v2649
    %v2826 = vsub.f32 %v2486, %v2652
    %v2827 = vsub.f32 %v2488, %v2655
    %v2828 = vsub.f32 %v2491, %v2658
    %v2829 = vsub.f32 %v2493, %v2661
    %v2830 = vsub.f32 %v2496, %v2664
    %v2831 = vsub.f32 %v2498, %v2667
    %v2832 = vsub.f32 %v2501, %v2670
    %v2833 = vsub.f32 %v2503, %v2673
    %v2834 = vsub.f32 %v2506, %v2676
    %v2835 = vsub.f32 %v2508, %v2679
    %v2836 = vsub.f32 %v2511, %v2682
    %v2837 = vsub.f32 %v2513, %v2685
    %v2838 = vsub.f32 %v2516, %v2688
    %v2839 = vsub.f32 %v2518, %v2691
    %v2840 = vsub.f32 %v2521, %v2694
    %v2841 = vsub.f32 %v2523, %v2697
    %v2842 = vsub.f32 %v2526, %v2700
    %v2843 = vsub.f32 %v2528, %v2703
    %v2844 = vsub.f32 %v2531, %v2706
    %v2845 = vsub.f32 %v2533, %v2709
    %v2846 = vsub.f32 %v2536, %v2712
    %v2847 = vsub.f32 %v2538, %v2715
    %v2848 = vsub.f32 %v2541, %v2718
    %v2849 = vsub.f32 %v2543, %v2721
    %v2850 = vsub.f32 %v2546, %v2724
    %v2851 = vsub.f32 %v2548, %v2727
    %v2852 = vsub.f32 %v2551, %v2730
    %v2853 = vsub.f32 %v2553, %v2733
    %v2854 = vsub.f32 %v2556, %v2736
    %v2855 = vsub.f32 %v2558, %v2739
    %v2856 = vsub.f32 %v2561, %v2742
    %v2857 = vsub.f32 %v2563, %v2745
    %v2858 = vsub.f32 %v2566, %v2748
    %v2859 = vsub.f32 %v2568, %v2751
    %v2860 = vsub.f32 %v2571, %v2754
    %v2861 = vsub.f32 %v2573, %v2757
    %v2862 = vsub.f32 %v2576, %v2760
    %v2863 = vsub.f32 %v2578, %v2763
    %v2864 = vsub.f32 %v2581, %v2766
    %v2865 = vsub.f32 %v2583, %v2769
    %v2866 = vsub.f32 %v2586, %v2772
    %v2867 = vsub.f32 %v2588, %v2775
    %v2868 = vsub.f32 %v2591, %v2778
    %v2869 = vsub.f32 %v2593, %v2781
    %v2870 = vsub.f32 %v2596, %v2784
    %v2871 = vsub.f32 %v2598, %v2787
    %v2872 = vsub.f32 %v2601, %v2790
    %v2873 = vsub.f32 %v2603, %v2793
    %v2874 = vsub.f32 %v2606, %v2796
    %v2875 = vsub.f32 %v2608, %v2799
    %v2876 = vsub.f32 %v2611, %v2802
    %v2877 = vsub.f32 %v2613, %v2805
    %v2878 = vsub.f32 %v2616, %v2808
    %v2879 = vsub.f32 %v2618, %v2811
    %v2880 = vsub.f32 %v2621, %v2814
    %v2881 = vsub.f32 %v2623, %v2817
    %v2882 = vmul.f32 %v2818, 1.442695
    %v2883 = vpow.pop %v2882
    %v2884 = vmul.f32 %v2819, 1.442695
    %v2885 = vpow.pop %v2884
    %v2886 = vmul.f32 %v2820, 1.442695
    %v2887 = vpow.pop %v2886
    %v2888 = vmul.f32 %v2821, 1.442695
    %v2889 = vpow.pop %v2888
    %v2890 = vmul.f32 %v2822, 1.442695
    %v2891 = vpow.pop %v2890
    %v2892 = vmul.f32 %v2823, 1.442695
    %v2893 = vpow.pop %v2892
    %v2894 = vmul.f32 %v2824, 1.442695
    %v2895 = vpow.pop %v2894
    %v2896 = vmul.f32 %v2825, 1.442695
    %v2897 = vpow.pop %v2896
    %v2898 = vmul.f32 %v2826, 1.442695
    %v2899 = vpow.pop %v2898
    %v2900 = vmul.f32 %v2827, 1.442695
    %v2901 = vpow.pop %v2900
    %v2902 = vmul.f32 %v2828, 1.442695
    %v2903 = vpow.pop %v2902
    %v2904 = vmul.f32 %v2829, 1.442695
    %v2905 = vpow.pop %v2904
    %v2906 = vmul.f32 %v2830, 1.442695
    %v2907 = vpow.pop %v2906
    %v2908 = vmul.f32 %v2831, 1.442695
    %v2909 = vpow.pop %v2908
    %v2910 = vmul.f32 %v2832, 1.442695
    %v2911 = vpow.pop %v2910
    %v2912 = vmul.f32 %v2833, 1.442695
    %v2913 = vpow.pop %v2912
    %v2914 = vmul.f32 %v2834, 1.442695
    %v2915 = vpow.pop %v2914
    %v2916 = vmul.f32 %v2835, 1.442695
    %v2917 = vpow.pop %v2916
    %v2918 = vmul.f32 %v2836, 1.442695
    %v2919 = vpow.pop %v2918
    %v2920 = vmul.f32 %v2837, 1.442695
    %v2921 = vpow.pop %v2920
    %v2922 = vmul.f32 %v2838, 1.442695
    %v2923 = vpow.pop %v2922
    %v2924 = vmul.f32 %v2839, 1.442695
    %v2925 = vpow.pop %v2924
    %v2926 = vmul.f32 %v2840, 1.442695
    %v2927 = vpow.pop %v2926
    %v2928 = vmul.f32 %v2841, 1.442695
    %v2929 = vpow.pop %v2928
    %v2930 = vmul.f32 %v2842, 1.442695
    %v2931 = vpow.pop %v2930
    %v2932 = vmul.f32 %v2843, 1.442695
    %v2933 = vpow.pop %v2932
    %v2934 = vmul.f32 %v2844, 1.442695
    %v2935 = vpow.pop %v2934
    %v2936 = vmul.f32 %v2845, 1.442695
    %v2937 = vpow.pop %v2936
    %v2938 = vmul.f32 %v2846, 1.442695
    %v2939 = vpow.pop %v2938
    %v2940 = vmul.f32 %v2847, 1.442695
    %v2941 = vpow.pop %v2940
    %v2942 = vmul.f32 %v2848, 1.442695
    %v2943 = vpow.pop %v2942
    %v2944 = vmul.f32 %v2849, 1.442695
    %v2945 = vpow.pop %v2944
    %v2946 = vmul.f32 %v2850, 1.442695
    %v2947 = vpow.pop %v2946
    %v2948 = vmul.f32 %v2851, 1.442695
    %v2949 = vpow.pop %v2948
    %v2950 = vmul.f32 %v2852, 1.442695
    %v2951 = vpow.pop %v2950
    %v2952 = vmul.f32 %v2853, 1.442695
    %v2953 = vpow.pop %v2952
    %v2954 = vmul.f32 %v2854, 1.442695
    %v2955 = vpow.pop %v2954
    %v2956 = vmul.f32 %v2855, 1.442695
    %v2957 = vpow.pop %v2956
    %v2958 = vmul.f32 %v2856, 1.442695
    %v2959 = vpow.pop %v2958
    %v2960 = vmul.f32 %v2857, 1.442695
    %v2961 = vpow.pop %v2960
    %v2962 = vmul.f32 %v2858, 1.442695
    %v2963 = vpow.pop %v2962
    %v2964 = vmul.f32 %v2859, 1.442695
    %v2965 = vpow.pop %v2964
    %v2966 = vmul.f32 %v2860, 1.442695
    %v2967 = vpow.pop %v2966
    %v2968 = vmul.f32 %v2861, 1.442695
    %v2969 = vpow.pop %v2968
    %v2970 = vmul.f32 %v2862, 1.442695
    %v2971 = vpow.pop %v2970
    %v2972 = vmul.f32 %v2863, 1.442695
    %v2973 = vpow.pop %v2972
    %v2974 = vmul.f32 %v2864, 1.442695
    %v2975 = vpow.pop %v2974
    %v2976 = vmul.f32 %v2865, 1.442695
    %v2977 = vpow.pop %v2976
    %v2978 = vmul.f32 %v2866, 1.442695
    %v2979 = vpow.pop %v2978
    %v2980 = vmul.f32 %v2867, 1.442695
    %v2981 = vpow.pop %v2980
    %v2982 = vmul.f32 %v2868, 1.442695
    %v2983 = vpow.pop %v2982
    %v2984 = vmul.f32 %v2869, 1.442695
    %v2985 = vpow.pop %v2984
    %v2986 = vmul.f32 %v2870, 1.442695
    %v2987 = vpow.pop %v2986
    %v2988 = vmul.f32 %v2871, 1.442695
    %v2989 = vpow.pop %v2988
    %v2990 = vmul.f32 %v2872, 1.442695
    %v2991 = vpow.pop %v2990
    %v2992 = vmul.f32 %v2873, 1.442695
    %v2993 = vpow.pop %v2992
    %v2994 = vmul.f32 %v2874, 1.442695
    %v2995 = vpow.pop %v2994
    %v2996 = vmul.f32 %v2875, 1.442695
    %v2997 = vpow.pop %v2996
    %v2998 = vmul.f32 %v2876, 1.442695
    %v2999 = vpow.pop %v2998
    %v3000 = vmul.f32 %v2877, 1.442695
    %v3001 = vpow.pop %v3000
    %v3002 = vmul.f32 %v2878, 1.442695
    %v3003 = vpow.pop %v3002
    %v3004 = vmul.f32 %v2879, 1.442695
    %v3005 = vpow.pop %v3004
    %v3006 = vmul.f32 %v2880, 1.442695
    %v3007 = vpow.pop %v3006
    %v3008 = vmul.f32 %v2881, 1.442695
    %v3009 = vpow.pop %v3008
    %v3010 = vsel %vm2625, %v2883, 0.0
    %3011 = vadd.xlane.f32.xlu0 %v3010
    %v3012 = vpop.xlane.xlu0 %3011
    %v3013 = vsel %vm2625, %v2885, 0.0
    %3014 = vadd.xlane.f32.xlu0 %v3013
    %v3015 = vpop.xlane.xlu0 %3014
    %v3016 = vsel %vm2625, %v2887, 0.0
    %3017 = vadd.xlane.f32.xlu0 %v3016
    %v3018 = vpop.xlane.xlu0 %3017
    %v3019 = vsel %vm2625, %v2889, 0.0
    %3020 = vadd.xlane.f32.xlu0 %v3019
    %v3021 = vpop.xlane.xlu0 %3020
    %v3022 = vsel %vm2625, %v2891, 0.0
    %3023 = vadd.xlane.f32.xlu0 %v3022
    %v3024 = vpop.xlane.xlu0 %3023
    %v3025 = vsel %vm2625, %v2893, 0.0
    %3026 = vadd.xlane.f32.xlu0 %v3025
    %v3027 = vpop.xlane.xlu0 %3026
    %v3028 = vsel %vm2625, %v2895, 0.0
    %3029 = vadd.xlane.f32.xlu0 %v3028
    %v3030 = vpop.xlane.xlu0 %3029
    %v3031 = vsel %vm2625, %v2897, 0.0
    %3032 = vadd.xlane.f32.xlu0 %v3031
    %v3033 = vpop.xlane.xlu0 %3032
    %v3034 = vsel %vm2625, %v2899, 0.0
    %3035 = vadd.xlane.f32.xlu0 %v3034
    %v3036 = vpop.xlane.xlu0 %3035
    %v3037 = vsel %vm2625, %v2901, 0.0
    %3038 = vadd.xlane.f32.xlu0 %v3037
    %v3039 = vpop.xlane.xlu0 %3038
    %v3040 = vsel %vm2625, %v2903, 0.0
    %3041 = vadd.xlane.f32.xlu0 %v3040
    %v3042 = vpop.xlane.xlu0 %3041
    %v3043 = vsel %vm2625, %v2905, 0.0
    %3044 = vadd.xlane.f32.xlu0 %v3043
    %v3045 = vpop.xlane.xlu0 %3044
    %v3046 = vsel %vm2625, %v2907, 0.0
    %3047 = vadd.xlane.f32.xlu0 %v3046
    %v3048 = vpop.xlane.xlu0 %3047
    %v3049 = vsel %vm2625, %v2909, 0.0
    %3050 = vadd.xlane.f32.xlu0 %v3049
    %v3051 = vpop.xlane.xlu0 %3050
    %v3052 = vsel %vm2625, %v2911, 0.0
    %3053 = vadd.xlane.f32.xlu0 %v3052
    %v3054 = vpop.xlane.xlu0 %3053
    %v3055 = vsel %vm2625, %v2913, 0.0
    %3056 = vadd.xlane.f32.xlu0 %v3055
    %v3057 = vpop.xlane.xlu0 %3056
    %v3058 = vsel %vm2625, %v2915, 0.0
    %3059 = vadd.xlane.f32.xlu0 %v3058
    %v3060 = vpop.xlane.xlu0 %3059
    %v3061 = vsel %vm2625, %v2917, 0.0
    %3062 = vadd.xlane.f32.xlu0 %v3061
    %v3063 = vpop.xlane.xlu0 %3062
    %v3064 = vsel %vm2625, %v2919, 0.0
    %3065 = vadd.xlane.f32.xlu0 %v3064
    %v3066 = vpop.xlane.xlu0 %3065
    %v3067 = vsel %vm2625, %v2921, 0.0
    %3068 = vadd.xlane.f32.xlu0 %v3067
    %v3069 = vpop.xlane.xlu0 %3068
    %v3070 = vsel %vm2625, %v2923, 0.0
    %3071 = vadd.xlane.f32.xlu0 %v3070
    %v3072 = vpop.xlane.xlu0 %3071
    %v3073 = vsel %vm2625, %v2925, 0.0
    %3074 = vadd.xlane.f32.xlu0 %v3073
    %v3075 = vpop.xlane.xlu0 %3074
    %v3076 = vsel %vm2625, %v2927, 0.0
    %3077 = vadd.xlane.f32.xlu0 %v3076
    %v3078 = vpop.xlane.xlu0 %3077
    %v3079 = vsel %vm2625, %v2929, 0.0
    %3080 = vadd.xlane.f32.xlu0 %v3079
    %v3081 = vpop.xlane.xlu0 %3080
    %v3082 = vsel %vm2625, %v2931, 0.0
    %3083 = vadd.xlane.f32.xlu0 %v3082
    %v3084 = vpop.xlane.xlu0 %3083
    %v3085 = vsel %vm2625, %v2933, 0.0
    %3086 = vadd.xlane.f32.xlu0 %v3085
    %v3087 = vpop.xlane.xlu0 %3086
    %v3088 = vsel %vm2625, %v2935, 0.0
    %3089 = vadd.xlane.f32.xlu0 %v3088
    %v3090 = vpop.xlane.xlu0 %3089
    %v3091 = vsel %vm2625, %v2937, 0.0
    %3092 = vadd.xlane.f32.xlu0 %v3091
    %v3093 = vpop.xlane.xlu0 %3092
    %v3094 = vsel %vm2625, %v2939, 0.0
    %3095 = vadd.xlane.f32.xlu0 %v3094
    %v3096 = vpop.xlane.xlu0 %3095
    %v3097 = vsel %vm2625, %v2941, 0.0
    %3098 = vadd.xlane.f32.xlu0 %v3097
    %v3099 = vpop.xlane.xlu0 %3098
    %v3100 = vsel %vm2625, %v2943, 0.0
    %3101 = vadd.xlane.f32.xlu0 %v3100
    %v3102 = vpop.xlane.xlu0 %3101
    %v3103 = vsel %vm2625, %v2945, 0.0
    %3104 = vadd.xlane.f32.xlu0 %v3103
    %v3105 = vpop.xlane.xlu0 %3104
    %v3106 = vsel %vm2625, %v2947, 0.0
    %3107 = vadd.xlane.f32.xlu0 %v3106
    %v3108 = vpop.xlane.xlu0 %3107
    %v3109 = vsel %vm2625, %v2949, 0.0
    %3110 = vadd.xlane.f32.xlu0 %v3109
    %v3111 = vpop.xlane.xlu0 %3110
    %v3112 = vsel %vm2625, %v2951, 0.0
    %3113 = vadd.xlane.f32.xlu0 %v3112
    %v3114 = vpop.xlane.xlu0 %3113
    %v3115 = vsel %vm2625, %v2953, 0.0
    %3116 = vadd.xlane.f32.xlu0 %v3115
    %v3117 = vpop.xlane.xlu0 %3116
    %v3118 = vsel %vm2625, %v2955, 0.0
    %3119 = vadd.xlane.f32.xlu0 %v3118
    %v3120 = vpop.xlane.xlu0 %3119
    %v3121 = vsel %vm2625, %v2957, 0.0
    %3122 = vadd.xlane.f32.xlu0 %v3121
    %v3123 = vpop.xlane.xlu0 %3122
    %v3124 = vsel %vm2625, %v2959, 0.0
    %3125 = vadd.xlane.f32.xlu0 %v3124
    %v3126 = vpop.xlane.xlu0 %3125
    %v3127 = vsel %vm2625, %v2961, 0.0
    %3128 = vadd.xlane.f32.xlu0 %v3127
    %v3129 = vpop.xlane.xlu0 %3128
    %v3130 = vsel %vm2625, %v2963, 0.0
    %3131 = vadd.xlane.f32.xlu0 %v3130
    %v3132 = vpop.xlane.xlu0 %3131
    %v3133 = vsel %vm2625, %v2965, 0.0
    %3134 = vadd.xlane.f32.xlu0 %v3133
    %v3135 = vpop.xlane.xlu0 %3134
    %v3136 = vsel %vm2625, %v2967, 0.0
    %3137 = vadd.xlane.f32.xlu0 %v3136
    %v3138 = vpop.xlane.xlu0 %3137
    %v3139 = vsel %vm2625, %v2969, 0.0
    %3140 = vadd.xlane.f32.xlu0 %v3139
    %v3141 = vpop.xlane.xlu0 %3140
    %v3142 = vsel %vm2625, %v2971, 0.0
    %3143 = vadd.xlane.f32.xlu0 %v3142
    %v3144 = vpop.xlane.xlu0 %3143
    %v3145 = vsel %vm2625, %v2973, 0.0
    %3146 = vadd.xlane.f32.xlu0 %v3145
    %v3147 = vpop.xlane.xlu0 %3146
    %v3148 = vsel %vm2625, %v2975, 0.0
    %3149 = vadd.xlane.f32.xlu0 %v3148
    %v3150 = vpop.xlane.xlu0 %3149
    %v3151 = vsel %vm2625, %v2977, 0.0
    %3152 = vadd.xlane.f32.xlu0 %v3151
    %v3153 = vpop.xlane.xlu0 %3152
    %v3154 = vsel %vm2625, %v2979, 0.0
    %3155 = vadd.xlane.f32.xlu0 %v3154
    %v3156 = vpop.xlane.xlu0 %3155
    %v3157 = vsel %vm2625, %v2981, 0.0
    %3158 = vadd.xlane.f32.xlu0 %v3157
    %v3159 = vpop.xlane.xlu0 %3158
    %v3160 = vsel %vm2625, %v2983, 0.0
    %3161 = vadd.xlane.f32.xlu0 %v3160
    %v3162 = vpop.xlane.xlu0 %3161
    %v3163 = vsel %vm2625, %v2985, 0.0
    %3164 = vadd.xlane.f32.xlu0 %v3163
    %v3165 = vpop.xlane.xlu0 %3164
    %v3166 = vsel %vm2625, %v2987, 0.0
    %3167 = vadd.xlane.f32.xlu0 %v3166
    %v3168 = vpop.xlane.xlu0 %3167
    %v3169 = vsel %vm2625, %v2989, 0.0
    %3170 = vadd.xlane.f32.xlu0 %v3169
    %v3171 = vpop.xlane.xlu0 %3170
    %v3172 = vsel %vm2625, %v2991, 0.0
    %3173 = vadd.xlane.f32.xlu0 %v3172
    %v3174 = vpop.xlane.xlu0 %3173
    %v3175 = vsel %vm2625, %v2993, 0.0
    %3176 = vadd.xlane.f32.xlu0 %v3175
    %v3177 = vpop.xlane.xlu0 %3176
    %v3178 = vsel %vm2625, %v2995, 0.0
    %3179 = vadd.xlane.f32.xlu0 %v3178
    %v3180 = vpop.xlane.xlu0 %3179
    %v3181 = vsel %vm2625, %v2997, 0.0
    %3182 = vadd.xlane.f32.xlu0 %v3181
    %v3183 = vpop.xlane.xlu0 %3182
    %v3184 = vsel %vm2625, %v2999, 0.0
    %3185 = vadd.xlane.f32.xlu0 %v3184
    %v3186 = vpop.xlane.xlu0 %3185
    %v3187 = vsel %vm2625, %v3001, 0.0
    %3188 = vadd.xlane.f32.xlu0 %v3187
    %v3189 = vpop.xlane.xlu0 %3188
    %v3190 = vsel %vm2625, %v3003, 0.0
    %3191 = vadd.xlane.f32.xlu0 %v3190
    %v3192 = vpop.xlane.xlu0 %3191
    %v3193 = vsel %vm2625, %v3005, 0.0
    %3194 = vadd.xlane.f32.xlu0 %v3193
    %v3195 = vpop.xlane.xlu0 %3194
    %v3196 = vsel %vm2625, %v3007, 0.0
    %3197 = vadd.xlane.f32.xlu0 %v3196
    %v3198 = vpop.xlane.xlu0 %3197
    %v3199 = vsel %vm2625, %v3009, 0.0
    %3200 = vadd.xlane.f32.xlu0 %v3199
    %v3201 = vpop.xlane.xlu0 %3200
    %v3202 = vrcp.pop %v3012
    %v3203 = vrcp.pop %v3015
    %v3204 = vrcp.pop %v3018
    %v3205 = vrcp.pop %v3021
    %v3206 = vrcp.pop %v3024
    %v3207 = vrcp.pop %v3027
    %v3208 = vrcp.pop %v3030
    %v3209 = vrcp.pop %v3033
    %v3210 = vrcp.pop %v3036
    %v3211 = vrcp.pop %v3039
    %v3212 = vrcp.pop %v3042
    %v3213 = vrcp.pop %v3045
    %v3214 = vrcp.pop %v3048
    %v3215 = vrcp.pop %v3051
    %v3216 = vrcp.pop %v3054
    %v3217 = vrcp.pop %v3057
    %v3218 = vrcp.pop %v3060
    %v3219 = vrcp.pop %v3063
    %v3220 = vrcp.pop %v3066
    %v3221 = vrcp.pop %v3069
    %v3222 = vrcp.pop %v3072
    %v3223 = vrcp.pop %v3075
    %v3224 = vrcp.pop %v3078
    %v3225 = vrcp.pop %v3081
    %v3226 = vrcp.pop %v3084
    %v3227 = vrcp.pop %v3087
    %v3228 = vrcp.pop %v3090
    %v3229 = vrcp.pop %v3093
    %v3230 = vrcp.pop %v3096
    %v3231 = vrcp.pop %v3099
    %v3232 = vrcp.pop %v3102
    %v3233 = vrcp.pop %v3105
    %v3234 = vrcp.pop %v3108
    %v3235 = vrcp.pop %v3111
    %v3236 = vrcp.pop %v3114
    %v3237 = vrcp.pop %v3117
    %v3238 = vrcp.pop %v3120
    %v3239 = vrcp.pop %v3123
    %v3240 = vrcp.pop %v3126
    %v3241 = vrcp.pop %v3129
    %v3242 = vrcp.pop %v3132
    %v3243 = vrcp.pop %v3135
    %v3244 = vrcp.pop %v3138
    %v3245 = vrcp.pop %v3141
    %v3246 = vrcp.pop %v3144
    %v3247 = vrcp.pop %v3147
    %v3248 = vrcp.pop %v3150
    %v3249 = vrcp.pop %v3153
    %v3250 = vrcp.pop %v3156
    %v3251 = vrcp.pop %v3159
    %v3252 = vrcp.pop %v3162
    %v3253 = vrcp.pop %v3165
    %v3254 = vrcp.pop %v3168
    %v3255 = vrcp.pop %v3171
    %v3256 = vrcp.pop %v3174
    %v3257 = vrcp.pop %v3177
    %v3258 = vrcp.pop %v3180
    %v3259 = vrcp.pop %v3183
    %v3260 = vrcp.pop %v3186
    %v3261 = vrcp.pop %v3189
    %v3262 = vrcp.pop %v3192
    %v3263 = vrcp.pop %v3195
    %v3264 = vrcp.pop %v3198
    %v3265 = vrcp.pop %v3201
    %v3266 = vmul.f32 %v2883, %v3202
    %v3267 = vmul.f32 %v2885, %v3203
    %v3268 = vmul.f32 %v2887, %v3204
    %v3269 = vmul.f32 %v2889, %v3205
    %v3270 = vmul.f32 %v2891, %v3206
    %v3271 = vmul.f32 %v2893, %v3207
    %v3272 = vmul.f32 %v2895, %v3208
    %v3273 = vmul.f32 %v2897, %v3209
    %v3274 = vmul.f32 %v2899, %v3210
    %v3275 = vmul.f32 %v2901, %v3211
    %v3276 = vmul.f32 %v2903, %v3212
    %v3277 = vmul.f32 %v2905, %v3213
    %v3278 = vmul.f32 %v2907, %v3214
    %v3279 = vmul.f32 %v2909, %v3215
    %v3280 = vmul.f32 %v2911, %v3216
    %v3281 = vmul.f32 %v2913, %v3217
    %v3282 = vmul.f32 %v2915, %v3218
    %v3283 = vmul.f32 %v2917, %v3219
    %v3284 = vmul.f32 %v2919, %v3220
    %v3285 = vmul.f32 %v2921, %v3221
    %v3286 = vmul.f32 %v2923, %v3222
    %v3287 = vmul.f32 %v2925, %v3223
    %v3288 = vmul.f32 %v2927, %v3224
    %v3289 = vmul.f32 %v2929, %v3225
    %v3290 = vmul.f32 %v2931, %v3226
    %v3291 = vmul.f32 %v2933, %v3227
    %v3292 = vmul.f32 %v2935, %v3228
    %v3293 = vmul.f32 %v2937, %v3229
    %v3294 = vmul.f32 %v2939, %v3230
    %v3295 = vmul.f32 %v2941, %v3231
    %v3296 = vmul.f32 %v2943, %v3232
    %v3297 = vmul.f32 %v2945, %v3233
    %v3298 = vmul.f32 %v2947, %v3234
    %v3299 = vmul.f32 %v2949, %v3235
    %v3300 = vmul.f32 %v2951, %v3236
    %v3301 = vmul.f32 %v2953, %v3237
    %v3302 = vmul.f32 %v2955, %v3238
    %v3303 = vmul.f32 %v2957, %v3239
    %v3304 = vmul.f32 %v2959, %v3240
    %v3305 = vmul.f32 %v2961, %v3241
    %v3306 = vmul.f32 %v2963, %v3242
    %v3307 = vmul.f32 %v2965, %v3243
    %v3308 = vmul.f32 %v2967, %v3244
    %v3309 = vmul.f32 %v2969, %v3245
    %v3310 = vmul.f32 %v2971, %v3246
    %v3311 = vmul.f32 %v2973, %v3247
    %v3312 = vmul.f32 %v2975, %v3248
    %v3313 = vmul.f32 %v2977, %v3249
    %v3314 = vmul.f32 %v2979, %v3250
    %v3315 = vmul.f32 %v2981, %v3251
    %v3316 = vmul.f32 %v2983, %v3252
    %v3317 = vmul.f32 %v2985, %v3253
    %v3318 = vmul.f32 %v2987, %v3254
    %v3319 = vmul.f32 %v2989, %v3255
    %v3320 = vmul.f32 %v2991, %v3256
    %v3321 = vmul.f32 %v2993, %v3257
    %v3322 = vmul.f32 %v2995, %v3258
    %v3323 = vmul.f32 %v2997, %v3259
    %v3324 = vmul.f32 %v2999, %v3260
    %v3325 = vmul.f32 %v3001, %v3261
    %v3326 = vmul.f32 %v3003, %v3262
    %v3327 = vmul.f32 %v3005, %v3263
    %v3328 = vmul.f32 %v3007, %v3264
    %v3329 = vmul.f32 %v3009, %v3265
    %v3330 = vsub.f32 %v3266, 0.0025
    %v3331 = vsub.f32 %v3267, 0.0025
    %v3332 = vsub.f32 %v3268, 0.0025
    %v3333 = vsub.f32 %v3269, 0.0025
    %v3334 = vsub.f32 %v3270, 0.0025
    %v3335 = vsub.f32 %v3271, 0.0025
    %v3336 = vsub.f32 %v3272, 0.0025
    %v3337 = vsub.f32 %v3273, 0.0025
    %v3338 = vsub.f32 %v3274, 0.0025
    %v3339 = vsub.f32 %v3275, 0.0025
    %v3340 = vsub.f32 %v3276, 0.0025
    %v3341 = vsub.f32 %v3277, 0.0025
    %v3342 = vsub.f32 %v3278, 0.0025
    %v3343 = vsub.f32 %v3279, 0.0025
    %v3344 = vsub.f32 %v3280, 0.0025
    %v3345 = vsub.f32 %v3281, 0.0025
    %v3346 = vsub.f32 %v3282, 0.0025
    %v3347 = vsub.f32 %v3283, 0.0025
    %v3348 = vsub.f32 %v3284, 0.0025
    %v3349 = vsub.f32 %v3285, 0.0025
    %v3350 = vsub.f32 %v3286, 0.0025
    %v3351 = vsub.f32 %v3287, 0.0025
    %v3352 = vsub.f32 %v3288, 0.0025
    %v3353 = vsub.f32 %v3289, 0.0025
    %v3354 = vsub.f32 %v3290, 0.0025
    %v3355 = vsub.f32 %v3291, 0.0025
    %v3356 = vsub.f32 %v3292, 0.0025
    %v3357 = vsub.f32 %v3293, 0.0025
    %v3358 = vsub.f32 %v3294, 0.0025
    %v3359 = vsub.f32 %v3295, 0.0025
    %v3360 = vsub.f32 %v3296, 0.0025
    %v3361 = vsub.f32 %v3297, 0.0025
    %v3362 = vsub.f32 %v3298, 0.0025
    %v3363 = vsub.f32 %v3299, 0.0025
    %v3364 = vsub.f32 %v3300, 0.0025
    %v3365 = vsub.f32 %v3301, 0.0025
    %v3366 = vsub.f32 %v3302, 0.0025
    %v3367 = vsub.f32 %v3303, 0.0025
    %v3368 = vsub.f32 %v3304, 0.0025
    %v3369 = vsub.f32 %v3305, 0.0025
    %v3370 = vsub.f32 %v3306, 0.0025
    %v3371 = vsub.f32 %v3307, 0.0025
    %v3372 = vsub.f32 %v3308, 0.0025
    %v3373 = vsub.f32 %v3309, 0.0025
    %v3374 = vsub.f32 %v3310, 0.0025
    %v3375 = vsub.f32 %v3311, 0.0025
    %v3376 = vsub.f32 %v3312, 0.0025
    %v3377 = vsub.f32 %v3313, 0.0025
    %v3378 = vsub.f32 %v3314, 0.0025
    %v3379 = vsub.f32 %v3315, 0.0025
    %v3380 = vsub.f32 %v3316, 0.0025
    %v3381 = vsub.f32 %v3317, 0.0025
    %v3382 = vsub.f32 %v3318, 0.0025
    %v3383 = vsub.f32 %v3319, 0.0025
    %v3384 = vsub.f32 %v3320, 0.0025
    %v3385 = vsub.f32 %v3321, 0.0025
    %v3386 = vsub.f32 %v3322, 0.0025
    %v3387 = vsub.f32 %v3323, 0.0025
    %v3388 = vsub.f32 %v3324, 0.0025
    %v3389 = vsub.f32 %v3325, 0.0025
    %v3390 = vsub.f32 %v3326, 0.0025
    %v3391 = vsub.f32 %v3327, 0.0025
    %v3392 = vsub.f32 %v3328, 0.0025
    %v3393 = vsub.f32 %v3329, 0.0025
    %v3394 = vmax.f32 %v3330, 0.0
    %v3395 = vmax.f32 %v3331, 0.0
    %v3396 = vmax.f32 %v3332, 0.0
    %v3397 = vmax.f32 %v3333, 0.0
    %v3398 = vmax.f32 %v3334, 0.0
    %v3399 = vmax.f32 %v3335, 0.0
    %v3400 = vmax.f32 %v3336, 0.0
    %v3401 = vmax.f32 %v3337, 0.0
    %v3402 = vmax.f32 %v3338, 0.0
    %v3403 = vmax.f32 %v3339, 0.0
    %v3404 = vmax.f32 %v3340, 0.0
    %v3405 = vmax.f32 %v3341, 0.0
    %v3406 = vmax.f32 %v3342, 0.0
    %v3407 = vmax.f32 %v3343, 0.0
    %v3408 = vmax.f32 %v3344, 0.0
    %v3409 = vmax.f32 %v3345, 0.0
    %v3410 = vmax.f32 %v3346, 0.0
    %v3411 = vmax.f32 %v3347, 0.0
    %v3412 = vmax.f32 %v3348, 0.0
    %v3413 = vmax.f32 %v3349, 0.0
    %v3414 = vmax.f32 %v3350, 0.0
    %v3415 = vmax.f32 %v3351, 0.0
    %v3416 = vmax.f32 %v3352, 0.0
    %v3417 = vmax.f32 %v3353, 0.0
    %v3418 = vmax.f32 %v3354, 0.0
    %v3419 = vmax.f32 %v3355, 0.0
    %v3420 = vmax.f32 %v3356, 0.0
    %v3421 = vmax.f32 %v3357, 0.0
    %v3422 = vmax.f32 %v3358, 0.0
    %v3423 = vmax.f32 %v3359, 0.0
    %v3424 = vmax.f32 %v3360, 0.0
    %v3425 = vmax.f32 %v3361, 0.0
    %v3426 = vmax.f32 %v3362, 0.0
    %v3427 = vmax.f32 %v3363, 0.0
    %v3428 = vmax.f32 %v3364, 0.0
    %v3429 = vmax.f32 %v3365, 0.0
    %v3430 = vmax.f32 %v3366, 0.0
    %v3431 = vmax.f32 %v3367, 0.0
    %v3432 = vmax.f32 %v3368, 0.0
    %v3433 = vmax.f32 %v3369, 0.0
    %v3434 = vmax.f32 %v3370, 0.0
    %v3435 = vmax.f32 %v3371, 0.0
    %v3436 = vmax.f32 %v3372, 0.0
    %v3437 = vmax.f32 %v3373, 0.0
    %v3438 = vmax.f32 %v3374, 0.0
    %v3439 = vmax.f32 %v3375, 0.0
    %v3440 = vmax.f32 %v3376, 0.0
    %v3441 = vmax.f32 %v3377, 0.0
    %v3442 = vmax.f32 %v3378, 0.0
    %v3443 = vmax.f32 %v3379, 0.0
    %v3444 = vmax.f32 %v3380, 0.0
    %v3445 = vmax.f32 %v3381, 0.0
    %v3446 = vmax.f32 %v3382, 0.0
    %v3447 = vmax.f32 %v3383, 0.0
    %v3448 = vmax.f32 %v3384, 0.0
    %v3449 = vmax.f32 %v3385, 0.0
    %v3450 = vmax.f32 %v3386, 0.0
    %v3451 = vmax.f32 %v3387, 0.0
    %v3452 = vmax.f32 %v3388, 0.0
    %v3453 = vmax.f32 %v3389, 0.0
    %v3454 = vmax.f32 %v3390, 0.0
    %v3455 = vmax.f32 %v3391, 0.0
    %v3456 = vmax.f32 %v3392, 0.0
    %v3457 = vmax.f32 %v3393, 0.0
    %v3458 = vmul.f32 %v3394, %v3266
    %v3459 = vmul.f32 %v3395, %v3267
    %v3460 = vmul.f32 %v3396, %v3268
    %v3461 = vmul.f32 %v3397, %v3269
    %v3462 = vmul.f32 %v3398, %v3270
    %v3463 = vmul.f32 %v3399, %v3271
    %v3464 = vmul.f32 %v3400, %v3272
    %v3465 = vmul.f32 %v3401, %v3273
    %v3466 = vmul.f32 %v3402, %v3274
    %v3467 = vmul.f32 %v3403, %v3275
    %v3468 = vmul.f32 %v3404, %v3276
    %v3469 = vmul.f32 %v3405, %v3277
    %v3470 = vmul.f32 %v3406, %v3278
    %v3471 = vmul.f32 %v3407, %v3279
    %v3472 = vmul.f32 %v3408, %v3280
    %v3473 = vmul.f32 %v3409, %v3281
    %v3474 = vmul.f32 %v3410, %v3282
    %v3475 = vmul.f32 %v3411, %v3283
    %v3476 = vmul.f32 %v3412, %v3284
    %v3477 = vmul.f32 %v3413, %v3285
    %v3478 = vmul.f32 %v3414, %v3286
    %v3479 = vmul.f32 %v3415, %v3287
    %v3480 = vmul.f32 %v3416, %v3288
    %v3481 = vmul.f32 %v3417, %v3289
    %v3482 = vmul.f32 %v3418, %v3290
    %v3483 = vmul.f32 %v3419, %v3291
    %v3484 = vmul.f32 %v3420, %v3292
    %v3485 = vmul.f32 %v3421, %v3293
    %v3486 = vmul.f32 %v3422, %v3294
    %v3487 = vmul.f32 %v3423, %v3295
    %v3488 = vmul.f32 %v3424, %v3296
    %v3489 = vmul.f32 %v3425, %v3297
    %v3490 = vmul.f32 %v3426, %v3298
    %v3491 = vmul.f32 %v3427, %v3299
    %v3492 = vmul.f32 %v3428, %v3300
    %v3493 = vmul.f32 %v3429, %v3301
    %v3494 = vmul.f32 %v3430, %v3302
    %v3495 = vmul.f32 %v3431, %v3303
    %v3496 = vmul.f32 %v3432, %v3304
    %v3497 = vmul.f32 %v3433, %v3305
    %v3498 = vmul.f32 %v3434, %v3306
    %v3499 = vmul.f32 %v3435, %v3307
    %v3500 = vmul.f32 %v3436, %v3308
    %v3501 = vmul.f32 %v3437, %v3309
    %v3502 = vmul.f32 %v3438, %v3310
    %v3503 = vmul.f32 %v3439, %v3311
    %v3504 = vmul.f32 %v3440, %v3312
    %v3505 = vmul.f32 %v3441, %v3313
    %v3506 = vmul.f32 %v3442, %v3314
    %v3507 = vmul.f32 %v3443, %v3315
    %v3508 = vmul.f32 %v3444, %v3316
    %v3509 = vmul.f32 %v3445, %v3317
    %v3510 = vmul.f32 %v3446, %v3318
    %v3511 = vmul.f32 %v3447, %v3319
    %v3512 = vmul.f32 %v3448, %v3320
    %v3513 = vmul.f32 %v3449, %v3321
    %v3514 = vmul.f32 %v3450, %v3322
    %v3515 = vmul.f32 %v3451, %v3323
    %v3516 = vmul.f32 %v3452, %v3324
    %v3517 = vmul.f32 %v3453, %v3325
    %v3518 = vmul.f32 %v3454, %v3326
    %v3519 = vmul.f32 %v3455, %v3327
    %v3520 = vmul.f32 %v3456, %v3328
    %v3521 = vmul.f32 %v3457, %v3329
    %v3522 = vand.u32 2147483647, %v3330
    %v3523 = vand.u32 2147483647, %v3331
    %v3524 = vand.u32 2147483647, %v3332
    %v3525 = vand.u32 2147483647, %v3333
    %v3526 = vand.u32 2147483647, %v3334
    %v3527 = vand.u32 2147483647, %v3335
    %v3528 = vand.u32 2147483647, %v3336
    %v3529 = vand.u32 2147483647, %v3337
    %v3530 = vand.u32 2147483647, %v3338
    %v3531 = vand.u32 2147483647, %v3339
    %v3532 = vand.u32 2147483647, %v3340
    %v3533 = vand.u32 2147483647, %v3341
    %v3534 = vand.u32 2147483647, %v3342
    %v3535 = vand.u32 2147483647, %v3343
    %v3536 = vand.u32 2147483647, %v3344
    %v3537 = vand.u32 2147483647, %v3345
    %v3538 = vand.u32 2147483647, %v3346
    %v3539 = vand.u32 2147483647, %v3347
    %v3540 = vand.u32 2147483647, %v3348
    %v3541 = vand.u32 2147483647, %v3349
    %v3542 = vand.u32 2147483647, %v3350
    %v3543 = vand.u32 2147483647, %v3351
    %v3544 = vand.u32 2147483647, %v3352
    %v3545 = vand.u32 2147483647, %v3353
    %v3546 = vand.u32 2147483647, %v3354
    %v3547 = vand.u32 2147483647, %v3355
    %v3548 = vand.u32 2147483647, %v3356
    %v3549 = vand.u32 2147483647, %v3357
    %v3550 = vand.u32 2147483647, %v3358
    %v3551 = vand.u32 2147483647, %v3359
    %v3552 = vand.u32 2147483647, %v3360
    %v3553 = vand.u32 2147483647, %v3361
    %v3554 = vand.u32 2147483647, %v3362
    %v3555 = vand.u32 2147483647, %v3363
    %v3556 = vand.u32 2147483647, %v3364
    %v3557 = vand.u32 2147483647, %v3365
    %v3558 = vand.u32 2147483647, %v3366
    %v3559 = vand.u32 2147483647, %v3367
    %v3560 = vand.u32 2147483647, %v3368
    %v3561 = vand.u32 2147483647, %v3369
    %v3562 = vand.u32 2147483647, %v3370
    %v3563 = vand.u32 2147483647, %v3371
    %v3564 = vand.u32 2147483647, %v3372
    %v3565 = vand.u32 2147483647, %v3373
    %v3566 = vand.u32 2147483647, %v3374
    %v3567 = vand.u32 2147483647, %v3375
    %v3568 = vand.u32 2147483647, %v3376
    %v3569 = vand.u32 2147483647, %v3377
    %v3570 = vand.u32 2147483647, %v3378
    %v3571 = vand.u32 2147483647, %v3379
    %v3572 = vand.u32 2147483647, %v3380
    %v3573 = vand.u32 2147483647, %v3381
    %v3574 = vand.u32 2147483647, %v3382
    %v3575 = vand.u32 2147483647, %v3383
    %v3576 = vand.u32 2147483647, %v3384
    %v3577 = vand.u32 2147483647, %v3385
    %v3578 = vand.u32 2147483647, %v3386
    %v3579 = vand.u32 2147483647, %v3387
    %v3580 = vand.u32 2147483647, %v3388
    %v3581 = vand.u32 2147483647, %v3389
    %v3582 = vand.u32 2147483647, %v3390
    %v3583 = vand.u32 2147483647, %v3391
    %v3584 = vand.u32 2147483647, %v3392
    %v3585 = vand.u32 2147483647, %v3393
    %v3586 = vadd.f32 %v3522, 1e-12
    %v3587 = vadd.f32 %v3523, 1e-12
    %v3588 = vadd.f32 %v3524, 1e-12
    %v3589 = vadd.f32 %v3525, 1e-12
    %v3590 = vadd.f32 %v3526, 1e-12
    %v3591 = vadd.f32 %v3527, 1e-12
    %v3592 = vadd.f32 %v3528, 1e-12
    %v3593 = vadd.f32 %v3529, 1e-12
    %v3594 = vadd.f32 %v3530, 1e-12
    %v3595 = vadd.f32 %v3531, 1e-12
    %v3596 = vadd.f32 %v3532, 1e-12
    %v3597 = vadd.f32 %v3533, 1e-12
    %v3598 = vadd.f32 %v3534, 1e-12
    %v3599 = vadd.f32 %v3535, 1e-12
    %v3600 = vadd.f32 %v3536, 1e-12
    %v3601 = vadd.f32 %v3537, 1e-12
    %v3602 = vadd.f32 %v3538, 1e-12
    %v3603 = vadd.f32 %v3539, 1e-12
    %v3604 = vadd.f32 %v3540, 1e-12
    %v3605 = vadd.f32 %v3541, 1e-12
    %v3606 = vadd.f32 %v3542, 1e-12
    %v3607 = vadd.f32 %v3543, 1e-12
    %v3608 = vadd.f32 %v3544, 1e-12
    %v3609 = vadd.f32 %v3545, 1e-12
    %v3610 = vadd.f32 %v3546, 1e-12
    %v3611 = vadd.f32 %v3547, 1e-12
    %v3612 = vadd.f32 %v3548, 1e-12
    %v3613 = vadd.f32 %v3549, 1e-12
    %v3614 = vadd.f32 %v3550, 1e-12
    %v3615 = vadd.f32 %v3551, 1e-12
    %v3616 = vadd.f32 %v3552, 1e-12
    %v3617 = vadd.f32 %v3553, 1e-12
    %v3618 = vadd.f32 %v3554, 1e-12
    %v3619 = vadd.f32 %v3555, 1e-12
    %v3620 = vadd.f32 %v3556, 1e-12
    %v3621 = vadd.f32 %v3557, 1e-12
    %v3622 = vadd.f32 %v3558, 1e-12
    %v3623 = vadd.f32 %v3559, 1e-12
    %v3624 = vadd.f32 %v3560, 1e-12
    %v3625 = vadd.f32 %v3561, 1e-12
    %v3626 = vadd.f32 %v3562, 1e-12
    %v3627 = vadd.f32 %v3563, 1e-12
    %v3628 = vadd.f32 %v3564, 1e-12
    %v3629 = vadd.f32 %v3565, 1e-12
    %v3630 = vadd.f32 %v3566, 1e-12
    %v3631 = vadd.f32 %v3567, 1e-12
    %v3632 = vadd.f32 %v3568, 1e-12
    %v3633 = vadd.f32 %v3569, 1e-12
    %v3634 = vadd.f32 %v3570, 1e-12
    %v3635 = vadd.f32 %v3571, 1e-12
    %v3636 = vadd.f32 %v3572, 1e-12
    %v3637 = vadd.f32 %v3573, 1e-12
    %v3638 = vadd.f32 %v3574, 1e-12
    %v3639 = vadd.f32 %v3575, 1e-12
    %v3640 = vadd.f32 %v3576, 1e-12
    %v3641 = vadd.f32 %v3577, 1e-12
    %v3642 = vadd.f32 %v3578, 1e-12
    %v3643 = vadd.f32 %v3579, 1e-12
    %v3644 = vadd.f32 %v3580, 1e-12
    %v3645 = vadd.f32 %v3581, 1e-12
    %v3646 = vadd.f32 %v3582, 1e-12
    %v3647 = vadd.f32 %v3583, 1e-12
    %v3648 = vadd.f32 %v3584, 1e-12
    %v3649 = vadd.f32 %v3585, 1e-12
    %v3650 = vrcp.pop %v3586
    %v3651 = vrcp.pop %v3587
    %v3652 = vrcp.pop %v3588
    %v3653 = vrcp.pop %v3589
    %v3654 = vrcp.pop %v3590
    %v3655 = vrcp.pop %v3591
    %v3656 = vrcp.pop %v3592
    %v3657 = vrcp.pop %v3593
    %v3658 = vrcp.pop %v3594
    %v3659 = vrcp.pop %v3595
    %v3660 = vrcp.pop %v3596
    %v3661 = vrcp.pop %v3597
    %v3662 = vrcp.pop %v3598
    %v3663 = vrcp.pop %v3599
    %v3664 = vrcp.pop %v3600
    %v3665 = vrcp.pop %v3601
    %v3666 = vrcp.pop %v3602
    %v3667 = vrcp.pop %v3603
    %v3668 = vrcp.pop %v3604
    %v3669 = vrcp.pop %v3605
    %v3670 = vrcp.pop %v3606
    %v3671 = vrcp.pop %v3607
    %v3672 = vrcp.pop %v3608
    %v3673 = vrcp.pop %v3609
    %v3674 = vrcp.pop %v3610
    %v3675 = vrcp.pop %v3611
    %v3676 = vrcp.pop %v3612
    %v3677 = vrcp.pop %v3613
    %v3678 = vrcp.pop %v3614
    %v3679 = vrcp.pop %v3615
    %v3680 = vrcp.pop %v3616
    %v3681 = vrcp.pop %v3617
    %v3682 = vrcp.pop %v3618
    %v3683 = vrcp.pop %v3619
    %v3684 = vrcp.pop %v3620
    %v3685 = vrcp.pop %v3621
    %v3686 = vrcp.pop %v3622
    %v3687 = vrcp.pop %v3623
    %v3688 = vrcp.pop %v3624
    %v3689 = vrcp.pop %v3625
    %v3690 = vrcp.pop %v3626
    %v3691 = vrcp.pop %v3627
    %v3692 = vrcp.pop %v3628
    %v3693 = vrcp.pop %v3629
    %v3694 = vrcp.pop %v3630
    %v3695 = vrcp.pop %v3631
    %v3696 = vrcp.pop %v3632
    %v3697 = vrcp.pop %v3633
    %v3698 = vrcp.pop %v3634
    %v3699 = vrcp.pop %v3635
    %v3700 = vrcp.pop %v3636
    %v3701 = vrcp.pop %v3637
    %v3702 = vrcp.pop %v3638
    %v3703 = vrcp.pop %v3639
    %v3704 = vrcp.pop %v3640
    %v3705 = vrcp.pop %v3641
    %v3706 = vrcp.pop %v3642
    %v3707 = vrcp.pop %v3643
    %v3708 = vrcp.pop %v3644
    %v3709 = vrcp.pop %v3645
    %v3710 = vrcp.pop %v3646
    %v3711 = vrcp.pop %v3647
    %v3712 = vrcp.pop %v3648
    %v3713 = vrcp.pop %v3649
    %v3714 = vmul.f32 %v3458, %v3650
    %v3715 = vmul.f32 %v3459, %v3651
    %v3716 = vmul.f32 %v3460, %v3652
    %v3717 = vmul.f32 %v3461, %v3653
    %v3718 = vmul.f32 %v3462, %v3654
    %v3719 = vmul.f32 %v3463, %v3655
    %v3720 = vmul.f32 %v3464, %v3656
    %v3721 = vmul.f32 %v3465, %v3657
    %v3722 = vmul.f32 %v3466, %v3658
    %v3723 = vmul.f32 %v3467, %v3659
    %v3724 = vmul.f32 %v3468, %v3660
    %v3725 = vmul.f32 %v3469, %v3661
    %v3726 = vmul.f32 %v3470, %v3662
    %v3727 = vmul.f32 %v3471, %v3663
    %v3728 = vmul.f32 %v3472, %v3664
    %v3729 = vmul.f32 %v3473, %v3665
    %v3730 = vmul.f32 %v3474, %v3666
    %v3731 = vmul.f32 %v3475, %v3667
    %v3732 = vmul.f32 %v3476, %v3668
    %v3733 = vmul.f32 %v3477, %v3669
    %v3734 = vmul.f32 %v3478, %v3670
    %v3735 = vmul.f32 %v3479, %v3671
    %v3736 = vmul.f32 %v3480, %v3672
    %v3737 = vmul.f32 %v3481, %v3673
    %v3738 = vmul.f32 %v3482, %v3674
    %v3739 = vmul.f32 %v3483, %v3675
    %v3740 = vmul.f32 %v3484, %v3676
    %v3741 = vmul.f32 %v3485, %v3677
    %v3742 = vmul.f32 %v3486, %v3678
    %v3743 = vmul.f32 %v3487, %v3679
    %v3744 = vmul.f32 %v3488, %v3680
    %v3745 = vmul.f32 %v3489, %v3681
    %v3746 = vmul.f32 %v3490, %v3682
    %v3747 = vmul.f32 %v3491, %v3683
    %v3748 = vmul.f32 %v3492, %v3684
    %v3749 = vmul.f32 %v3493, %v3685
    %v3750 = vmul.f32 %v3494, %v3686
    %v3751 = vmul.f32 %v3495, %v3687
    %v3752 = vmul.f32 %v3496, %v3688
    %v3753 = vmul.f32 %v3497, %v3689
    %v3754 = vmul.f32 %v3498, %v3690
    %v3755 = vmul.f32 %v3499, %v3691
    %v3756 = vmul.f32 %v3500, %v3692
    %v3757 = vmul.f32 %v3501, %v3693
    %v3758 = vmul.f32 %v3502, %v3694
    %v3759 = vmul.f32 %v3503, %v3695
    %v3760 = vmul.f32 %v3504, %v3696
    %v3761 = vmul.f32 %v3505, %v3697
    %v3762 = vmul.f32 %v3506, %v3698
    %v3763 = vmul.f32 %v3507, %v3699
    %v3764 = vmul.f32 %v3508, %v3700
    %v3765 = vmul.f32 %v3509, %v3701
    %v3766 = vmul.f32 %v3510, %v3702
    %v3767 = vmul.f32 %v3511, %v3703
    %v3768 = vmul.f32 %v3512, %v3704
    %v3769 = vmul.f32 %v3513, %v3705
    %v3770 = vmul.f32 %v3514, %v3706
    %v3771 = vmul.f32 %v3515, %v3707
    %v3772 = vmul.f32 %v3516, %v3708
    %v3773 = vmul.f32 %v3517, %v3709
    %v3774 = vmul.f32 %v3518, %v3710
    %v3775 = vmul.f32 %v3519, %v3711
    %v3776 = vmul.f32 %v3520, %v3712
    %v3777 = vmul.f32 %v3521, %v3713
    %v3778 = vand.u32 2147483647, %v3714
    %v3779 = vand.u32 2147483647, %v3715
    %v3780 = vand.u32 2147483647, %v3716
    %v3781 = vand.u32 2147483647, %v3717
    %v3782 = vand.u32 2147483647, %v3718
    %v3783 = vand.u32 2147483647, %v3719
    %v3784 = vand.u32 2147483647, %v3720
    %v3785 = vand.u32 2147483647, %v3721
    %v3786 = vand.u32 2147483647, %v3722
    %v3787 = vand.u32 2147483647, %v3723
    %v3788 = vand.u32 2147483647, %v3724
    %v3789 = vand.u32 2147483647, %v3725
    %v3790 = vand.u32 2147483647, %v3726
    %v3791 = vand.u32 2147483647, %v3727
    %v3792 = vand.u32 2147483647, %v3728
    %v3793 = vand.u32 2147483647, %v3729
    %v3794 = vand.u32 2147483647, %v3730
    %v3795 = vand.u32 2147483647, %v3731
    %v3796 = vand.u32 2147483647, %v3732
    %v3797 = vand.u32 2147483647, %v3733
    %v3798 = vand.u32 2147483647, %v3734
    %v3799 = vand.u32 2147483647, %v3735
    %v3800 = vand.u32 2147483647, %v3736
    %v3801 = vand.u32 2147483647, %v3737
    %v3802 = vand.u32 2147483647, %v3738
    %v3803 = vand.u32 2147483647, %v3739
    %v3804 = vand.u32 2147483647, %v3740
    %v3805 = vand.u32 2147483647, %v3741
    %v3806 = vand.u32 2147483647, %v3742
    %v3807 = vand.u32 2147483647, %v3743
    %v3808 = vand.u32 2147483647, %v3744
    %v3809 = vand.u32 2147483647, %v3745
    %v3810 = vand.u32 2147483647, %v3746
    %v3811 = vand.u32 2147483647, %v3747
    %v3812 = vand.u32 2147483647, %v3748
    %v3813 = vand.u32 2147483647, %v3749
    %v3814 = vand.u32 2147483647, %v3750
    %v3815 = vand.u32 2147483647, %v3751
    %v3816 = vand.u32 2147483647, %v3752
    %v3817 = vand.u32 2147483647, %v3753
    %v3818 = vand.u32 2147483647, %v3754
    %v3819 = vand.u32 2147483647, %v3755
    %v3820 = vand.u32 2147483647, %v3756
    %v3821 = vand.u32 2147483647, %v3757
    %v3822 = vand.u32 2147483647, %v3758
    %v3823 = vand.u32 2147483647, %v3759
    %v3824 = vand.u32 2147483647, %v3760
    %v3825 = vand.u32 2147483647, %v3761
    %v3826 = vand.u32 2147483647, %v3762
    %v3827 = vand.u32 2147483647, %v3763
    %v3828 = vand.u32 2147483647, %v3764
    %v3829 = vand.u32 2147483647, %v3765
    %v3830 = vand.u32 2147483647, %v3766
    %v3831 = vand.u32 2147483647, %v3767
    %v3832 = vand.u32 2147483647, %v3768
    %v3833 = vand.u32 2147483647, %v3769
    %v3834 = vand.u32 2147483647, %v3770
    %v3835 = vand.u32 2147483647, %v3771
    %v3836 = vand.u32 2147483647, %v3772
    %v3837 = vand.u32 2147483647, %v3773
    %v3838 = vand.u32 2147483647, %v3774
    %v3839 = vand.u32 2147483647, %v3775
    %v3840 = vand.u32 2147483647, %v3776
    %v3841 = vand.u32 2147483647, %v3777
    %v3842 = vsel %vm2625, %v3778, 0.0
    %3843 = vadd.xlane.f32.xlu0 %v3842
    %v3844 = vpop.xlane.xlu0 %3843
    %v3845 = vsel %vm2625, %v3779, 0.0
    %3846 = vadd.xlane.f32.xlu0 %v3845
    %v3847 = vpop.xlane.xlu0 %3846
    %v3848 = vsel %vm2625, %v3780, 0.0
    %3849 = vadd.xlane.f32.xlu0 %v3848
    %v3850 = vpop.xlane.xlu0 %3849
    %v3851 = vsel %vm2625, %v3781, 0.0
    %3852 = vadd.xlane.f32.xlu0 %v3851
    %v3853 = vpop.xlane.xlu0 %3852
    %v3854 = vsel %vm2625, %v3782, 0.0
    %3855 = vadd.xlane.f32.xlu0 %v3854
    %v3856 = vpop.xlane.xlu0 %3855
    %v3857 = vsel %vm2625, %v3783, 0.0
    %3858 = vadd.xlane.f32.xlu0 %v3857
    %v3859 = vpop.xlane.xlu0 %3858
    %v3860 = vsel %vm2625, %v3784, 0.0
    %3861 = vadd.xlane.f32.xlu0 %v3860
    %v3862 = vpop.xlane.xlu0 %3861
    %v3863 = vsel %vm2625, %v3785, 0.0
    %3864 = vadd.xlane.f32.xlu0 %v3863
    %v3865 = vpop.xlane.xlu0 %3864
    %v3866 = vsel %vm2625, %v3786, 0.0
    %3867 = vadd.xlane.f32.xlu0 %v3866
    %v3868 = vpop.xlane.xlu0 %3867
    %v3869 = vsel %vm2625, %v3787, 0.0
    %3870 = vadd.xlane.f32.xlu0 %v3869
    %v3871 = vpop.xlane.xlu0 %3870
    %v3872 = vsel %vm2625, %v3788, 0.0
    %3873 = vadd.xlane.f32.xlu0 %v3872
    %v3874 = vpop.xlane.xlu0 %3873
    %v3875 = vsel %vm2625, %v3789, 0.0
    %3876 = vadd.xlane.f32.xlu0 %v3875
    %v3877 = vpop.xlane.xlu0 %3876
    %v3878 = vsel %vm2625, %v3790, 0.0
    %3879 = vadd.xlane.f32.xlu0 %v3878
    %v3880 = vpop.xlane.xlu0 %3879
    %v3881 = vsel %vm2625, %v3791, 0.0
    %3882 = vadd.xlane.f32.xlu0 %v3881
    %v3883 = vpop.xlane.xlu0 %3882
    %v3884 = vsel %vm2625, %v3792, 0.0
    %3885 = vadd.xlane.f32.xlu0 %v3884
    %v3886 = vpop.xlane.xlu0 %3885
    %v3887 = vsel %vm2625, %v3793, 0.0
    %3888 = vadd.xlane.f32.xlu0 %v3887
    %v3889 = vpop.xlane.xlu0 %3888
    %v3890 = vsel %vm2625, %v3794, 0.0
    %3891 = vadd.xlane.f32.xlu0 %v3890
    %v3892 = vpop.xlane.xlu0 %3891
    %v3893 = vsel %vm2625, %v3795, 0.0
    %3894 = vadd.xlane.f32.xlu0 %v3893
    %v3895 = vpop.xlane.xlu0 %3894
    %v3896 = vsel %vm2625, %v3796, 0.0
    %3897 = vadd.xlane.f32.xlu0 %v3896
    %v3898 = vpop.xlane.xlu0 %3897
    %v3899 = vsel %vm2625, %v3797, 0.0
    %3900 = vadd.xlane.f32.xlu0 %v3899
    %v3901 = vpop.xlane.xlu0 %3900
    %v3902 = vsel %vm2625, %v3798, 0.0
    %3903 = vadd.xlane.f32.xlu0 %v3902
    %v3904 = vpop.xlane.xlu0 %3903
    %v3905 = vsel %vm2625, %v3799, 0.0
    %3906 = vadd.xlane.f32.xlu0 %v3905
    %v3907 = vpop.xlane.xlu0 %3906
    %v3908 = vsel %vm2625, %v3800, 0.0
    %3909 = vadd.xlane.f32.xlu0 %v3908
    %v3910 = vpop.xlane.xlu0 %3909
    %v3911 = vsel %vm2625, %v3801, 0.0
    %3912 = vadd.xlane.f32.xlu0 %v3911
    %v3913 = vpop.xlane.xlu0 %3912
    %v3914 = vsel %vm2625, %v3802, 0.0
    %3915 = vadd.xlane.f32.xlu0 %v3914
    %v3916 = vpop.xlane.xlu0 %3915
    %v3917 = vsel %vm2625, %v3803, 0.0
    %3918 = vadd.xlane.f32.xlu0 %v3917
    %v3919 = vpop.xlane.xlu0 %3918
    %v3920 = vsel %vm2625, %v3804, 0.0
    %3921 = vadd.xlane.f32.xlu0 %v3920
    %v3922 = vpop.xlane.xlu0 %3921
    %v3923 = vsel %vm2625, %v3805, 0.0
    %3924 = vadd.xlane.f32.xlu0 %v3923
    %v3925 = vpop.xlane.xlu0 %3924
    %v3926 = vsel %vm2625, %v3806, 0.0
    %3927 = vadd.xlane.f32.xlu0 %v3926
    %v3928 = vpop.xlane.xlu0 %3927
    %v3929 = vsel %vm2625, %v3807, 0.0
    %3930 = vadd.xlane.f32.xlu0 %v3929
    %v3931 = vpop.xlane.xlu0 %3930
    %v3932 = vsel %vm2625, %v3808, 0.0
    %3933 = vadd.xlane.f32.xlu0 %v3932
    %v3934 = vpop.xlane.xlu0 %3933
    %v3935 = vsel %vm2625, %v3809, 0.0
    %3936 = vadd.xlane.f32.xlu0 %v3935
    %v3937 = vpop.xlane.xlu0 %3936
    %v3938 = vsel %vm2625, %v3810, 0.0
    %3939 = vadd.xlane.f32.xlu0 %v3938
    %v3940 = vpop.xlane.xlu0 %3939
    %v3941 = vsel %vm2625, %v3811, 0.0
    %3942 = vadd.xlane.f32.xlu0 %v3941
    %v3943 = vpop.xlane.xlu0 %3942
    %v3944 = vsel %vm2625, %v3812, 0.0
    %3945 = vadd.xlane.f32.xlu0 %v3944
    %v3946 = vpop.xlane.xlu0 %3945
    %v3947 = vsel %vm2625, %v3813, 0.0
    %3948 = vadd.xlane.f32.xlu0 %v3947
    %v3949 = vpop.xlane.xlu0 %3948
    %v3950 = vsel %vm2625, %v3814, 0.0
    %3951 = vadd.xlane.f32.xlu0 %v3950
    %v3952 = vpop.xlane.xlu0 %3951
    %v3953 = vsel %vm2625, %v3815, 0.0
    %3954 = vadd.xlane.f32.xlu0 %v3953
    %v3955 = vpop.xlane.xlu0 %3954
    %v3956 = vsel %vm2625, %v3816, 0.0
    %3957 = vadd.xlane.f32.xlu0 %v3956
    %v3958 = vpop.xlane.xlu0 %3957
    %v3959 = vsel %vm2625, %v3817, 0.0
    %3960 = vadd.xlane.f32.xlu0 %v3959
    %v3961 = vpop.xlane.xlu0 %3960
    %v3962 = vsel %vm2625, %v3818, 0.0
    %3963 = vadd.xlane.f32.xlu0 %v3962
    %v3964 = vpop.xlane.xlu0 %3963
    %v3965 = vsel %vm2625, %v3819, 0.0
    %3966 = vadd.xlane.f32.xlu0 %v3965
    %v3967 = vpop.xlane.xlu0 %3966
    %v3968 = vsel %vm2625, %v3820, 0.0
    %3969 = vadd.xlane.f32.xlu0 %v3968
    %v3970 = vpop.xlane.xlu0 %3969
    %v3971 = vsel %vm2625, %v3821, 0.0
    %3972 = vadd.xlane.f32.xlu0 %v3971
    %v3973 = vpop.xlane.xlu0 %3972
    %v3974 = vsel %vm2625, %v3822, 0.0
    %3975 = vadd.xlane.f32.xlu0 %v3974
    %v3976 = vpop.xlane.xlu0 %3975
    %v3977 = vsel %vm2625, %v3823, 0.0
    %3978 = vadd.xlane.f32.xlu0 %v3977
    %v3979 = vpop.xlane.xlu0 %3978
    %v3980 = vsel %vm2625, %v3824, 0.0
    %3981 = vadd.xlane.f32.xlu0 %v3980
    %v3982 = vpop.xlane.xlu0 %3981
    %v3983 = vsel %vm2625, %v3825, 0.0
    %3984 = vadd.xlane.f32.xlu0 %v3983
    %v3985 = vpop.xlane.xlu0 %3984
    %v3986 = vsel %vm2625, %v3826, 0.0
    %3987 = vadd.xlane.f32.xlu0 %v3986
    %v3988 = vpop.xlane.xlu0 %3987
    %v3989 = vsel %vm2625, %v3827, 0.0
    %3990 = vadd.xlane.f32.xlu0 %v3989
    %v3991 = vpop.xlane.xlu0 %3990
    %v3992 = vsel %vm2625, %v3828, 0.0
    %3993 = vadd.xlane.f32.xlu0 %v3992
    %v3994 = vpop.xlane.xlu0 %3993
    %v3995 = vsel %vm2625, %v3829, 0.0
    %3996 = vadd.xlane.f32.xlu0 %v3995
    %v3997 = vpop.xlane.xlu0 %3996
    %v3998 = vsel %vm2625, %v3830, 0.0
    %3999 = vadd.xlane.f32.xlu0 %v3998
    %v4000 = vpop.xlane.xlu0 %3999
    %v4001 = vsel %vm2625, %v3831, 0.0
    %4002 = vadd.xlane.f32.xlu0 %v4001
    %v4003 = vpop.xlane.xlu0 %4002
    %v4004 = vsel %vm2625, %v3832, 0.0
    %4005 = vadd.xlane.f32.xlu0 %v4004
    %v4006 = vpop.xlane.xlu0 %4005
    %v4007 = vsel %vm2625, %v3833, 0.0
    %4008 = vadd.xlane.f32.xlu0 %v4007
    %v4009 = vpop.xlane.xlu0 %4008
    %v4010 = vsel %vm2625, %v3834, 0.0
    %4011 = vadd.xlane.f32.xlu0 %v4010
    %v4012 = vpop.xlane.xlu0 %4011
    %v4013 = vsel %vm2625, %v3835, 0.0
    %4014 = vadd.xlane.f32.xlu0 %v4013
    %v4015 = vpop.xlane.xlu0 %4014
    %v4016 = vsel %vm2625, %v3836, 0.0
    %4017 = vadd.xlane.f32.xlu0 %v4016
    %v4018 = vpop.xlane.xlu0 %4017
    %v4019 = vsel %vm2625, %v3837, 0.0
    %4020 = vadd.xlane.f32.xlu0 %v4019
    %v4021 = vpop.xlane.xlu0 %4020
    %v4022 = vsel %vm2625, %v3838, 0.0
    %4023 = vadd.xlane.f32.xlu0 %v4022
    %v4024 = vpop.xlane.xlu0 %4023
    %v4025 = vsel %vm2625, %v3839, 0.0
    %4026 = vadd.xlane.f32.xlu0 %v4025
    %v4027 = vpop.xlane.xlu0 %4026
    %v4028 = vsel %vm2625, %v3840, 0.0
    %4029 = vadd.xlane.f32.xlu0 %v4028
    %v4030 = vpop.xlane.xlu0 %4029
    %v4031 = vsel %vm2625, %v3841, 0.0
    %4032 = vadd.xlane.f32.xlu0 %v4031
    %v4033 = vpop.xlane.xlu0 %4032
    %v4034 = vmax.f32 %v3844, 1e-12
    %v4035 = vmax.f32 %v3847, 1e-12
    %v4036 = vmax.f32 %v3850, 1e-12
    %v4037 = vmax.f32 %v3853, 1e-12
    %v4038 = vmax.f32 %v3856, 1e-12
    %v4039 = vmax.f32 %v3859, 1e-12
    %v4040 = vmax.f32 %v3862, 1e-12
    %v4041 = vmax.f32 %v3865, 1e-12
    %v4042 = vmax.f32 %v3868, 1e-12
    %v4043 = vmax.f32 %v3871, 1e-12
    %v4044 = vmax.f32 %v3874, 1e-12
    %v4045 = vmax.f32 %v3877, 1e-12
    %v4046 = vmax.f32 %v3880, 1e-12
    %v4047 = vmax.f32 %v3883, 1e-12
    %v4048 = vmax.f32 %v3886, 1e-12
    %v4049 = vmax.f32 %v3889, 1e-12
    %v4050 = vmax.f32 %v3892, 1e-12
    %v4051 = vmax.f32 %v3895, 1e-12
    %v4052 = vmax.f32 %v3898, 1e-12
    %v4053 = vmax.f32 %v3901, 1e-12
    %v4054 = vmax.f32 %v3904, 1e-12
    %v4055 = vmax.f32 %v3907, 1e-12
    %v4056 = vmax.f32 %v3910, 1e-12
    %v4057 = vmax.f32 %v3913, 1e-12
    %v4058 = vmax.f32 %v3916, 1e-12
    %v4059 = vmax.f32 %v3919, 1e-12
    %v4060 = vmax.f32 %v3922, 1e-12
    %v4061 = vmax.f32 %v3925, 1e-12
    %v4062 = vmax.f32 %v3928, 1e-12
    %v4063 = vmax.f32 %v3931, 1e-12
    %v4064 = vmax.f32 %v3934, 1e-12
    %v4065 = vmax.f32 %v3937, 1e-12
    %v4066 = vmax.f32 %v3940, 1e-12
    %v4067 = vmax.f32 %v3943, 1e-12
    %v4068 = vmax.f32 %v3946, 1e-12
    %v4069 = vmax.f32 %v3949, 1e-12
    %v4070 = vmax.f32 %v3952, 1e-12
    %v4071 = vmax.f32 %v3955, 1e-12
    %v4072 = vmax.f32 %v3958, 1e-12
    %v4073 = vmax.f32 %v3961, 1e-12
    %v4074 = vmax.f32 %v3964, 1e-12
    %v4075 = vmax.f32 %v3967, 1e-12
    %v4076 = vmax.f32 %v3970, 1e-12
    %v4077 = vmax.f32 %v3973, 1e-12
    %v4078 = vmax.f32 %v3976, 1e-12
    %v4079 = vmax.f32 %v3979, 1e-12
    %v4080 = vmax.f32 %v3982, 1e-12
    %v4081 = vmax.f32 %v3985, 1e-12
    %v4082 = vmax.f32 %v3988, 1e-12
    %v4083 = vmax.f32 %v3991, 1e-12
    %v4084 = vmax.f32 %v3994, 1e-12
    %v4085 = vmax.f32 %v3997, 1e-12
    %v4086 = vmax.f32 %v4000, 1e-12
    %v4087 = vmax.f32 %v4003, 1e-12
    %v4088 = vmax.f32 %v4006, 1e-12
    %v4089 = vmax.f32 %v4009, 1e-12
    %v4090 = vmax.f32 %v4012, 1e-12
    %v4091 = vmax.f32 %v4015, 1e-12
    %v4092 = vmax.f32 %v4018, 1e-12
    %v4093 = vmax.f32 %v4021, 1e-12
    %v4094 = vmax.f32 %v4024, 1e-12
    %v4095 = vmax.f32 %v4027, 1e-12
    %v4096 = vmax.f32 %v4030, 1e-12
    %v4097 = vmax.f32 %v4033, 1e-12
    %v4098 = vrcp.pop %v4034
    %v4099 = vrcp.pop %v4035
    %v4100 = vrcp.pop %v4036
    %v4101 = vrcp.pop %v4037
    %v4102 = vrcp.pop %v4038
    %v4103 = vrcp.pop %v4039
    %v4104 = vrcp.pop %v4040
    %v4105 = vrcp.pop %v4041
    %v4106 = vrcp.pop %v4042
    %v4107 = vrcp.pop %v4043
    %v4108 = vrcp.pop %v4044
    %v4109 = vrcp.pop %v4045
    %v4110 = vrcp.pop %v4046
    %v4111 = vrcp.pop %v4047
    %v4112 = vrcp.pop %v4048
    %v4113 = vrcp.pop %v4049
    %v4114 = vrcp.pop %v4050
    %v4115 = vrcp.pop %v4051
    %v4116 = vrcp.pop %v4052
    %v4117 = vrcp.pop %v4053
    %v4118 = vrcp.pop %v4054
    %v4119 = vrcp.pop %v4055
    %v4120 = vrcp.pop %v4056
    %v4121 = vrcp.pop %v4057
    %v4122 = vrcp.pop %v4058
    %v4123 = vrcp.pop %v4059
    %v4124 = vrcp.pop %v4060
    %v4125 = vrcp.pop %v4061
    %v4126 = vrcp.pop %v4062
    %v4127 = vrcp.pop %v4063
    %v4128 = vrcp.pop %v4064
    %v4129 = vrcp.pop %v4065
    %v4130 = vrcp.pop %v4066
    %v4131 = vrcp.pop %v4067
    %v4132 = vrcp.pop %v4068
    %v4133 = vrcp.pop %v4069
    %v4134 = vrcp.pop %v4070
    %v4135 = vrcp.pop %v4071
    %v4136 = vrcp.pop %v4072
    %v4137 = vrcp.pop %v4073
    %v4138 = vrcp.pop %v4074
    %v4139 = vrcp.pop %v4075
    %v4140 = vrcp.pop %v4076
    %v4141 = vrcp.pop %v4077
    %v4142 = vrcp.pop %v4078
    %v4143 = vrcp.pop %v4079
    %v4144 = vrcp.pop %v4080
    %v4145 = vrcp.pop %v4081
    %v4146 = vrcp.pop %v4082
    %v4147 = vrcp.pop %v4083
    %v4148 = vrcp.pop %v4084
    %v4149 = vrcp.pop %v4085
    %v4150 = vrcp.pop %v4086
    %v4151 = vrcp.pop %v4087
    %v4152 = vrcp.pop %v4088
    %v4153 = vrcp.pop %v4089
    %v4154 = vrcp.pop %v4090
    %v4155 = vrcp.pop %v4091
    %v4156 = vrcp.pop %v4092
    %v4157 = vrcp.pop %v4093
    %v4158 = vrcp.pop %v4094
    %v4159 = vrcp.pop %v4095
    %v4160 = vrcp.pop %v4096
    %v4161 = vrcp.pop %v4097
    %v4162 = vmul.f32 %v3714, %v4098
    %v4163 = vmul.f32 %v3715, %v4099
    %v4164 = vmul.f32 %v3716, %v4100
    %v4165 = vmul.f32 %v3717, %v4101
    %v4166 = vmul.f32 %v3718, %v4102
    %v4167 = vmul.f32 %v3719, %v4103
    %v4168 = vmul.f32 %v3720, %v4104
    %v4169 = vmul.f32 %v3721, %v4105
    %v4170 = vmul.f32 %v3722, %v4106
    %v4171 = vmul.f32 %v3723, %v4107
    %v4172 = vmul.f32 %v3724, %v4108
    %v4173 = vmul.f32 %v3725, %v4109
    %v4174 = vmul.f32 %v3726, %v4110
    %v4175 = vmul.f32 %v3727, %v4111
    %v4176 = vmul.f32 %v3728, %v4112
    %v4177 = vmul.f32 %v3729, %v4113
    %v4178 = vmul.f32 %v3730, %v4114
    %v4179 = vmul.f32 %v3731, %v4115
    %v4180 = vmul.f32 %v3732, %v4116
    %v4181 = vmul.f32 %v3733, %v4117
    %v4182 = vmul.f32 %v3734, %v4118
    %v4183 = vmul.f32 %v3735, %v4119
    %v4184 = vmul.f32 %v3736, %v4120
    %v4185 = vmul.f32 %v3737, %v4121
    %v4186 = vmul.f32 %v3738, %v4122
    %v4187 = vmul.f32 %v3739, %v4123
    %v4188 = vmul.f32 %v3740, %v4124
    %v4189 = vmul.f32 %v3741, %v4125
    %v4190 = vmul.f32 %v3742, %v4126
    %v4191 = vmul.f32 %v3743, %v4127
    %v4192 = vmul.f32 %v3744, %v4128
    %v4193 = vmul.f32 %v3745, %v4129
    %v4194 = vmul.f32 %v3746, %v4130
    %v4195 = vmul.f32 %v3747, %v4131
    %v4196 = vmul.f32 %v3748, %v4132
    %v4197 = vmul.f32 %v3749, %v4133
    %v4198 = vmul.f32 %v3750, %v4134
    %v4199 = vmul.f32 %v3751, %v4135
    %v4200 = vmul.f32 %v3752, %v4136
    %v4201 = vmul.f32 %v3753, %v4137
    %v4202 = vmul.f32 %v3754, %v4138
    %v4203 = vmul.f32 %v3755, %v4139
    %v4204 = vmul.f32 %v3756, %v4140
    %v4205 = vmul.f32 %v3757, %v4141
    %v4206 = vmul.f32 %v3758, %v4142
    %v4207 = vmul.f32 %v3759, %v4143
    %v4208 = vmul.f32 %v3760, %v4144
    %v4209 = vmul.f32 %v3761, %v4145
    %v4210 = vmul.f32 %v3762, %v4146
    %v4211 = vmul.f32 %v3763, %v4147
    %v4212 = vmul.f32 %v3764, %v4148
    %v4213 = vmul.f32 %v3765, %v4149
    %v4214 = vmul.f32 %v3766, %v4150
    %v4215 = vmul.f32 %v3767, %v4151
    %v4216 = vmul.f32 %v3768, %v4152
    %v4217 = vmul.f32 %v3769, %v4153
    %v4218 = vmul.f32 %v3770, %v4154
    %v4219 = vmul.f32 %v3771, %v4155
    %v4220 = vmul.f32 %v3772, %v4156
    %v4221 = vmul.f32 %v3773, %v4157
    %v4222 = vmul.f32 %v3774, %v4158
    %v4223 = vmul.f32 %v3775, %v4159
    %v4224 = vmul.f32 %v3776, %v4160
    %v4225 = vmul.f32 %v3777, %v4161
    %v4226 = vpack.c.bf16 %v4163, %v4162
    %v4227 = vpack.c.bf16 %v4165, %v4164
    %v4228 = vpack.c.bf16 %v4167, %v4166
    %v4229 = vpack.c.bf16 %v4169, %v4168
    %v4230 = vpack.c.bf16 %v4171, %v4170
    %v4231 = vpack.c.bf16 %v4173, %v4172
    %v4232 = vpack.c.bf16 %v4175, %v4174
    %v4233 = vpack.c.bf16 %v4177, %v4176
    %v4234 = vpack.c.bf16 %v4179, %v4178
    %v4235 = vpack.c.bf16 %v4181, %v4180
    %v4236 = vpack.c.bf16 %v4183, %v4182
    %v4237 = vpack.c.bf16 %v4185, %v4184
    %v4238 = vpack.c.bf16 %v4187, %v4186
    %v4239 = vpack.c.bf16 %v4189, %v4188
    %v4240 = vpack.c.bf16 %v4191, %v4190
    %v4241 = vpack.c.bf16 %v4193, %v4192
    %v4242 = vpack.c.bf16 %v4195, %v4194
    %v4243 = vpack.c.bf16 %v4197, %v4196
    %v4244 = vpack.c.bf16 %v4199, %v4198
    %v4245 = vpack.c.bf16 %v4201, %v4200
    %v4246 = vpack.c.bf16 %v4203, %v4202
    %v4247 = vpack.c.bf16 %v4205, %v4204
    %v4248 = vpack.c.bf16 %v4207, %v4206
    %v4249 = vpack.c.bf16 %v4209, %v4208
    %v4250 = vpack.c.bf16 %v4211, %v4210
    %v4251 = vpack.c.bf16 %v4213, %v4212
    %v4252 = vpack.c.bf16 %v4215, %v4214
    %v4253 = vpack.c.bf16 %v4217, %v4216
    %v4254 = vpack.c.bf16 %v4219, %v4218
    %v4255 = vpack.c.bf16 %v4221, %v4220
    %v4256 = vpack.c.bf16 %v4223, %v4222
    %v4257 = vpack.c.bf16 %v4225, %v4224
    %v4259 = vsel %vm2625, %v4226, 0
    %v4262 = vsel %vm2625, %v4227, 0
    %v4265 = vsel %vm2625, %v4228, 0
    %v4268 = vsel %vm2625, %v4229, 0
    %v4271 = vsel %vm2625, %v4230, 0
    %v4274 = vsel %vm2625, %v4231, 0
    %v4277 = vsel %vm2625, %v4232, 0
    %v4280 = vsel %vm2625, %v4233, 0
    %v4283 = vsel %vm2625, %v4234, 0
    %v4286 = vsel %vm2625, %v4235, 0
    %v4289 = vsel %vm2625, %v4236, 0
    %v4292 = vsel %vm2625, %v4237, 0
    %v4295 = vsel %vm2625, %v4238, 0
    %v4298 = vsel %vm2625, %v4239, 0
    %v4301 = vsel %vm2625, %v4240, 0
    %v4304 = vsel %vm2625, %v4241, 0
    %v4307 = vsel %vm2625, %v4242, 0
    %v4310 = vsel %vm2625, %v4243, 0
    %v4313 = vsel %vm2625, %v4244, 0
    %v4316 = vsel %vm2625, %v4245, 0
    %v4319 = vsel %vm2625, %v4246, 0
    %v4322 = vsel %vm2625, %v4247, 0
    %v4325 = vsel %vm2625, %v4248, 0
    %v4328 = vsel %vm2625, %v4249, 0
    %v4331 = vsel %vm2625, %v4250, 0
    %v4334 = vsel %vm2625, %v4251, 0
    %v4337 = vsel %vm2625, %v4252, 0
    %v4340 = vsel %vm2625, %v4253, 0
    %v4343 = vsel %vm2625, %v4254, 0
    %v4346 = vsel %vm2625, %v4255, 0
    %v4349 = vsel %vm2625, %v4256, 0
    %v4352 = vsel %vm2625, %v4257, 0
    %vm4354 = vcmask 1041408
    %v4356 = vsel %vm4354, %v2455, 0
    %4358 = vmatpush.bf16.msra.mxu0 0
    %4359 = vmatpush.bf16.msra.mxu0 0
    %4360 = vmatpush.bf16.msra.mxu0 0
    %4361 = vmatpush.bf16.msra.mxu0 0
    %4362 = vmatpush.bf16.msra.mxu0 0
    %4363 = vmatpush.bf16.msra.mxu0 0
    %4364 = vmatpush.bf16.msra.mxu0 0
    %4365 = vmatpush.bf16.msra.mxu0 %v4356
    %4366 = vmatmul.bf16.gmra.mxu0 %v4259
    %v4367 = vpop.f32.mrf.mxu0
    %v4368 = vadd.f32 0.0, %v4367
    %v4369 = vpop.f32.mrf.mxu0
    %v4370 = vadd.f32 0.0, %v4369
    %4371 = vmatmul.bf16.gmra.mxu0 %v4262
    %v4372 = vpop.f32.mrf.mxu0
    %v4373 = vadd.f32 0.0, %v4372
    %v4374 = vpop.f32.mrf.mxu0
    %v4375 = vadd.f32 0.0, %v4374
    %4376 = vmatmul.bf16.gmra.mxu0 %v4265
    %v4377 = vpop.f32.mrf.mxu0
    %v4378 = vadd.f32 0.0, %v4377
    %v4379 = vpop.f32.mrf.mxu0
    %v4380 = vadd.f32 0.0, %v4379
    %4381 = vmatmul.bf16.gmra.mxu0 %v4268
    %v4382 = vpop.f32.mrf.mxu0
    %v4383 = vadd.f32 0.0, %v4382
    %v4384 = vpop.f32.mrf.mxu0
    %v4385 = vadd.f32 0.0, %v4384
    %4386 = vmatmul.bf16.gmra.mxu0 %v4271
    %v4387 = vpop.f32.mrf.mxu0
    %v4388 = vadd.f32 0.0, %v4387
    %v4389 = vpop.f32.mrf.mxu0
    %v4390 = vadd.f32 0.0, %v4389
    %4391 = vmatmul.bf16.gmra.mxu0 %v4274
    %v4392 = vpop.f32.mrf.mxu0
    %v4393 = vadd.f32 0.0, %v4392
    %v4394 = vpop.f32.mrf.mxu0
    %v4395 = vadd.f32 0.0, %v4394
    %4396 = vmatmul.bf16.gmra.mxu0 %v4277
    %v4397 = vpop.f32.mrf.mxu0
    %v4398 = vadd.f32 0.0, %v4397
    %v4399 = vpop.f32.mrf.mxu0
    %v4400 = vadd.f32 0.0, %v4399
    %4401 = vmatmul.bf16.gmra.mxu0 %v4280
    %v4402 = vpop.f32.mrf.mxu0
    %v4403 = vadd.f32 0.0, %v4402
    %v4404 = vpop.f32.mrf.mxu0
    %v4405 = vadd.f32 0.0, %v4404
    %4406 = vmatmul.bf16.gmra.mxu0 %v4283
    %v4407 = vpop.f32.mrf.mxu0
    %v4408 = vadd.f32 0.0, %v4407
    %v4409 = vpop.f32.mrf.mxu0
    %v4410 = vadd.f32 0.0, %v4409
    %4411 = vmatmul.bf16.gmra.mxu0 %v4286
    %v4412 = vpop.f32.mrf.mxu0
    %v4413 = vadd.f32 0.0, %v4412
    %v4414 = vpop.f32.mrf.mxu0
    %v4415 = vadd.f32 0.0, %v4414
    %4416 = vmatmul.bf16.gmra.mxu0 %v4289
    %v4417 = vpop.f32.mrf.mxu0
    %v4418 = vadd.f32 0.0, %v4417
    %v4419 = vpop.f32.mrf.mxu0
    %v4420 = vadd.f32 0.0, %v4419
    %4421 = vmatmul.bf16.gmra.mxu0 %v4292
    %v4422 = vpop.f32.mrf.mxu0
    %v4423 = vadd.f32 0.0, %v4422
    %v4424 = vpop.f32.mrf.mxu0
    %v4425 = vadd.f32 0.0, %v4424
    %4426 = vmatmul.bf16.gmra.mxu0 %v4295
    %v4427 = vpop.f32.mrf.mxu0
    %v4428 = vadd.f32 0.0, %v4427
    %v4429 = vpop.f32.mrf.mxu0
    %v4430 = vadd.f32 0.0, %v4429
    %4431 = vmatmul.bf16.gmra.mxu0 %v4298
    %v4432 = vpop.f32.mrf.mxu0
    %v4433 = vadd.f32 0.0, %v4432
    %v4434 = vpop.f32.mrf.mxu0
    %v4435 = vadd.f32 0.0, %v4434
    %4436 = vmatmul.bf16.gmra.mxu0 %v4301
    %v4437 = vpop.f32.mrf.mxu0
    %v4438 = vadd.f32 0.0, %v4437
    %v4439 = vpop.f32.mrf.mxu0
    %v4440 = vadd.f32 0.0, %v4439
    %4441 = vmatmul.bf16.gmra.mxu0 %v4304
    %v4442 = vpop.f32.mrf.mxu0
    %v4443 = vadd.f32 0.0, %v4442
    %v4444 = vpop.f32.mrf.mxu0
    %v4445 = vadd.f32 0.0, %v4444
    %4446 = vmatmul.bf16.gmra.mxu0 %v4307
    %v4447 = vpop.f32.mrf.mxu0
    %v4448 = vadd.f32 0.0, %v4447
    %v4449 = vpop.f32.mrf.mxu0
    %v4450 = vadd.f32 0.0, %v4449
    %4451 = vmatmul.bf16.gmra.mxu0 %v4310
    %v4452 = vpop.f32.mrf.mxu0
    %v4453 = vadd.f32 0.0, %v4452
    %v4454 = vpop.f32.mrf.mxu0
    %v4455 = vadd.f32 0.0, %v4454
    %4456 = vmatmul.bf16.gmra.mxu0 %v4313
    %v4457 = vpop.f32.mrf.mxu0
    %v4458 = vadd.f32 0.0, %v4457
    %v4459 = vpop.f32.mrf.mxu0
    %v4460 = vadd.f32 0.0, %v4459
    %4461 = vmatmul.bf16.gmra.mxu0 %v4316
    %v4462 = vpop.f32.mrf.mxu0
    %v4463 = vadd.f32 0.0, %v4462
    %v4464 = vpop.f32.mrf.mxu0
    %v4465 = vadd.f32 0.0, %v4464
    %4466 = vmatmul.bf16.gmra.mxu0 %v4319
    %v4467 = vpop.f32.mrf.mxu0
    %v4468 = vadd.f32 0.0, %v4467
    %v4469 = vpop.f32.mrf.mxu0
    %v4470 = vadd.f32 0.0, %v4469
    %4471 = vmatmul.bf16.gmra.mxu0 %v4322
    %v4472 = vpop.f32.mrf.mxu0
    %v4473 = vadd.f32 0.0, %v4472
    %v4474 = vpop.f32.mrf.mxu0
    %v4475 = vadd.f32 0.0, %v4474
    %4476 = vmatmul.bf16.gmra.mxu0 %v4325
    %v4477 = vpop.f32.mrf.mxu0
    %v4478 = vadd.f32 0.0, %v4477
    %v4479 = vpop.f32.mrf.mxu0
    %v4480 = vadd.f32 0.0, %v4479
    %4481 = vmatmul.bf16.gmra.mxu0 %v4328
    %v4482 = vpop.f32.mrf.mxu0
    %v4483 = vadd.f32 0.0, %v4482
    %v4484 = vpop.f32.mrf.mxu0
    %v4485 = vadd.f32 0.0, %v4484
    %4486 = vmatmul.bf16.gmra.mxu0 %v4331
    %v4487 = vpop.f32.mrf.mxu0
    %v4488 = vadd.f32 0.0, %v4487
    %v4489 = vpop.f32.mrf.mxu0
    %v4490 = vadd.f32 0.0, %v4489
    %4491 = vmatmul.bf16.gmra.mxu0 %v4334
    %v4492 = vpop.f32.mrf.mxu0
    %v4493 = vadd.f32 0.0, %v4492
    %v4494 = vpop.f32.mrf.mxu0
    %v4495 = vadd.f32 0.0, %v4494
    %4496 = vmatmul.bf16.gmra.mxu0 %v4337
    %v4497 = vpop.f32.mrf.mxu0
    %v4498 = vadd.f32 0.0, %v4497
    %v4499 = vpop.f32.mrf.mxu0
    %v4500 = vadd.f32 0.0, %v4499
    %4501 = vmatmul.bf16.gmra.mxu0 %v4340
    %v4502 = vpop.f32.mrf.mxu0
    %v4503 = vadd.f32 0.0, %v4502
    %v4504 = vpop.f32.mrf.mxu0
    %v4505 = vadd.f32 0.0, %v4504
    %4506 = vmatmul.bf16.gmra.mxu0 %v4343
    %v4507 = vpop.f32.mrf.mxu0
    %v4508 = vadd.f32 0.0, %v4507
    %v4509 = vpop.f32.mrf.mxu0
    %v4510 = vadd.f32 0.0, %v4509
    %4511 = vmatmul.bf16.gmra.mxu0 %v4346
    %v4512 = vpop.f32.mrf.mxu0
    %v4513 = vadd.f32 0.0, %v4512
    %v4514 = vpop.f32.mrf.mxu0
    %v4515 = vadd.f32 0.0, %v4514
    %4516 = vmatmul.bf16.gmra.mxu0 %v4349
    %v4517 = vpop.f32.mrf.mxu0
    %v4518 = vadd.f32 0.0, %v4517
    %v4519 = vpop.f32.mrf.mxu0
    %v4520 = vadd.f32 0.0, %v4519
    %4521 = vmatmul.bf16.gmra.mxu0 %v4352
    %v4522 = vpop.f32.mrf.mxu0
    %v4523 = vadd.f32 0.0, %v4522
    %v4524 = vpop.f32.mrf.mxu0
    %v4525 = vadd.f32 0.0, %v4524
    %4526 = vdwg.mxu0
    %4527 = vst [vmem:[#allocation9] sm:$0xff] %v4368
    %4528 = vst [vmem:[#allocation9 + $0x8] sm:$0xff] %v4370
    %4529 = vst [vmem:[#allocation9 + $0x10] sm:$0xff] %v4373
    %4530 = vst [vmem:[#allocation9 + $0x18] sm:$0xff] %v4375
    %4531 = vst [vmem:[#allocation9 + $0x20] sm:$0xff] %v4378
    %4532 = vst [vmem:[#allocation9 + $0x28] sm:$0xff] %v4380
    %4533 = vst [vmem:[#allocation9 + $0x30] sm:$0xff] %v4383
    %4534 = vst [vmem:[#allocation9 + $0x38] sm:$0xff] %v4385
    %4535 = vst [vmem:[#allocation9 + $0x40] sm:$0xff] %v4388
    %4536 = vst [vmem:[#allocation9 + $0x48] sm:$0xff] %v4390
    %4537 = vst [vmem:[#allocation9 + $0x50] sm:$0xff] %v4393
    %4538 = vst [vmem:[#allocation9 + $0x58] sm:$0xff] %v4395
    %4539 = vst [vmem:[#allocation9 + $0x60] sm:$0xff] %v4398
    %4540 = vst [vmem:[#allocation9 + $0x68] sm:$0xff] %v4400
    %4541 = vst [vmem:[#allocation9 + $0x70] sm:$0xff] %v4403
    %4542 = vst [vmem:[#allocation9 + $0x78] sm:$0xff] %v4405
    %4543 = vst [vmem:[#allocation9 + $0x80] sm:$0xff] %v4408
    %4544 = vst [vmem:[#allocation9 + $0x88] sm:$0xff] %v4410
    %4545 = vst [vmem:[#allocation9 + $0x90] sm:$0xff] %v4413
    %4546 = vst [vmem:[#allocation9 + $0x98] sm:$0xff] %v4415
    %4547 = vst [vmem:[#allocation9 + $0xa0] sm:$0xff] %v4418
    %4548 = vst [vmem:[#allocation9 + $0xa8] sm:$0xff] %v4420
    %4549 = vst [vmem:[#allocation9 + $0xb0] sm:$0xff] %v4423
    %4550 = vst [vmem:[#allocation9 + $0xb8] sm:$0xff] %v4425
    %4551 = vst [vmem:[#allocation9 + $0xc0] sm:$0xff] %v4428
    %4552 = vst [vmem:[#allocation9 + $0xc8] sm:$0xff] %v4430
    %4553 = vst [vmem:[#allocation9 + $0xd0] sm:$0xff] %v4433
    %4554 = vst [vmem:[#allocation9 + $0xd8] sm:$0xff] %v4435
    %4555 = vst [vmem:[#allocation9 + $0xe0] sm:$0xff] %v4438
    %4556 = vst [vmem:[#allocation9 + $0xe8] sm:$0xff] %v4440
    %4557 = vst [vmem:[#allocation9 + $0xf0] sm:$0xff] %v4443
    %4558 = vst [vmem:[#allocation9 + $0xf8] sm:$0xff] %v4445
    %4559 = vst [vmem:[#allocation9 + $0x100] sm:$0xff] %v4448
    %4560 = vst [vmem:[#allocation9 + $0x108] sm:$0xff] %v4450
    %4561 = vst [vmem:[#allocation9 + $0x110] sm:$0xff] %v4453
    %4562 = vst [vmem:[#allocation9 + $0x118] sm:$0xff] %v4455
    %4563 = vst [vmem:[#allocation9 + $0x120] sm:$0xff] %v4458
    %4564 = vst [vmem:[#allocation9 + $0x128] sm:$0xff] %v4460
    %4565 = vst [vmem:[#allocation9 + $0x130] sm:$0xff] %v4463
    %4566 = vst [vmem:[#allocation9 + $0x138] sm:$0xff] %v4465
    %4567 = vst [vmem:[#allocation9 + $0x140] sm:$0xff] %v4468
    %4568 = vst [vmem:[#allocation9 + $0x148] sm:$0xff] %v4470
    %4569 = vst [vmem:[#allocation9 + $0x150] sm:$0xff] %v4473
    %4570 = vst [vmem:[#allocation9 + $0x158] sm:$0xff] %v4475
    %4571 = vst [vmem:[#allocation9 + $0x160] sm:$0xff] %v4478
    %4572 = vst [vmem:[#allocation9 + $0x168] sm:$0xff] %v4480
    %4573 = vst [vmem:[#allocation9 + $0x170] sm:$0xff] %v4483
    %4574 = vst [vmem:[#allocation9 + $0x178] sm:$0xff] %v4485
    %4575 = vst [vmem:[#allocation9 + $0x180] sm:$0xff] %v4488
    %4576 = vst [vmem:[#allocation9 + $0x188] sm:$0xff] %v4490
    %4577 = vst [vmem:[#allocation9 + $0x190] sm:$0xff] %v4493
    %4578 = vst [vmem:[#allocation9 + $0x198] sm:$0xff] %v4495
    %4579 = vst [vmem:[#allocation9 + $0x1a0] sm:$0xff] %v4498
    %4580 = vst [vmem:[#allocation9 + $0x1a8] sm:$0xff] %v4500
    %4581 = vst [vmem:[#allocation9 + $0x1b0] sm:$0xff] %v4503
    %4582 = vst [vmem:[#allocation9 + $0x1b8] sm:$0xff] %v4505
    %4583 = vst [vmem:[#allocation9 + $0x1c0] sm:$0xff] %v4508
    %4584 = vst [vmem:[#allocation9 + $0x1c8] sm:$0xff] %v4510
    %4585 = vst [vmem:[#allocation9 + $0x1d0] sm:$0xff] %v4513
    %4586 = vst [vmem:[#allocation9 + $0x1d8] sm:$0xff] %v4515
    %4587 = vst [vmem:[#allocation9 + $0x1e0] sm:$0xff] %v4518
    %4588 = vst [vmem:[#allocation9 + $0x1e8] sm:$0xff] %v4520
    %4589 = vst [vmem:[#allocation9 + $0x1f0] sm:$0xff] %v4523
    %4590 = vst [vmem:[#allocation9 + $0x1f8] sm:$0xff] %v4525
    // Predicated region
    $region26: #{tpu_custom_call.1} parent=1 // pred_check
      _
    $region27: #{tpu_custom_call.1} parent=1 // pred_check_branch
      %4592 = sbr.rel (0) target = $region29
    $region28: #{tpu_custom_call.1} parent=1 // pred_region
      %4594 = vsyncadd [#allocation4], 0
      %s4595 = sshll.u32 [#allocation8], 4
      %s4596 = int_to_ptr.vmem [resolvable:$true] %s4595
      %s4597 = sshll.u32 %s3, 4
      %s4598 = int_to_ptr.hbm [resolvable:$true] %s4597
      %4603 = dma.vmem_to_hbm [thread:$0]  %s4596, 8192, %s4598, [#allocation4], 128, 128, 8
    $region29: #{tpu_custom_call.1} parent=1 // pred_fallthru
      _
    // Predicated region
    $region30: #{tpu_custom_call.1} parent=1 // pred_check
      _
    $region31: #{tpu_custom_call.1} parent=1 // pred_check_branch
      %4605 = sbr.rel (0) target = $region33
    $region32: #{tpu_custom_call.1} parent=1 // pred_region
      %4607 = vsyncadd [#allocation10], 0
      %s4608 = sshll.u32 [#allocation9], 4
      %s4609 = int_to_ptr.vmem [resolvable:$true] %s4608
      %s4610 = sshll.u32 %s4, 4
      %s4611 = int_to_ptr.hbm [resolvable:$true] %s4610
      %4616 = dma.vmem_to_hbm [thread:$0]  %s4609, 8192, %s4611, [#allocation10], 128, 128, 8
    $region33: #{tpu_custom_call.1} parent=1 // pred_fallthru
      _
    // Predicated region
    $region34: #{tpu_custom_call.1} parent=1 // pred_check
      _
    $region35: #{tpu_custom_call.1} parent=1 // pred_check_branch
      %4618 = sbr.rel (0) target = $region37
    $region36: #{tpu_custom_call.1} parent=1 // pred_region
      %4620 = dma.done [#allocation4], 8192
    $region37: #{tpu_custom_call.1} parent=1 // pred_fallthru
      _
    // Predicated region
    $region38: #{tpu_custom_call.1} parent=1 // pred_check
      _
    $region39: #{tpu_custom_call.1} parent=1 // pred_check_branch
      %4622 = sbr.rel (0) target = $region41
    $region40: #{tpu_custom_call.1} parent=1 // pred_region
      %4624 = dma.done [#allocation10], 8192
    $region41: #{tpu_custom_call.1} parent=1 // pred_fallthru
      _
    %4625 = vsyncpa [#allocation3], 1
    %4626 = vsyncpa [#allocation6], 1
    %4627 = vsyncpa [#allocation4], 1
    %4628 = vsyncpa [#allocation10], 1

</llo_original>
